<compile_context>
chip_gen: v5e
topology: v5e:2x2
jax: 0.10.0
libtpu: 0.0.40
codegen_flags: <defaults>
</compile_context>

<pallas_src>
import functools

import jax
import jax.numpy as jnp
from jax import lax
from jax.experimental import pallas as pl
from jax.experimental.pallas import tpu as pltpu

# ---- module hyper-parameters (HierarchicalPGMLoss.__init__ defaults) --------
N_CLASSES = 6
IGNORE_INDEX = 6
KLD_WEIGHT = 0.005
CONTRASTIVE_WEIGHT = 0.1
CONSISTENCY_WEIGHT = 0.05
TEMPERATURE = 0.5
CLASS_WEIGHTS = None          # `weights=None` default -> no class weighting

MAX_LANE_TILE = 4096          # lanes / grid step for CE & KL (x8 sublanes = 32768 px)
SUM_LANE = 128                # lane width for flat reduction kernels
SUM_MAX_ROWS = 2048           # max sublane rows per tile for flat reductions
VMEM_LIMIT = 32 * 1024 * 1024


def _round_up(x, m):
    return -(-x // m) * m


def _cdiv(a, b):
    return -(-a // b)


# ============================ Pallas kernels =================================

def _ce_kernel(logits_ref, tgt_ref, sum_ref, cnt_ref, acc_loss, acc_cnt,
               *, hw8, masked):
    """ignore_index-masked softmax CE over (C, 8, T) blocks; per-batch sums."""
    ti = pl.program_id(1)

    @pl.when(ti == 0)
    def _():
        acc_loss[...] = jnp.zeros_like(acc_loss)
        acc_cnt[...] = jnp.zeros_like(acc_cnt)

    x = logits_ref[0].astype(jnp.float32)               # (C, 8, T)
    t = tgt_ref[0].astype(jnp.int32)                    # (8, T)
    tile = x.shape[-1]

    m = jnp.max(x, axis=0)                              # VPU max over C vregs
    lse = m + jnp.log(jnp.sum(jnp.exp(x - m), axis=0))  # (8, T)
    cls = lax.broadcasted_iota(jnp.int32, x.shape, 0)   # (C, 8, T)
    x_t = jnp.sum(jnp.where(cls == t, x, 0.0), axis=0)  # (8, T)

    valid = t != IGNORE_INDEX
    if masked:  # ragged tail tile: OOB lanes hold garbage -> select them out
        lane = ti * tile + lax.broadcasted_iota(jnp.int32, (8, tile), 1)
        valid = jnp.logical_and(valid, lane < hw8)

    acc_loss[...] += jnp.where(valid, lse - x_t, 0.0)
    acc_cnt[...] += valid.astype(jnp.float32)

    @pl.when(ti == pl.num_programs(1) - 1)
    def _():
        sum_ref[...] = jnp.sum(acc_loss[...]).reshape(1, 1, 1)
        cnt_ref[...] = jnp.sum(acc_cnt[...]).reshape(1, 1, 1)


def _kld_kernel(a_ref, b_ref, out_ref, acc_ref, *, hw8, masked):
    """sum over pixels of softmax(b) * (log_softmax(b) - log_softmax(a))."""
    ti = pl.program_id(1)

    @pl.when(ti == 0)
    def _():
        acc_ref[...] = jnp.zeros_like(acc_ref)

    a = a_ref[0].astype(jnp.float32)                    # (C, 8, T) "input" logits
    t = b_ref[0].astype(jnp.float32)                    # (C, 8, T) "target" logits
    tile = a.shape[-1]

    ma = jnp.max(a, axis=0)                             # (8, T)
    log_za = jnp.log(jnp.sum(jnp.exp(a - ma), axis=0))
    mb = jnp.max(t, axis=0)
    eb = jnp.exp(t - mb)                                # (C, 8, T)
    sb = jnp.sum(eb, axis=0)                            # (8, T)
    # sum_c p_c * (log p_c - log q_c)
    #   = (1/sb) * sum_c eb_c * ((t_c - mb) - (a_c - ma)) + (log_za - log(sb))
    num = jnp.sum(eb * ((t - mb) - (a - ma)), axis=0)
    contrib = num / sb + (log_za - jnp.log(sb))
    if masked:
        lane = ti * tile + lax.broadcasted_iota(jnp.int32, (8, tile), 1)
        contrib = jnp.where(lane < hw8, contrib, 0.0)
    acc_ref[...] += contrib

    @pl.when(ti == pl.num_programs(1) - 1)
    def _():
        out_ref[...] = jnp.sum(acc_ref[...]).reshape(1, 1, 1)


def _mse_kernel(a_ref, b_ref, out_ref, acc_ref, *, rows, masked):
    i = pl.program_id(0)

    @pl.when(i == 0)
    def _():
        acc_ref[...] = jnp.zeros_like(acc_ref)

    a = a_ref[...].astype(jnp.float32)
    b = b_ref[...].astype(jnp.float32)
    d = a - b
    sq = d * d
    if masked:
        row = i * a.shape[0] + lax.broadcasted_iota(jnp.int32, a.shape, 0)
        sq = jnp.where(row < rows, sq, 0.0)
    acc_ref[...] += sq

    @pl.when(i == pl.num_programs(0) - 1)
    def _():
        out_ref[...] = jnp.sum(acc_ref[...]).reshape(1, 1)


def _vae_kld_kernel(mu_ref, lv_ref, out_ref, acc_ref, *, rows, masked):
    i = pl.program_id(0)

    @pl.when(i == 0)
    def _():
        acc_ref[...] = jnp.zeros_like(acc_ref)

    mu = mu_ref[...].astype(jnp.float32)
    lv = lv_ref[...].astype(jnp.float32)
    # zero-padded entries contribute 1 + 0 - 0 - exp(0) = 0 exactly
    term = 1.0 + lv - mu * mu - jnp.exp(lv)
    if masked:
        row = i * mu.shape[0] + lax.broadcasted_iota(jnp.int32, mu.shape, 0)
        term = jnp.where(row < rows, term, 0.0)
    acc_ref[...] += term

    @pl.when(i == pl.num_programs(0) - 1)
    def _():
        out_ref[...] = (-0.5 * jnp.sum(acc_ref[...])).reshape(1, 1)


def _supcon_kernel(feat_ref, eq_ref, out_ref):
    """Supervised contrastive (SupCon) loss, faithful to the torch code."""
    f = feat_ref[...].astype(jnp.float32)               # (B, D)
    norm_sq = jnp.sum(f * f, axis=-1, keepdims=True)
    fn = f * lax.rsqrt(jnp.maximum(norm_sq, 1e-24))     # == f / max(||f||, 1e-12)
    sim = lax.dot_general(fn, fn, (((1,), (1,)), ((), ())),
                          preferred_element_type=jnp.float32) / TEMPERATURE
    r = lax.broadcasted_iota(jnp.int32, sim.shape, 0)
    c = lax.broadcasted_iota(jnp.int32, sim.shape, 1)
    eye = (r == c).astype(jnp.float32)
    pos = jnp.maximum(eq_ref[...] - eye, 0.0)
    num_pos = jnp.sum(pos, axis=-1, keepdims=True)
    mx = jnp.max(sim, axis=-1, keepdims=True)
    exp_sim = jnp.exp(sim - mx)
    exp_sum = jnp.sum(exp_sim, axis=-1, keepdims=True) - exp_sim * eye
    # NOTE: numerator intentionally uses the *unshifted* sim — this matches the
    # PyTorch reference exactly (log_prob = sim_matrix - log(exp_sim_sum)).
    log_prob = sim - jnp.log(jnp.maximum(exp_sum, 1e-30))
    pos_log_prob = jnp.sum(pos * log_prob, axis=-1, keepdims=True) / \
        jnp.maximum(num_pos, 1.0)
    valid = (num_pos > 0).astype(jnp.float32)
    n_valid = jnp.sum(valid)
    out_ref[...] = (jnp.sum(-pos_log_prob * valid) /
                    jnp.maximum(n_valid, 1.0)).reshape(1, 1)


# ============================ wrappers =======================================

def cross_entropy_2d(logits_nchw, targets_bhw):
    """CrossEntropy2d: mean CE with ignore_index=6 (weight=None)."""
    b, c, h, w = logits_nchw.shape
    hw = h * w
    hw_p = _round_up(hw, 8)
    x = logits_nchw.reshape(b, c, hw)        # free reshape, native dtype
    t = targets_bhw.reshape(b, hw)
    if hw_p != hw:
        # TODO(synk): tiny copy; only hit when H*W is not a multiple of 8.
        x = jnp.pad(x, ((0, 0), (0, 0), (0, hw_p - hw)))
        t = jnp.pad(t, ((0, 0), (0, hw_p - hw)), constant_values=IGNORE_INDEX)
    hw8 = hw_p // 8
    x = x.reshape(b, c, 8, hw8)
    t = t.reshape(b, 8, hw8).astype(jnp.int32)

    tile = hw8 if hw8 <= MAX_LANE_TILE else MAX_LANE_TILE
    n_tiles = _cdiv(hw8, tile)
    masked = (n_tiles * tile != hw8)

    sums, cnts = pl.pallas_call(
        functools.partial(_ce_kernel, hw8=hw8, masked=masked),
        out_shape=(jax.ShapeDtypeStruct((b, 1, 1), jnp.float32),
                   jax.ShapeDtypeStruct((b, 1, 1), jnp.float32)),
        grid=(b, n_tiles),
        in_specs=[pl.BlockSpec((1, c, 8, tile), lambda bi, ti: (bi, 0, 0, ti)),
                  pl.BlockSpec((1, 8, tile), lambda bi, ti: (bi, 0, ti))],
        out_specs=(pl.BlockSpec((1, 1, 1), lambda bi, ti: (bi, 0, 0)),
                   pl.BlockSpec((1, 1, 1), lambda bi, ti: (bi, 0, 0))),
        scratch_shapes=[pltpu.VMEM((8, tile), jnp.float32),
                        pltpu.VMEM((8, tile), jnp.float32)],
        compiler_params=pltpu.CompilerParams(
            dimension_semantics=("parallel", "arbitrary"),
            vmem_limit_bytes=VMEM_LIMIT),
    )(x, t)
    # NaN if every pixel is ignore_index -> matches PyTorch semantics.
    return jnp.sum(sums) / jnp.sum(cnts)


def kl_div_batchmean(input_logits, target_logits):
    """F.kl_div(log_softmax(input), softmax(target), reduction='batchmean')."""
    b, c, h, w = input_logits.shape
    hw = h * w
    hw_p = _round_up(hw, 8)
    a = input_logits.reshape(b, c, hw)
    t = target_logits.reshape(b, c, hw)
    if hw_p != hw:
        # identical zero padding on both sides -> exact zero KL contribution
        a = jnp.pad(a, ((0, 0), (0, 0), (0, hw_p - hw)))
        t = jnp.pad(t, ((0, 0), (0, 0), (0, hw_p - hw)))
    hw8 = hw_p // 8
    a = a.reshape(b, c, 8, hw8)
    t = t.reshape(b, c, 8, hw8)

    tile = hw8 if hw8 <= MAX_LANE_TILE else MAX_LANE_TILE
    n_tiles = _cdiv(hw8, tile)
    masked = (n_tiles * tile != hw8)

    per_batch = pl.pallas_call(
        functools.partial(_kld_kernel, hw8=hw8, masked=masked),
        out_shape=jax.ShapeDtypeStruct((b, 1, 1), jnp.float32),
        grid=(b, n_tiles),
        in_specs=[pl.BlockSpec((1, c, 8, tile), lambda bi, ti: (bi, 0, 0, ti)),
                  pl.BlockSpec((1, c, 8, tile), lambda bi, ti: (bi, 0, 0, ti))],
        out_specs=pl.BlockSpec((1, 1, 1), lambda bi, ti: (bi, 0, 0)),
        scratch_shapes=[pltpu.VMEM((8, tile), jnp.float32)],
        compiler_params=pltpu.CompilerParams(
            dimension_semantics=("parallel", "arbitrary"),
            vmem_limit_bytes=VMEM_LIMIT),
    )(a, t)
    return jnp.sum(per_batch) / b


def _flat_tiles(x):
    """Flatten to a lane-dense (rows, 128) array (native dtype, minimal pad)."""
    flat = x.reshape(-1)
    m = flat.shape[0]
    if m % SUM_LANE != 0:
        # TODO(synk): small copy; only hit when numel is not a multiple of 128.
        flat = jnp.pad(flat, (0, SUM_LANE - m % SUM_LANE))
    rows = flat.shape[0] // SUM_LANE
    r_tile = rows if rows <= SUM_MAX_ROWS else SUM_MAX_ROWS
    n_tiles = _cdiv(rows, r_tile)
    return flat.reshape(rows, SUM_LANE), r_tile, n_tiles, rows


def _sum_reduce_call(kernel, a, b_arr, r_tile, n_tiles, rows, masked):
    return pl.pallas_call(
        functools.partial(kernel, rows=rows, masked=masked),
        out_shape=jax.ShapeDtypeStruct((1, 1), jnp.float32),
        grid=(n_tiles,),
        in_specs=[pl.BlockSpec((r_tile, SUM_LANE), lambda i: (i, 0)),
                  pl.BlockSpec((r_tile, SUM_LANE), lambda i: (i, 0))],
        out_specs=pl.BlockSpec((1, 1), lambda i: (0, 0)),
        scratch_shapes=[pltpu.VMEM((r_tile, SUM_LANE), jnp.float32)],
        compiler_params=pltpu.CompilerParams(
            dimension_semantics=("arbitrary",),
            vmem_limit_bytes=VMEM_LIMIT),
    )(a, b_arr)


def mse_loss(pred, target):
    m = pred.size
    a, r_tile, n_tiles, rows = _flat_tiles(pred)
    b_arr, _, _, _ = _flat_tiles(target)
    masked = (n_tiles * r_tile != rows)
    out = _sum_reduce_call(_mse_kernel, a, b_arr, r_tile, n_tiles, rows, masked)
    return out[0, 0] / m


def vae_kld(mu, log_var):
    a, r_tile, n_tiles, rows = _flat_tiles(mu)
    b_arr, _, _, _ = _flat_tiles(log_var)
    masked = (n_tiles * r_tile != rows)
    out = _sum_reduce_call(_vae_kld_kernel, a, b_arr, r_tile, n_tiles, rows,
                           masked)
    return out[0, 0] / mu.shape[0]


def supervised_contrastive_loss(z_proj, labels):
    eq = (labels[:, None] == labels[None, :]).astype(jnp.float32)
    out = pl.pallas_call(
        _supcon_kernel,
        out_shape=jax.ShapeDtypeStruct((1, 1), jnp.float32),
    )(z_proj, eq)
    return out[0, 0]


# ----- plain-JAX glue matching PyTorch resize / label semantics --------------

def _nearest_resize_targets(t_bhw, out_h, out_w):
    """F.interpolate(..., mode='nearest') on integer targets."""
    b, h, w = t_bhw.shape
    yi = jnp.floor(jnp.arange(out_h) * (h / out_h)).astype(jnp.int32)
    xi = jnp.floor(jnp.arange(out_w) * (w / out_w)).astype(jnp.int32)
    return t_bhw[:, yi, :][:, :, xi]


def _interp_weights(out_size, in_size):
    """Row-interp matrix matching torch bilinear (align_corners=False)."""
    scale = in_size / out_size
    s = (jnp.arange(out_size, dtype=jnp.float32) + 0.5) * scale - 0.5
    s = jnp.maximum(s, 0.0)
    i0 = jnp.minimum(jnp.floor(s).astype(jnp.int32), in_size - 1)
    i1 = jnp.minimum(i0 + 1, in_size - 1)
    frac = s - i0.astype(jnp.float32)
    w = (jax.nn.one_hot(i0, in_size, dtype=jnp.float32) * (1.0 - frac)[:, None]
         + jax.nn.one_hot(i1, in_size, dtype=jnp.float32) * frac[:, None])
    return w  # (out_size, in_size)


def _pt_bilinear_resize(x_nchw, out_h, out_w):
    """F.interpolate(mode='bilinear', align_corners=False) as two MXU matmuls."""
    _, _, h, w = x_nchw.shape
    wy = _interp_weights(out_h, h)               # (out_h, h)
    wx = _interp_weights(out_w, w)               # (out_w, w)
    xf = x_nchw.astype(jnp.float32)
    y = jnp.einsum('oy,bcyx->bcox', wy, xf)
    return jnp.einsum('bcox,px->bcop', y, wx)


def _dominant_labels(targets_bhw, n_classes, ignore_index):
    b = targets_bhw.shape[0]
    flat = targets_bhw.reshape(b, -1)
    valid = (flat != ignore_index)
    onehot = (flat[..., None] == jnp.arange(n_classes)[None, None, :]) & \
        valid[..., None]
    counts = onehot.sum(axis=1)                  # (B, n_classes)
    has_valid = valid.any(axis=1)
    dom = jnp.argmax(counts, axis=1)
    return jnp.where(has_valid, dom, -1).astype(jnp.int32)


# ============================ full forward ===================================

def hierarchical_pgm_loss(outputs, targets, mode="full"):
    comps = {}

    # --- supervised branch ---
    if targets is not None and mode in ("supervised", "full"):
        if "final_segmentation" in outputs:
            comps["seg_loss"] = cross_entropy_2d(
                outputs["final_segmentation"], targets)
        if "hierarchical_segmentations" in outputs:
            hier_losses = []
            for i, seg in enumerate(outputs["hierarchical_segmentations"]):
                th, tw = seg.shape[2], seg.shape[3]
                scaled = _nearest_resize_targets(targets, th, tw)
                hl = cross_entropy_2d(seg, scaled)
                hier_losses.append(hl)
                comps[f"hier_loss_{i}"] = hl
            if hier_losses:
                comps["hier_loss"] = sum(hier_losses) / len(hier_losses)

    # --- unsupervised branch ---
    if mode in ("unsupervised", "full"):
        if "reconstruction" in outputs:
            original = outputs.get("original_input", targets)
            comps["recon_loss"] = mse_loss(outputs["reconstruction"], original)
        if "mu" in outputs and "log_var" in outputs:
            comps["kld_loss"] = vae_kld(outputs["mu"],
                                        outputs["log_var"]) * KLD_WEIGHT
        if "z_proj" in outputs:
            if targets is not None and mode == "full":
                labels = _dominant_labels(targets, N_CLASSES, IGNORE_INDEX)
                cl = supervised_contrastive_loss(outputs["z_proj"], labels)
            else:
                # TODO(synk): unsupervised InfoNCE path not exercised in 'full' mode
                cl = jnp.float32(0.0)
            comps["contrastive_loss"] = cl * CONTRASTIVE_WEIGHT

    # --- hierarchical consistency ---
    hier = outputs.get("hierarchical_segmentations", [])
    if len(hier) > 1:
        cons = 0.0
        for i in range(len(hier) - 1):
            coarse, fine = hier[i], hier[i + 1]
            coarse_rs = _pt_bilinear_resize(coarse, fine.shape[2], fine.shape[3])
            loss_c2f = kl_div_batchmean(coarse_rs, fine)
            fine_rs = _pt_bilinear_resize(fine, coarse.shape[2], coarse.shape[3])
            loss_f2c = kl_div_batchmean(fine_rs, coarse)
            cons = cons + (loss_c2f + loss_f2c) / 2.0
        cons = cons / (len(hier) - 1)
        comps["hier_consistency_loss"] = cons * CONSISTENCY_WEIGHT

    total = sum(comps.values())
    return total, comps


# ================================= main ======================================

if __name__ == "__main__":
    key = jax.random.PRNGKey(0)
    ks = jax.random.split(key, 9)
    B, C, H, W = 2, N_CLASSES, 16, 16

    outputs = {
        "final_segmentation": jax.random.normal(ks[0], (B, C, H, W), jnp.float32),
        "hierarchical_segmentations": [
            jax.random.normal(ks[1], (B, C, 8, 8), jnp.float32),
            jax.random.normal(ks[2], (B, C, H, W), jnp.float32),
        ],
        "reconstruction": jax.random.normal(ks[3], (B, 3, H, W), jnp.float32),
        "original_input": jax.random.normal(ks[4], (B, 3, H, W), jnp.float32),
        "mu": jax.random.normal(ks[5], (B, 16), jnp.float32),
        "log_var": 0.1 * jax.random.normal(ks[6], (B, 16), jnp.float32),
        "z_proj": jax.random.normal(ks[7], (B, 32), jnp.float32),
    }
    # targets in [0, 6]; value 6 is the ignore_index
    targets = jax.random.randint(ks[8], (B, H, W), 0, IGNORE_INDEX + 1,
                                 dtype=jnp.int32)

    loss_fn = jax.jit(lambda o, t: hierarchical_pgm_loss(o, t, mode="full"))
    total_loss, loss_components = loss_fn(outputs, targets)
    total_loss = jax.block_until_ready(total_loss)
    for v in loss_components.values():
        jax.block_until_ready(v)
    print("KERNEL_OK")
</pallas_src>

<mosaic_0001>
module attributes {stable_mosaic.version = 11 : i64} {
  func.func @_ce_kernel(%arg0: i32, %arg1: i32, %arg2: memref<1x6x8x8xf32, #tpu.memory_space<vmem>>, %arg3: memref<1x8x8xi32, #tpu.memory_space<vmem>>, %arg4: memref<1x1x1xf32, #tpu.memory_space<vmem>>, %arg5: memref<1x1x1xf32, #tpu.memory_space<vmem>>, %arg6: memref<8x8xf32, #tpu.memory_space<vmem>>, %arg7: memref<8x8xf32, #tpu.memory_space<vmem>>) attributes {dimension_semantics = [#tpu.dimension_semantics<parallel>, #tpu.dimension_semantics<arbitrary>], iteration_bounds = array<i64: 2, 1>, scalar_prefetch = 0 : i64, scratch_operands = 2 : i64, tpu.core_type = #tpu.core_type<tc>, window_params = [{transform_indices = @transform_0, window_bounds = array<i64: 1, 6, 8, 8>}, {transform_indices = @transform_1, window_bounds = array<i64: 1, 8, 8>}, {transform_indices = @transform_2, window_bounds = array<i64: 1, 1, 1>}, {transform_indices = @transform_3, window_bounds = array<i64: 1, 1, 1>}]} {
    %c0_i32 = arith.constant 0 : i32
    %0 = arith.cmpi eq, %arg1, %c0_i32 : i32
    %1 = arith.extui %0 : i1 to i32
    %c0_i32_0 = arith.constant 0 : i32
    %2 = arith.cmpi ne, %1, %c0_i32_0 : i32
    scf.if %2 {
      %cst_21 = arith.constant 0.000000e+00 : f32
      %38 = vector.broadcast %cst_21 : f32 to vector<8x8xf32>
      %c0_22 = arith.constant 0 : index
      %c0_23 = arith.constant 0 : index
      %39 = vector.load %arg6[%c0_22, %c0_23] : memref<8x8xf32, #tpu.memory_space<vmem>>, vector<8x8xf32>
      tpu.vector_store %arg6[%c0_22, %c0_23], %38 {strides = array<i32>} : memref<8x8xf32, #tpu.memory_space<vmem>>, vector<8x8xf32>,
      %cst_24 = arith.constant 0.000000e+00 : f32
      %40 = vector.broadcast %cst_24 : f32 to vector<8x8xf32>
      %c0_25 = arith.constant 0 : index
      %c0_26 = arith.constant 0 : index
      %41 = vector.load %arg7[%c0_25, %c0_26] : memref<8x8xf32, #tpu.memory_space<vmem>>, vector<8x8xf32>
      tpu.vector_store %arg7[%c0_25, %c0_26], %40 {strides = array<i32>} : memref<8x8xf32, #tpu.memory_space<vmem>>, vector<8x8xf32>,
    } else {
    }
    %c0 = arith.constant 0 : index
    %c0_1 = arith.constant 0 : index
    %c0_2 = arith.constant 0 : index
    %c0_3 = arith.constant 0 : index
    %3 = vector.load %arg2[%c0, %c0_1, %c0_2, %c0_3] : memref<1x6x8x8xf32, #tpu.memory_space<vmem>>, vector<1x6x8x8xf32>
    %4 = vector.shape_cast %3 : vector<1x6x8x8xf32> to vector<6x8x8xf32>
    %c0_4 = arith.constant 0 : index
    %c0_5 = arith.constant 0 : index
    %c0_6 = arith.constant 0 : index
    %5 = vector.load %arg3[%c0_4, %c0_5, %c0_6] : memref<1x8x8xi32, #tpu.memory_space<vmem>>, vector<1x8x8xi32>
    %6 = vector.shape_cast %5 : vector<1x8x8xi32> to vector<8x8xi32>
    %cst = arith.constant dense<0xFF800000> : vector<8x8xf32>
    %7 = vector.multi_reduction <maximumf>, %4, %cst [0] : vector<6x8x8xf32> to vector<8x8xf32>
    %8 = vector.shape_cast %7 : vector<8x8xf32> to vector<1x8x8xf32>
    %9 = vector.broadcast %8 : vector<1x8x8xf32> to vector<6x8x8xf32>
    %10 = arith.subf %4, %9 : vector<6x8x8xf32>
    %11 = math.exp %10 : vector<6x8x8xf32>
    %cst_7 = arith.constant dense<0.000000e+00> : vector<8x8xf32>
    %12 = vector.multi_reduction <add>, %11, %cst_7 [0] : vector<6x8x8xf32> to vector<8x8xf32>
    %13 = math.log %12 : vector<8x8xf32>
    %14 = arith.addf %7, %13 : vector<8x8xf32>
    %15 = tpu.iota {dimensions = array<i32: 0>} : vector<6x8x8xi32>
    %16 = vector.shape_cast %6 : vector<8x8xi32> to vector<1x8x8xi32>
    %17 = vector.broadcast %16 : vector<1x8x8xi32> to vector<6x8x8xi32>
    %18 = arith.cmpi eq, %15, %17 : vector<6x8x8xi32>
    %cst_8 = arith.constant 0.000000e+00 : f32
    %19 = vector.broadcast %cst_8 : f32 to vector<6x8x8xf32>
    %20 = arith.select %18, %4, %19 : vector<6x8x8xi1>, vector<6x8x8xf32>
    %cst_9 = arith.constant dense<0.000000e+00> : vector<8x8xf32>
    %21 = vector.multi_reduction <add>, %20, %cst_9 [0] : vector<6x8x8xf32> to vector<8x8xf32>
    %c6_i32 = arith.constant 6 : i32
    %22 = vector.broadcast %c6_i32 : i32 to vector<8x8xi32>
    %23 = arith.cmpi ne, %6, %22 : vector<8x8xi32>
    %c0_10 = arith.constant 0 : index
    %c0_11 = arith.constant 0 : index
    %24 = vector.load %arg6[%c0_10, %c0_11] : memref<8x8xf32, #tpu.memory_space<vmem>>, vector<8x8xf32>
    %25 = arith.subf %14, %21 : vector<8x8xf32>
    %cst_12 = arith.constant 0.000000e+00 : f32
    %26 = vector.broadcast %cst_12 : f32 to vector<8x8xf32>
    %27 = arith.select %23, %25, %26 : vector<8x8xi1>, vector<8x8xf32>
    %28 = arith.addf %24, %27 : vector<8x8xf32>
    %c0_13 = arith.constant 0 : index
    %c0_14 = arith.constant 0 : index
    %29 = vector.load %arg6[%c0_13, %c0_14] : memref<8x8xf32, #tpu.memory_space<vmem>>, vector<8x8xf32>
    tpu.vector_store %arg6[%c0_13, %c0_14], %28 {strides = array<i32>} : memref<8x8xf32, #tpu.memory_space<vmem>>, vector<8x8xf32>,
    %c0_15 = arith.constant 0 : index
    %c0_16 = arith.constant 0 : index
    %30 = vector.load %arg7[%c0_15, %c0_16] : memref<8x8xf32, #tpu.memory_space<vmem>>, vector<8x8xf32>
    %31 = arith.extui %23 : vector<8x8xi1> to vector<8x8xi32>
    %32 = arith.sitofp %31 : vector<8x8xi32> to vector<8x8xf32>
    %33 = arith.addf %30, %32 : vector<8x8xf32>
    %c0_17 = arith.constant 0 : index
    %c0_18 = arith.constant 0 : index
    %34 = vector.load %arg7[%c0_17, %c0_18] : memref<8x8xf32, #tpu.memory_space<vmem>>, vector<8x8xf32>
    tpu.vector_store %arg7[%c0_17, %c0_18], %33 {strides = array<i32>} : memref<8x8xf32, #tpu.memory_space<vmem>>, vector<8x8xf32>,
    %c0_i32_19 = arith.constant 0 : i32
    %35 = arith.cmpi eq, %arg1, %c0_i32_19 : i32
    %36 = arith.extui %35 : i1 to i32
    %c0_i32_20 = arith.constant 0 : i32
    %37 = arith.cmpi ne, %36, %c0_i32_20 : i32
    scf.if %37 {
      %c0_21 = arith.constant 0 : index
      %c0_22 = arith.constant 0 : index
      %38 = vector.load %arg6[%c0_21, %c0_22] : memref<8x8xf32, #tpu.memory_space<vmem>>, vector<8x8xf32>
      %39 = vector.shape_cast %38 : vector<8x8xf32> to vector<1x8x8xf32>
      %cst_23 = arith.constant dense<0.000000e+00> : vector<1xf32>
      %40 = vector.multi_reduction <add>, %39, %cst_23 [1, 2] : vector<1x8x8xf32> to vector<1xf32>
      %41 = vector.shape_cast %40 : vector<1xf32> to vector<1x1x1xf32>
      %42 = vector.extract %41[0, 0, 0] : f32 from vector<1x1x1xf32>
      %43 = vector.broadcast %42 : f32 to vector<1x1x1xf32>
      %c0_24 = arith.constant 0 : index
      %c0_25 = arith.constant 0 : index
      %c0_26 = arith.constant 0 : index
      %44 = vector.load %arg4[%c0_24, %c0_25, %c0_26] : memref<1x1x1xf32, #tpu.memory_space<vmem>>, vector<1x1x1xf32>
      tpu.vector_store %arg4[%c0_24, %c0_25, %c0_26], %43 {strides = array<i32>} : memref<1x1x1xf32, #tpu.memory_space<vmem>>, vector<1x1x1xf32>,
      %c0_27 = arith.constant 0 : index
      %c0_28 = arith.constant 0 : index
      %45 = vector.load %arg7[%c0_27, %c0_28] : memref<8x8xf32, #tpu.memory_space<vmem>>, vector<8x8xf32>
      %46 = vector.shape_cast %45 : vector<8x8xf32> to vector<1x8x8xf32>
      %cst_29 = arith.constant dense<0.000000e+00> : vector<1xf32>
      %47 = vector.multi_reduction <add>, %46, %cst_29 [1, 2] : vector<1x8x8xf32> to vector<1xf32>
      %48 = vector.shape_cast %47 : vector<1xf32> to vector<1x1x1xf32>
      %49 = vector.extract %48[0, 0, 0] : f32 from vector<1x1x1xf32>
      %50 = vector.broadcast %49 : f32 to vector<1x1x1xf32>
      %c0_30 = arith.constant 0 : index
      %c0_31 = arith.constant 0 : index
      %c0_32 = arith.constant 0 : index
      %51 = vector.load %arg5[%c0_30, %c0_31, %c0_32] : memref<1x1x1xf32, #tpu.memory_space<vmem>>, vector<1x1x1xf32>
      tpu.vector_store %arg5[%c0_30, %c0_31, %c0_32], %50 {strides = array<i32>} : memref<1x1x1xf32, #tpu.memory_space<vmem>>, vector<1x1x1xf32>,
    } else {
    }
    return
  }
  func.func @transform_0(%arg0: i32, %arg1: i32) -> (i32, i32, i32, i32) {
    %c0_i32 = arith.constant 0 : i32
    %c0_i32_0 = arith.constant 0 : i32
    %c0_i32_1 = arith.constant 0 : i32
    return %arg0, %c0_i32, %c0_i32_0, %arg1 : i32, i32, i32, i32
  }
  func.func @transform_1(%arg0: i32, %arg1: i32) -> (i32, i32, i32) {
    %c0_i32 = arith.constant 0 : i32
    %c0_i32_0 = arith.constant 0 : i32
    return %arg0, %c0_i32, %arg1 : i32, i32, i32
  }
  func.func @transform_2(%arg0: i32, %arg1: i32) -> (i32, i32, i32) {
    %c0_i32 = arith.constant 0 : i32
    %c0_i32_0 = arith.constant 0 : i32
    %c0_i32_1 = arith.constant 0 : i32
    return %arg0, %c0_i32, %c0_i32_0 : i32, i32, i32
  }
  func.func @transform_3(%arg0: i32, %arg1: i32) -> (i32, i32, i32) {
    %c0_i32 = arith.constant 0 : i32
    %c0_i32_0 = arith.constant 0 : i32
    %c0_i32_1 = arith.constant 0 : i32
    return %arg0, %c0_i32, %c0_i32_0 : i32, i32, i32
  }
}

module attributes {stable_mosaic.version = 11 : i64} {
  func.func @_ce_kernel(%arg0: i32, %arg1: i32, %arg2: memref<1x6x8x32xf32, #tpu.memory_space<vmem>>, %arg3: memref<1x8x32xi32, #tpu.memory_space<vmem>>, %arg4: memref<1x1x1xf32, #tpu.memory_space<vmem>>, %arg5: memref<1x1x1xf32, #tpu.memory_space<vmem>>, %arg6: memref<8x32xf32, #tpu.memory_space<vmem>>, %arg7: memref<8x32xf32, #tpu.memory_space<vmem>>) attributes {dimension_semantics = [#tpu.dimension_semantics<parallel>, #tpu.dimension_semantics<arbitrary>], iteration_bounds = array<i64: 2, 1>, scalar_prefetch = 0 : i64, scratch_operands = 2 : i64, tpu.core_type = #tpu.core_type<tc>, window_params = [{transform_indices = @transform_0, window_bounds = array<i64: 1, 6, 8, 32>}, {transform_indices = @transform_1, window_bounds = array<i64: 1, 8, 32>}, {transform_indices = @transform_2, window_bounds = array<i64: 1, 1, 1>}, {transform_indices = @transform_3, window_bounds = array<i64: 1, 1, 1>}]} {
    %c0_i32 = arith.constant 0 : i32
    %0 = arith.cmpi eq, %arg1, %c0_i32 : i32
    %1 = arith.extui %0 : i1 to i32
    %c0_i32_0 = arith.constant 0 : i32
    %2 = arith.cmpi ne, %1, %c0_i32_0 : i32
    scf.if %2 {
      %cst_21 = arith.constant 0.000000e+00 : f32
      %38 = vector.broadcast %cst_21 : f32 to vector<8x32xf32>
      %c0_22 = arith.constant 0 : index
      %c0_23 = arith.constant 0 : index
      %39 = vector.load %arg6[%c0_22, %c0_23] : memref<8x32xf32, #tpu.memory_space<vmem>>, vector<8x32xf32>
      tpu.vector_store %arg6[%c0_22, %c0_23], %38 {strides = array<i32>} : memref<8x32xf32, #tpu.memory_space<vmem>>, vector<8x32xf32>,
      %cst_24 = arith.constant 0.000000e+00 : f32
      %40 = vector.broadcast %cst_24 : f32 to vector<8x32xf32>
      %c0_25 = arith.constant 0 : index
      %c0_26 = arith.constant 0 : index
      %41 = vector.load %arg7[%c0_25, %c0_26] : memref<8x32xf32, #tpu.memory_space<vmem>>, vector<8x32xf32>
      tpu.vector_store %arg7[%c0_25, %c0_26], %40 {strides = array<i32>} : memref<8x32xf32, #tpu.memory_space<vmem>>, vector<8x32xf32>,
    } else {
    }
    %c0 = arith.constant 0 : index
    %c0_1 = arith.constant 0 : index
    %c0_2 = arith.constant 0 : index
    %c0_3 = arith.constant 0 : index
    %3 = vector.load %arg2[%c0, %c0_1, %c0_2, %c0_3] : memref<1x6x8x32xf32, #tpu.memory_space<vmem>>, vector<1x6x8x32xf32>
    %4 = vector.shape_cast %3 : vector<1x6x8x32xf32> to vector<6x8x32xf32>
    %c0_4 = arith.constant 0 : index
    %c0_5 = arith.constant 0 : index
    %c0_6 = arith.constant 0 : index
    %5 = vector.load %arg3[%c0_4, %c0_5, %c0_6] : memref<1x8x32xi32, #tpu.memory_space<vmem>>, vector<1x8x32xi32>
    %6 = vector.shape_cast %5 : vector<1x8x32xi32> to vector<8x32xi32>
    %cst = arith.constant dense<0xFF800000> : vector<8x32xf32>
    %7 = vector.multi_reduction <maximumf>, %4, %cst [0] : vector<6x8x32xf32> to vector<8x32xf32>
    %8 = vector.shape_cast %7 : vector<8x32xf32> to vector<1x8x32xf32>
    %9 = vector.broadcast %8 : vector<1x8x32xf32> to vector<6x8x32xf32>
    %10 = arith.subf %4, %9 : vector<6x8x32xf32>
    %11 = math.exp %10 : vector<6x8x32xf32>
    %cst_7 = arith.constant dense<0.000000e+00> : vector<8x32xf32>
    %12 = vector.multi_reduction <add>, %11, %cst_7 [0] : vector<6x8x32xf32> to vector<8x32xf32>
    %13 = math.log %12 : vector<8x32xf32>
    %14 = arith.addf %7, %13 : vector<8x32xf32>
    %15 = tpu.iota {dimensions = array<i32: 0>} : vector<6x8x32xi32>
    %16 = vector.shape_cast %6 : vector<8x32xi32> to vector<1x8x32xi32>
    %17 = vector.broadcast %16 : vector<1x8x32xi32> to vector<6x8x32xi32>
    %18 = arith.cmpi eq, %15, %17 : vector<6x8x32xi32>
    %cst_8 = arith.constant 0.000000e+00 : f32
    %19 = vector.broadcast %cst_8 : f32 to vector<6x8x32xf32>
    %20 = arith.select %18, %4, %19 : vector<6x8x32xi1>, vector<6x8x32xf32>
    %cst_9 = arith.constant dense<0.000000e+00> : vector<8x32xf32>
    %21 = vector.multi_reduction <add>, %20, %cst_9 [0] : vector<6x8x32xf32> to vector<8x32xf32>
    %c6_i32 = arith.constant 6 : i32
    %22 = vector.broadcast %c6_i32 : i32 to vector<8x32xi32>
    %23 = arith.cmpi ne, %6, %22 : vector<8x32xi32>
    %c0_10 = arith.constant 0 : index
    %c0_11 = arith.constant 0 : index
    %24 = vector.load %arg6[%c0_10, %c0_11] : memref<8x32xf32, #tpu.memory_space<vmem>>, vector<8x32xf32>
    %25 = arith.subf %14, %21 : vector<8x32xf32>
    %cst_12 = arith.constant 0.000000e+00 : f32
    %26 = vector.broadcast %cst_12 : f32 to vector<8x32xf32>
    %27 = arith.select %23, %25, %26 : vector<8x32xi1>, vector<8x32xf32>
    %28 = arith.addf %24, %27 : vector<8x32xf32>
    %c0_13 = arith.constant 0 : index
    %c0_14 = arith.constant 0 : index
    %29 = vector.load %arg6[%c0_13, %c0_14] : memref<8x32xf32, #tpu.memory_space<vmem>>, vector<8x32xf32>
    tpu.vector_store %arg6[%c0_13, %c0_14], %28 {strides = array<i32>} : memref<8x32xf32, #tpu.memory_space<vmem>>, vector<8x32xf32>,
    %c0_15 = arith.constant 0 : index
    %c0_16 = arith.constant 0 : index
    %30 = vector.load %arg7[%c0_15, %c0_16] : memref<8x32xf32, #tpu.memory_space<vmem>>, vector<8x32xf32>
    %31 = arith.extui %23 : vector<8x32xi1> to vector<8x32xi32>
    %32 = arith.sitofp %31 : vector<8x32xi32> to vector<8x32xf32>
    %33 = arith.addf %30, %32 : vector<8x32xf32>
    %c0_17 = arith.constant 0 : index
    %c0_18 = arith.constant 0 : index
    %34 = vector.load %arg7[%c0_17, %c0_18] : memref<8x32xf32, #tpu.memory_space<vmem>>, vector<8x32xf32>
    tpu.vector_store %arg7[%c0_17, %c0_18], %33 {strides = array<i32>} : memref<8x32xf32, #tpu.memory_space<vmem>>, vector<8x32xf32>,
    %c0_i32_19 = arith.constant 0 : i32
    %35 = arith.cmpi eq, %arg1, %c0_i32_19 : i32
    %36 = arith.extui %35 : i1 to i32
    %c0_i32_20 = arith.constant 0 : i32
    %37 = arith.cmpi ne, %36, %c0_i32_20 : i32
    scf.if %37 {
      %c0_21 = arith.constant 0 : index
      %c0_22 = arith.constant 0 : index
      %38 = vector.load %arg6[%c0_21, %c0_22] : memref<8x32xf32, #tpu.memory_space<vmem>>, vector<8x32xf32>
      %39 = vector.shape_cast %38 : vector<8x32xf32> to vector<1x8x32xf32>
      %cst_23 = arith.constant dense<0.000000e+00> : vector<1xf32>
      %40 = vector.multi_reduction <add>, %39, %cst_23 [1, 2] : vector<1x8x32xf32> to vector<1xf32>
      %41 = vector.shape_cast %40 : vector<1xf32> to vector<1x1x1xf32>
      %42 = vector.extract %41[0, 0, 0] : f32 from vector<1x1x1xf32>
      %43 = vector.broadcast %42 : f32 to vector<1x1x1xf32>
      %c0_24 = arith.constant 0 : index
      %c0_25 = arith.constant 0 : index
      %c0_26 = arith.constant 0 : index
      %44 = vector.load %arg4[%c0_24, %c0_25, %c0_26] : memref<1x1x1xf32, #tpu.memory_space<vmem>>, vector<1x1x1xf32>
      tpu.vector_store %arg4[%c0_24, %c0_25, %c0_26], %43 {strides = array<i32>} : memref<1x1x1xf32, #tpu.memory_space<vmem>>, vector<1x1x1xf32>,
      %c0_27 = arith.constant 0 : index
      %c0_28 = arith.constant 0 : index
      %45 = vector.load %arg7[%c0_27, %c0_28] : memref<8x32xf32, #tpu.memory_space<vmem>>, vector<8x32xf32>
      %46 = vector.shape_cast %45 : vector<8x32xf32> to vector<1x8x32xf32>
      %cst_29 = arith.constant dense<0.000000e+00> : vector<1xf32>
      %47 = vector.multi_reduction <add>, %46, %cst_29 [1, 2] : vector<1x8x32xf32> to vector<1xf32>
      %48 = vector.shape_cast %47 : vector<1xf32> to vector<1x1x1xf32>
      %49 = vector.extract %48[0, 0, 0] : f32 from vector<1x1x1xf32>
      %50 = vector.broadcast %49 : f32 to vector<1x1x1xf32>
      %c0_30 = arith.constant 0 : index
      %c0_31 = arith.constant 0 : index
      %c0_32 = arith.constant 0 : index
      %51 = vector.load %arg5[%c0_30, %c0_31, %c0_32] : memref<1x1x1xf32, #tpu.memory_space<vmem>>, vector<1x1x1xf32>
      tpu.vector_store %arg5[%c0_30, %c0_31, %c0_32], %50 {strides = array<i32>} : memref<1x1x1xf32, #tpu.memory_space<vmem>>, vector<1x1x1xf32>,
    } else {
    }
    return
  }
  func.func @transform_0(%arg0: i32, %arg1: i32) -> (i32, i32, i32, i32) {
    %c0_i32 = arith.constant 0 : i32
    %c0_i32_0 = arith.constant 0 : i32
    %c0_i32_1 = arith.constant 0 : i32
    return %arg0, %c0_i32, %c0_i32_0, %arg1 : i32, i32, i32, i32
  }
  func.func @transform_1(%arg0: i32, %arg1: i32) -> (i32, i32, i32) {
    %c0_i32 = arith.constant 0 : i32
    %c0_i32_0 = arith.constant 0 : i32
    return %arg0, %c0_i32, %arg1 : i32, i32, i32
  }
  func.func @transform_2(%arg0: i32, %arg1: i32) -> (i32, i32, i32) {
    %c0_i32 = arith.constant 0 : i32
    %c0_i32_0 = arith.constant 0 : i32
    %c0_i32_1 = arith.constant 0 : i32
    return %arg0, %c0_i32, %c0_i32_0 : i32, i32, i32
  }
  func.func @transform_3(%arg0: i32, %arg1: i32) -> (i32, i32, i32) {
    %c0_i32 = arith.constant 0 : i32
    %c0_i32_0 = arith.constant 0 : i32
    %c0_i32_1 = arith.constant 0 : i32
    return %arg0, %c0_i32, %c0_i32_0 : i32, i32, i32
  }
}

module attributes {stable_mosaic.version = 11 : i64} {
  func.func @_vae_kld_kernel(%arg0: i32, %arg1: memref<1x128xf32, #tpu.memory_space<vmem>>, %arg2: memref<1x128xf32, #tpu.memory_space<vmem>>, %arg3: memref<1x1xf32, #tpu.memory_space<vmem>>, %arg4: memref<1x128xf32, #tpu.memory_space<vmem>>) attributes {dimension_semantics = [#tpu.dimension_semantics<arbitrary>], iteration_bounds = array<i64: 1>, scalar_prefetch = 0 : i64, scratch_operands = 1 : i64, tpu.core_type = #tpu.core_type<tc>, window_params = [{transform_indices = @transform_0, window_bounds = array<i64: 1, 128>}, {transform_indices = @transform_1, window_bounds = array<i64: 1, 128>}, {pipeline_mode = #tpu.pipeline_mode<synchronous>, transform_indices = @transform_2, window_bounds = array<i64: 1, 1>}]} {
    %c0_i32 = arith.constant 0 : i32
    %0 = arith.cmpi eq, %arg0, %c0_i32 : i32
    %1 = arith.extui %0 : i1 to i32
    %c0_i32_0 = arith.constant 0 : i32
    %2 = arith.cmpi ne, %1, %c0_i32_0 : i32
    scf.if %2 {
      %cst_10 = arith.constant 0.000000e+00 : f32
      %17 = vector.broadcast %cst_10 : f32 to vector<1x128xf32>
      %c0_11 = arith.constant 0 : index
      %c0_12 = arith.constant 0 : index
      %18 = vector.load %arg4[%c0_11, %c0_12] : memref<1x128xf32, #tpu.memory_space<vmem>>, vector<1x128xf32>
      tpu.vector_store %arg4[%c0_11, %c0_12], %17 {strides = array<i32>} : memref<1x128xf32, #tpu.memory_space<vmem>>, vector<1x128xf32>,
    } else {
    }
    %c0 = arith.constant 0 : index
    %c0_1 = arith.constant 0 : index
    %3 = vector.load %arg1[%c0, %c0_1] : memref<1x128xf32, #tpu.memory_space<vmem>>, vector<1x128xf32>
    %c0_2 = arith.constant 0 : index
    %c0_3 = arith.constant 0 : index
    %4 = vector.load %arg2[%c0_2, %c0_3] : memref<1x128xf32, #tpu.memory_space<vmem>>, vector<1x128xf32>
    %cst = arith.constant 1.000000e+00 : f32
    %5 = vector.broadcast %cst : f32 to vector<1x128xf32>
    %6 = arith.addf %5, %4 : vector<1x128xf32>
    %7 = arith.mulf %3, %3 : vector<1x128xf32>
    %8 = arith.subf %6, %7 : vector<1x128xf32>
    %9 = math.exp %4 : vector<1x128xf32>
    %10 = arith.subf %8, %9 : vector<1x128xf32>
    %c0_4 = arith.constant 0 : index
    %c0_5 = arith.constant 0 : index
    %11 = vector.load %arg4[%c0_4, %c0_5] : memref<1x128xf32, #tpu.memory_space<vmem>>, vector<1x128xf32>
    %12 = arith.addf %11, %10 : vector<1x128xf32>
    %c0_6 = arith.constant 0 : index
    %c0_7 = arith.constant 0 : index
    %13 = vector.load %arg4[%c0_6, %c0_7] : memref<1x128xf32, #tpu.memory_space<vmem>>, vector<1x128xf32>
    tpu.vector_store %arg4[%c0_6, %c0_7], %12 {strides = array<i32>} : memref<1x128xf32, #tpu.memory_space<vmem>>, vector<1x128xf32>,
    %c0_i32_8 = arith.constant 0 : i32
    %14 = arith.cmpi eq, %arg0, %c0_i32_8 : i32
    %15 = arith.extui %14 : i1 to i32
    %c0_i32_9 = arith.constant 0 : i32
    %16 = arith.cmpi ne, %15, %c0_i32_9 : i32
    scf.if %16 {
      %c0_10 = arith.constant 0 : index
      %c0_11 = arith.constant 0 : index
      %17 = vector.load %arg4[%c0_10, %c0_11] : memref<1x128xf32, #tpu.memory_space<vmem>>, vector<1x128xf32>
      %18 = vector.shape_cast %17 : vector<1x128xf32> to vector<1x1x128xf32>
      %cst_12 = arith.constant dense<0.000000e+00> : vector<1xf32>
      %19 = vector.multi_reduction <add>, %18, %cst_12 [1, 2] : vector<1x1x128xf32> to vector<1xf32>
      %20 = vector.shape_cast %19 : vector<1xf32> to vector<1x1x1xf32>
      %21 = vector.extract %20[0, 0, 0] : f32 from vector<1x1x1xf32>
      %cst_13 = arith.constant -5.000000e-01 : f32
      %22 = arith.mulf %cst_13, %21 : f32
      %23 = vector.broadcast %22 : f32 to vector<1x1xf32>
      %c0_14 = arith.constant 0 : index
      %c0_15 = arith.constant 0 : index
      %24 = vector.load %arg3[%c0_14, %c0_15] : memref<1x1xf32, #tpu.memory_space<vmem>>, vector<1x1xf32>
      tpu.vector_store %arg3[%c0_14, %c0_15], %23 {strides = array<i32>} : memref<1x1xf32, #tpu.memory_space<vmem>>, vector<1x1xf32>,
    } else {
    }
    return
  }
  func.func @transform_0(%arg0: i32) -> (i32, i32) {
    %c0_i32 = arith.constant 0 : i32
    %c0_i32_0 = arith.constant 0 : i32
    return %arg0, %c0_i32 : i32, i32
  }
  func.func @transform_1(%arg0: i32) -> (i32, i32) {
    %c0_i32 = arith.constant 0 : i32
    %c0_i32_0 = arith.constant 0 : i32
    return %arg0, %c0_i32 : i32, i32
  }
  func.func @transform_2(%arg0: i32) -> (i32, i32) {
    %c0_i32 = arith.constant 0 : i32
    %c0_i32_0 = arith.constant 0 : i32
    %c0_i32_1 = arith.constant 0 : i32
    return %c0_i32, %c0_i32_0 : i32, i32
  }
}

module attributes {stable_mosaic.version = 11 : i64} {
  func.func @_mse_kernel(%arg0: i32, %arg1: memref<12x128xf32, #tpu.memory_space<vmem>>, %arg2: memref<12x128xf32, #tpu.memory_space<vmem>>, %arg3: memref<1x1xf32, #tpu.memory_space<vmem>>, %arg4: memref<12x128xf32, #tpu.memory_space<vmem>>) attributes {dimension_semantics = [#tpu.dimension_semantics<arbitrary>], iteration_bounds = array<i64: 1>, scalar_prefetch = 0 : i64, scratch_operands = 1 : i64, tpu.core_type = #tpu.core_type<tc>, window_params = [{transform_indices = @transform_0, window_bounds = array<i64: 12, 128>}, {transform_indices = @transform_1, window_bounds = array<i64: 12, 128>}, {pipeline_mode = #tpu.pipeline_mode<synchronous>, transform_indices = @transform_2, window_bounds = array<i64: 1, 1>}]} {
    %c0_i32 = arith.constant 0 : i32
    %0 = arith.cmpi eq, %arg0, %c0_i32 : i32
    %1 = arith.extui %0 : i1 to i32
    %c0_i32_0 = arith.constant 0 : i32
    %2 = arith.cmpi ne, %1, %c0_i32_0 : i32
    scf.if %2 {
      %cst = arith.constant 0.000000e+00 : f32
      %13 = vector.broadcast %cst : f32 to vector<12x128xf32>
      %c0_10 = arith.constant 0 : index
      %c0_11 = arith.constant 0 : index
      %14 = vector.load %arg4[%c0_10, %c0_11] : memref<12x128xf32, #tpu.memory_space<vmem>>, vector<12x128xf32>
      tpu.vector_store %arg4[%c0_10, %c0_11], %13 {strides = array<i32>} : memref<12x128xf32, #tpu.memory_space<vmem>>, vector<12x128xf32>,
    } else {
    }
    %c0 = arith.constant 0 : index
    %c0_1 = arith.constant 0 : index
    %3 = vector.load %arg1[%c0, %c0_1] : memref<12x128xf32, #tpu.memory_space<vmem>>, vector<12x128xf32>
    %c0_2 = arith.constant 0 : index
    %c0_3 = arith.constant 0 : index
    %4 = vector.load %arg2[%c0_2, %c0_3] : memref<12x128xf32, #tpu.memory_space<vmem>>, vector<12x128xf32>
    %5 = arith.subf %3, %4 : vector<12x128xf32>
    %6 = arith.mulf %5, %5 : vector<12x128xf32>
    %c0_4 = arith.constant 0 : index
    %c0_5 = arith.constant 0 : index
    %7 = vector.load %arg4[%c0_4, %c0_5] : memref<12x128xf32, #tpu.memory_space<vmem>>, vector<12x128xf32>
    %8 = arith.addf %7, %6 : vector<12x128xf32>
    %c0_6 = arith.constant 0 : index
    %c0_7 = arith.constant 0 : index
    %9 = vector.load %arg4[%c0_6, %c0_7] : memref<12x128xf32, #tpu.memory_space<vmem>>, vector<12x128xf32>
    tpu.vector_store %arg4[%c0_6, %c0_7], %8 {strides = array<i32>} : memref<12x128xf32, #tpu.memory_space<vmem>>, vector<12x128xf32>,
    %c0_i32_8 = arith.constant 0 : i32
    %10 = arith.cmpi eq, %arg0, %c0_i32_8 : i32
    %11 = arith.extui %10 : i1 to i32
    %c0_i32_9 = arith.constant 0 : i32
    %12 = arith.cmpi ne, %11, %c0_i32_9 : i32
    scf.if %12 {
      %c0_10 = arith.constant 0 : index
      %c0_11 = arith.constant 0 : index
      %13 = vector.load %arg4[%c0_10, %c0_11] : memref<12x128xf32, #tpu.memory_space<vmem>>, vector<12x128xf32>
      %14 = vector.shape_cast %13 : vector<12x128xf32> to vector<1x12x128xf32>
      %cst = arith.constant dense<0.000000e+00> : vector<1xf32>
      %15 = vector.multi_reduction <add>, %14, %cst [1, 2] : vector<1x12x128xf32> to vector<1xf32>
      %16 = vector.shape_cast %15 : vector<1xf32> to vector<1x1x1xf32>
      %17 = vector.extract %16[0, 0, 0] : f32 from vector<1x1x1xf32>
      %18 = vector.broadcast %17 : f32 to vector<1x1xf32>
      %c0_12 = arith.constant 0 : index
      %c0_13 = arith.constant 0 : index
      %19 = vector.load %arg3[%c0_12, %c0_13] : memref<1x1xf32, #tpu.memory_space<vmem>>, vector<1x1xf32>
      tpu.vector_store %arg3[%c0_12, %c0_13], %18 {strides = array<i32>} : memref<1x1xf32, #tpu.memory_space<vmem>>, vector<1x1xf32>,
    } else {
    }
    return
  }
  func.func @transform_0(%arg0: i32) -> (i32, i32) {
    %c0_i32 = arith.constant 0 : i32
    %c0_i32_0 = arith.constant 0 : i32
    return %arg0, %c0_i32 : i32, i32
  }
  func.func @transform_1(%arg0: i32) -> (i32, i32) {
    %c0_i32 = arith.constant 0 : i32
    %c0_i32_0 = arith.constant 0 : i32
    return %arg0, %c0_i32 : i32, i32
  }
  func.func @transform_2(%arg0: i32) -> (i32, i32) {
    %c0_i32 = arith.constant 0 : i32
    %c0_i32_0 = arith.constant 0 : i32
    %c0_i32_1 = arith.constant 0 : i32
    return %c0_i32, %c0_i32_0 : i32, i32
  }
}

module attributes {stable_mosaic.version = 11 : i64} {
  func.func @_supcon_kernel(%arg0: memref<2x32xf32, #tpu.memory_space<vmem>>, %arg1: memref<2x2xf32, #tpu.memory_space<vmem>>, %arg2: memref<1x1xf32, #tpu.memory_space<vmem>>) attributes {dimension_semantics = [], scalar_prefetch = 0 : i64, scratch_operands = 0 : i64, tpu.core_type = #tpu.core_type<tc>} {
    %c0 = arith.constant 0 : index
    %c0_0 = arith.constant 0 : index
    %0 = vector.load %arg0[%c0, %c0_0] : memref<2x32xf32, #tpu.memory_space<vmem>>, vector<2x32xf32>
    %1 = arith.mulf %0, %0 : vector<2x32xf32>
    %cst = arith.constant dense<0.000000e+00> : vector<2xf32>
    %2 = vector.multi_reduction <add>, %1, %cst [1] : vector<2x32xf32> to vector<2xf32>
    %3 = vector.shape_cast %2 : vector<2xf32> to vector<2x1xf32>
    %cst_1 = arith.constant 1.000000e-24 : f32
    %4 = vector.broadcast %cst_1 : f32 to vector<2x1xf32>
    %5 = arith.maximumf %3, %4 : vector<2x1xf32>
    %6 = math.rsqrt %5 : vector<2x1xf32>
    %7 = vector.broadcast %6 : vector<2x1xf32> to vector<2x32xf32>
    %8 = arith.mulf %0, %7 : vector<2x32xf32>
    %cst_2 = arith.constant dense<0.000000e+00> : vector<2x2xf32>
    %9 = tpu.matmul %8, %8, %cst_2 {dimension_numbers = #tpu.dot_dimension_numbers<[1], [1], [0], [0], [0, 0, 1, 0], [], []>} : vector<2x32xf32>, vector<2x32xf32>, vector<2x2xf32> -> vector<2x2xf32>
    %cst_3 = arith.constant 5.000000e-01 : f32
    %10 = vector.broadcast %cst_3 : f32 to vector<2x2xf32>
    %11 = arith.divf %9, %10 : vector<2x2xf32>
    %12 = tpu.iota {dimensions = array<i32: 0>} : vector<2x2xi32>
    %13 = tpu.iota {dimensions = array<i32: 1>} : vector<2x2xi32>
    %14 = arith.cmpi eq, %12, %13 : vector<2x2xi32>
    %15 = arith.extui %14 : vector<2x2xi1> to vector<2x2xi32>
    %16 = arith.sitofp %15 : vector<2x2xi32> to vector<2x2xf32>
    %c0_4 = arith.constant 0 : index
    %c0_5 = arith.constant 0 : index
    %17 = vector.load %arg1[%c0_4, %c0_5] : memref<2x2xf32, #tpu.memory_space<vmem>>, vector<2x2xf32>
    %18 = arith.subf %17, %16 : vector<2x2xf32>
    %cst_6 = arith.constant 0.000000e+00 : f32
    %19 = vector.broadcast %cst_6 : f32 to vector<2x2xf32>
    %20 = arith.maximumf %18, %19 : vector<2x2xf32>
    %cst_7 = arith.constant dense<0.000000e+00> : vector<2xf32>
    %21 = vector.multi_reduction <add>, %20, %cst_7 [1] : vector<2x2xf32> to vector<2xf32>
    %22 = vector.shape_cast %21 : vector<2xf32> to vector<2x1xf32>
    %cst_8 = arith.constant dense<0xFF800000> : vector<2xf32>
    %23 = vector.multi_reduction <maximumf>, %11, %cst_8 [1] : vector<2x2xf32> to vector<2xf32>
    %24 = vector.shape_cast %23 : vector<2xf32> to vector<2x1xf32>
    %25 = vector.broadcast %24 : vector<2x1xf32> to vector<2x2xf32>
    %26 = arith.subf %11, %25 : vector<2x2xf32>
    %27 = math.exp %26 : vector<2x2xf32>
    %cst_9 = arith.constant dense<0.000000e+00> : vector<2xf32>
    %28 = vector.multi_reduction <add>, %27, %cst_9 [1] : vector<2x2xf32> to vector<2xf32>
    %29 = vector.shape_cast %28 : vector<2xf32> to vector<2x1xf32>
    %30 = arith.mulf %27, %16 : vector<2x2xf32>
    %31 = vector.broadcast %29 : vector<2x1xf32> to vector<2x2xf32>
    %32 = arith.subf %31, %30 : vector<2x2xf32>
    %cst_10 = arith.constant 1.000000e-30 : f32
    %33 = vector.broadcast %cst_10 : f32 to vector<2x2xf32>
    %34 = arith.maximumf %32, %33 : vector<2x2xf32>
    %35 = math.log %34 : vector<2x2xf32>
    %36 = arith.subf %11, %35 : vector<2x2xf32>
    %37 = arith.mulf %20, %36 : vector<2x2xf32>
    %cst_11 = arith.constant dense<0.000000e+00> : vector<2xf32>
    %38 = vector.multi_reduction <add>, %37, %cst_11 [1] : vector<2x2xf32> to vector<2xf32>
    %39 = vector.shape_cast %38 : vector<2xf32> to vector<2x1xf32>
    %cst_12 = arith.constant 1.000000e+00 : f32
    %40 = vector.broadcast %cst_12 : f32 to vector<2x1xf32>
    %41 = arith.maximumf %22, %40 : vector<2x1xf32>
    %42 = arith.divf %39, %41 : vector<2x1xf32>
    %cst_13 = arith.constant 0.000000e+00 : f32
    %43 = vector.broadcast %cst_13 : f32 to vector<2x1xf32>
    %44 = arith.cmpf ogt, %22, %43 : vector<2x1xf32>
    %45 = arith.extui %44 : vector<2x1xi1> to vector<2x1xi32>
    %46 = arith.sitofp %45 : vector<2x1xi32> to vector<2x1xf32>
    %47 = vector.shape_cast %46 : vector<2x1xf32> to vector<1x2x1xf32>
    %cst_14 = arith.constant dense<0.000000e+00> : vector<1xf32>
    %48 = vector.multi_reduction <add>, %47, %cst_14 [1, 2] : vector<1x2x1xf32> to vector<1xf32>
    %49 = vector.shape_cast %48 : vector<1xf32> to vector<1x1x1xf32>
    %50 = vector.extract %49[0, 0, 0] : f32 from vector<1x1x1xf32>
    %cst_15 = arith.constant 0.000000e+00 : f32
    %51 = vector.broadcast %cst_15 : f32 to vector<2x1xf32>
    %52 = arith.subf %51, %42 : vector<2x1xf32>
    %53 = arith.mulf %52, %46 : vector<2x1xf32>
    %54 = vector.shape_cast %53 : vector<2x1xf32> to vector<1x2x1xf32>
    %cst_16 = arith.constant dense<0.000000e+00> : vector<1xf32>
    %55 = vector.multi_reduction <add>, %54, %cst_16 [1, 2] : vector<1x2x1xf32> to vector<1xf32>
    %56 = vector.shape_cast %55 : vector<1xf32> to vector<1x1x1xf32>
    %57 = vector.extract %56[0, 0, 0] : f32 from vector<1x1x1xf32>
    %cst_17 = arith.constant 1.000000e+00 : f32
    %58 = arith.maximumf %50, %cst_17 : f32
    %59 = arith.divf %57, %58 : f32
    %60 = vector.broadcast %59 : f32 to vector<1x1xf32>
    %c0_18 = arith.constant 0 : index
    %c0_19 = arith.constant 0 : index
    %61 = vector.load %arg2[%c0_18, %c0_19] : memref<1x1xf32, #tpu.memory_space<vmem>>, vector<1x1xf32>
    tpu.vector_store %arg2[%c0_18, %c0_19], %60 {strides = array<i32>} : memref<1x1xf32, #tpu.memory_space<vmem>>, vector<1x1xf32>,
    return
  }
}

module attributes {stable_mosaic.version = 11 : i64} {
  func.func @_kld_kernel(%arg0: i32, %arg1: i32, %arg2: memref<1x6x8x32xf32, #tpu.memory_space<vmem>>, %arg3: memref<1x6x8x32xf32, #tpu.memory_space<vmem>>, %arg4: memref<1x1x1xf32, #tpu.memory_space<vmem>>, %arg5: memref<8x32xf32, #tpu.memory_space<vmem>>) attributes {dimension_semantics = [#tpu.dimension_semantics<parallel>, #tpu.dimension_semantics<arbitrary>], iteration_bounds = array<i64: 2, 1>, scalar_prefetch = 0 : i64, scratch_operands = 1 : i64, tpu.core_type = #tpu.core_type<tc>, window_params = [{transform_indices = @transform_0, window_bounds = array<i64: 1, 6, 8, 32>}, {transform_indices = @transform_1, window_bounds = array<i64: 1, 6, 8, 32>}, {transform_indices = @transform_2, window_bounds = array<i64: 1, 1, 1>}]} {
    %c0_i32 = arith.constant 0 : i32
    %0 = arith.cmpi eq, %arg1, %c0_i32 : i32
    %1 = arith.extui %0 : i1 to i32
    %c0_i32_0 = arith.constant 0 : i32
    %2 = arith.cmpi ne, %1, %c0_i32_0 : i32
    scf.if %2 {
      %cst_18 = arith.constant 0.000000e+00 : f32
      %39 = vector.broadcast %cst_18 : f32 to vector<8x32xf32>
      %c0_19 = arith.constant 0 : index
      %c0_20 = arith.constant 0 : index
      %40 = vector.load %arg5[%c0_19, %c0_20] : memref<8x32xf32, #tpu.memory_space<vmem>>, vector<8x32xf32>
      tpu.vector_store %arg5[%c0_19, %c0_20], %39 {strides = array<i32>} : memref<8x32xf32, #tpu.memory_space<vmem>>, vector<8x32xf32>,
    } else {
    }
    %c0 = arith.constant 0 : index
    %c0_1 = arith.constant 0 : index
    %c0_2 = arith.constant 0 : index
    %c0_3 = arith.constant 0 : index
    %3 = vector.load %arg2[%c0, %c0_1, %c0_2, %c0_3] : memref<1x6x8x32xf32, #tpu.memory_space<vmem>>, vector<1x6x8x32xf32>
    %4 = vector.shape_cast %3 : vector<1x6x8x32xf32> to vector<6x8x32xf32>
    %c0_4 = arith.constant 0 : index
    %c0_5 = arith.constant 0 : index
    %c0_6 = arith.constant 0 : index
    %c0_7 = arith.constant 0 : index
    %5 = vector.load %arg3[%c0_4, %c0_5, %c0_6, %c0_7] : memref<1x6x8x32xf32, #tpu.memory_space<vmem>>, vector<1x6x8x32xf32>
    %6 = vector.shape_cast %5 : vector<1x6x8x32xf32> to vector<6x8x32xf32>
    %cst = arith.constant dense<0xFF800000> : vector<8x32xf32>
    %7 = vector.multi_reduction <maximumf>, %4, %cst [0] : vector<6x8x32xf32> to vector<8x32xf32>
    %8 = vector.shape_cast %7 : vector<8x32xf32> to vector<1x8x32xf32>
    %9 = vector.broadcast %8 : vector<1x8x32xf32> to vector<6x8x32xf32>
    %10 = arith.subf %4, %9 : vector<6x8x32xf32>
    %11 = math.exp %10 : vector<6x8x32xf32>
    %cst_8 = arith.constant dense<0.000000e+00> : vector<8x32xf32>
    %12 = vector.multi_reduction <add>, %11, %cst_8 [0] : vector<6x8x32xf32> to vector<8x32xf32>
    %13 = math.log %12 : vector<8x32xf32>
    %cst_9 = arith.constant dense<0xFF800000> : vector<8x32xf32>
    %14 = vector.multi_reduction <maximumf>, %6, %cst_9 [0] : vector<6x8x32xf32> to vector<8x32xf32>
    %15 = vector.shape_cast %14 : vector<8x32xf32> to vector<1x8x32xf32>
    %16 = vector.broadcast %15 : vector<1x8x32xf32> to vector<6x8x32xf32>
    %17 = arith.subf %6, %16 : vector<6x8x32xf32>
    %18 = math.exp %17 : vector<6x8x32xf32>
    %cst_10 = arith.constant dense<0.000000e+00> : vector<8x32xf32>
    %19 = vector.multi_reduction <add>, %18, %cst_10 [0] : vector<6x8x32xf32> to vector<8x32xf32>
    %20 = vector.shape_cast %14 : vector<8x32xf32> to vector<1x8x32xf32>
    %21 = vector.broadcast %20 : vector<1x8x32xf32> to vector<6x8x32xf32>
    %22 = arith.subf %6, %21 : vector<6x8x32xf32>
    %23 = vector.shape_cast %7 : vector<8x32xf32> to vector<1x8x32xf32>
    %24 = vector.broadcast %23 : vector<1x8x32xf32> to vector<6x8x32xf32>
    %25 = arith.subf %4, %24 : vector<6x8x32xf32>
    %26 = arith.subf %22, %25 : vector<6x8x32xf32>
    %27 = arith.mulf %18, %26 : vector<6x8x32xf32>
    %cst_11 = arith.constant dense<0.000000e+00> : vector<8x32xf32>
    %28 = vector.multi_reduction <add>, %27, %cst_11 [0] : vector<6x8x32xf32> to vector<8x32xf32>
    %29 = arith.divf %28, %19 : vector<8x32xf32>
    %30 = math.log %19 : vector<8x32xf32>
    %31 = arith.subf %13, %30 : vector<8x32xf32>
    %32 = arith.addf %29, %31 : vector<8x32xf32>
    %c0_12 = arith.constant 0 : index
    %c0_13 = arith.constant 0 : index
    %33 = vector.load %arg5[%c0_12, %c0_13] : memref<8x32xf32, #tpu.memory_space<vmem>>, vector<8x32xf32>
    %34 = arith.addf %33, %32 : vector<8x32xf32>
    %c0_14 = arith.constant 0 : index
    %c0_15 = arith.constant 0 : index
    %35 = vector.load %arg5[%c0_14, %c0_15] : memref<8x32xf32, #tpu.memory_space<vmem>>, vector<8x32xf32>
    tpu.vector_store %arg5[%c0_14, %c0_15], %34 {strides = array<i32>} : memref<8x32xf32, #tpu.memory_space<vmem>>, vector<8x32xf32>,
    %c0_i32_16 = arith.constant 0 : i32
    %36 = arith.cmpi eq, %arg1, %c0_i32_16 : i32
    %37 = arith.extui %36 : i1 to i32
    %c0_i32_17 = arith.constant 0 : i32
    %38 = arith.cmpi ne, %37, %c0_i32_17 : i32
    scf.if %38 {
      %c0_18 = arith.constant 0 : index
      %c0_19 = arith.constant 0 : index
      %39 = vector.load %arg5[%c0_18, %c0_19] : memref<8x32xf32, #tpu.memory_space<vmem>>, vector<8x32xf32>
      %40 = vector.shape_cast %39 : vector<8x32xf32> to vector<1x8x32xf32>
      %cst_20 = arith.constant dense<0.000000e+00> : vector<1xf32>
      %41 = vector.multi_reduction <add>, %40, %cst_20 [1, 2] : vector<1x8x32xf32> to vector<1xf32>
      %42 = vector.shape_cast %41 : vector<1xf32> to vector<1x1x1xf32>
      %43 = vector.extract %42[0, 0, 0] : f32 from vector<1x1x1xf32>
      %44 = vector.broadcast %43 : f32 to vector<1x1x1xf32>
      %c0_21 = arith.constant 0 : index
      %c0_22 = arith.constant 0 : index
      %c0_23 = arith.constant 0 : index
      %45 = vector.load %arg4[%c0_21, %c0_22, %c0_23] : memref<1x1x1xf32, #tpu.memory_space<vmem>>, vector<1x1x1xf32>
      tpu.vector_store %arg4[%c0_21, %c0_22, %c0_23], %44 {strides = array<i32>} : memref<1x1x1xf32, #tpu.memory_space<vmem>>, vector<1x1x1xf32>,
    } else {
    }
    return
  }
  func.func @transform_0(%arg0: i32, %arg1: i32) -> (i32, i32, i32, i32) {
    %c0_i32 = arith.constant 0 : i32
    %c0_i32_0 = arith.constant 0 : i32
    %c0_i32_1 = arith.constant 0 : i32
    return %arg0, %c0_i32, %c0_i32_0, %arg1 : i32, i32, i32, i32
  }
  func.func @transform_1(%arg0: i32, %arg1: i32) -> (i32, i32, i32, i32) {
    %c0_i32 = arith.constant 0 : i32
    %c0_i32_0 = arith.constant 0 : i32
    %c0_i32_1 = arith.constant 0 : i32
    return %arg0, %c0_i32, %c0_i32_0, %arg1 : i32, i32, i32, i32
  }
  func.func @transform_2(%arg0: i32, %arg1: i32) -> (i32, i32, i32) {
    %c0_i32 = arith.constant 0 : i32
    %c0_i32_0 = arith.constant 0 : i32
    %c0_i32_1 = arith.constant 0 : i32
    return %arg0, %c0_i32, %c0_i32_0 : i32, i32, i32
  }
}

module attributes {stable_mosaic.version = 11 : i64} {
  func.func @_kld_kernel(%arg0: i32, %arg1: i32, %arg2: memref<1x6x8x8xf32, #tpu.memory_space<vmem>>, %arg3: memref<1x6x8x8xf32, #tpu.memory_space<vmem>>, %arg4: memref<1x1x1xf32, #tpu.memory_space<vmem>>, %arg5: memref<8x8xf32, #tpu.memory_space<vmem>>) attributes {dimension_semantics = [#tpu.dimension_semantics<parallel>, #tpu.dimension_semantics<arbitrary>], iteration_bounds = array<i64: 2, 1>, scalar_prefetch = 0 : i64, scratch_operands = 1 : i64, tpu.core_type = #tpu.core_type<tc>, window_params = [{transform_indices = @transform_0, window_bounds = array<i64: 1, 6, 8, 8>}, {transform_indices = @transform_1, window_bounds = array<i64: 1, 6, 8, 8>}, {transform_indices = @transform_2, window_bounds = array<i64: 1, 1, 1>}]} {
    %c0_i32 = arith.constant 0 : i32
    %0 = arith.cmpi eq, %arg1, %c0_i32 : i32
    %1 = arith.extui %0 : i1 to i32
    %c0_i32_0 = arith.constant 0 : i32
    %2 = arith.cmpi ne, %1, %c0_i32_0 : i32
    scf.if %2 {
      %cst_18 = arith.constant 0.000000e+00 : f32
      %39 = vector.broadcast %cst_18 : f32 to vector<8x8xf32>
      %c0_19 = arith.constant 0 : index
      %c0_20 = arith.constant 0 : index
      %40 = vector.load %arg5[%c0_19, %c0_20] : memref<8x8xf32, #tpu.memory_space<vmem>>, vector<8x8xf32>
      tpu.vector_store %arg5[%c0_19, %c0_20], %39 {strides = array<i32>} : memref<8x8xf32, #tpu.memory_space<vmem>>, vector<8x8xf32>,
    } else {
    }
    %c0 = arith.constant 0 : index
    %c0_1 = arith.constant 0 : index
    %c0_2 = arith.constant 0 : index
    %c0_3 = arith.constant 0 : index
    %3 = vector.load %arg2[%c0, %c0_1, %c0_2, %c0_3] : memref<1x6x8x8xf32, #tpu.memory_space<vmem>>, vector<1x6x8x8xf32>
    %4 = vector.shape_cast %3 : vector<1x6x8x8xf32> to vector<6x8x8xf32>
    %c0_4 = arith.constant 0 : index
    %c0_5 = arith.constant 0 : index
    %c0_6 = arith.constant 0 : index
    %c0_7 = arith.constant 0 : index
    %5 = vector.load %arg3[%c0_4, %c0_5, %c0_6, %c0_7] : memref<1x6x8x8xf32, #tpu.memory_space<vmem>>, vector<1x6x8x8xf32>
    %6 = vector.shape_cast %5 : vector<1x6x8x8xf32> to vector<6x8x8xf32>
    %cst = arith.constant dense<0xFF800000> : vector<8x8xf32>
    %7 = vector.multi_reduction <maximumf>, %4, %cst [0] : vector<6x8x8xf32> to vector<8x8xf32>
    %8 = vector.shape_cast %7 : vector<8x8xf32> to vector<1x8x8xf32>
    %9 = vector.broadcast %8 : vector<1x8x8xf32> to vector<6x8x8xf32>
    %10 = arith.subf %4, %9 : vector<6x8x8xf32>
    %11 = math.exp %10 : vector<6x8x8xf32>
    %cst_8 = arith.constant dense<0.000000e+00> : vector<8x8xf32>
    %12 = vector.multi_reduction <add>, %11, %cst_8 [0] : vector<6x8x8xf32> to vector<8x8xf32>
    %13 = math.log %12 : vector<8x8xf32>
    %cst_9 = arith.constant dense<0xFF800000> : vector<8x8xf32>
    %14 = vector.multi_reduction <maximumf>, %6, %cst_9 [0] : vector<6x8x8xf32> to vector<8x8xf32>
    %15 = vector.shape_cast %14 : vector<8x8xf32> to vector<1x8x8xf32>
    %16 = vector.broadcast %15 : vector<1x8x8xf32> to vector<6x8x8xf32>
    %17 = arith.subf %6, %16 : vector<6x8x8xf32>
    %18 = math.exp %17 : vector<6x8x8xf32>
    %cst_10 = arith.constant dense<0.000000e+00> : vector<8x8xf32>
    %19 = vector.multi_reduction <add>, %18, %cst_10 [0] : vector<6x8x8xf32> to vector<8x8xf32>
    %20 = vector.shape_cast %14 : vector<8x8xf32> to vector<1x8x8xf32>
    %21 = vector.broadcast %20 : vector<1x8x8xf32> to vector<6x8x8xf32>
    %22 = arith.subf %6, %21 : vector<6x8x8xf32>
    %23 = vector.shape_cast %7 : vector<8x8xf32> to vector<1x8x8xf32>
    %24 = vector.broadcast %23 : vector<1x8x8xf32> to vector<6x8x8xf32>
    %25 = arith.subf %4, %24 : vector<6x8x8xf32>
    %26 = arith.subf %22, %25 : vector<6x8x8xf32>
    %27 = arith.mulf %18, %26 : vector<6x8x8xf32>
    %cst_11 = arith.constant dense<0.000000e+00> : vector<8x8xf32>
    %28 = vector.multi_reduction <add>, %27, %cst_11 [0] : vector<6x8x8xf32> to vector<8x8xf32>
    %29 = arith.divf %28, %19 : vector<8x8xf32>
    %30 = math.log %19 : vector<8x8xf32>
    %31 = arith.subf %13, %30 : vector<8x8xf32>
    %32 = arith.addf %29, %31 : vector<8x8xf32>
    %c0_12 = arith.constant 0 : index
    %c0_13 = arith.constant 0 : index
    %33 = vector.load %arg5[%c0_12, %c0_13] : memref<8x8xf32, #tpu.memory_space<vmem>>, vector<8x8xf32>
    %34 = arith.addf %33, %32 : vector<8x8xf32>
    %c0_14 = arith.constant 0 : index
    %c0_15 = arith.constant 0 : index
    %35 = vector.load %arg5[%c0_14, %c0_15] : memref<8x8xf32, #tpu.memory_space<vmem>>, vector<8x8xf32>
    tpu.vector_store %arg5[%c0_14, %c0_15], %34 {strides = array<i32>} : memref<8x8xf32, #tpu.memory_space<vmem>>, vector<8x8xf32>,
    %c0_i32_16 = arith.constant 0 : i32
    %36 = arith.cmpi eq, %arg1, %c0_i32_16 : i32
    %37 = arith.extui %36 : i1 to i32
    %c0_i32_17 = arith.constant 0 : i32
    %38 = arith.cmpi ne, %37, %c0_i32_17 : i32
    scf.if %38 {
      %c0_18 = arith.constant 0 : index
      %c0_19 = arith.constant 0 : index
      %39 = vector.load %arg5[%c0_18, %c0_19] : memref<8x8xf32, #tpu.memory_space<vmem>>, vector<8x8xf32>
      %40 = vector.shape_cast %39 : vector<8x8xf32> to vector<1x8x8xf32>
      %cst_20 = arith.constant dense<0.000000e+00> : vector<1xf32>
      %41 = vector.multi_reduction <add>, %40, %cst_20 [1, 2] : vector<1x8x8xf32> to vector<1xf32>
      %42 = vector.shape_cast %41 : vector<1xf32> to vector<1x1x1xf32>
      %43 = vector.extract %42[0, 0, 0] : f32 from vector<1x1x1xf32>
      %44 = vector.broadcast %43 : f32 to vector<1x1x1xf32>
      %c0_21 = arith.constant 0 : index
      %c0_22 = arith.constant 0 : index
      %c0_23 = arith.constant 0 : index
      %45 = vector.load %arg4[%c0_21, %c0_22, %c0_23] : memref<1x1x1xf32, #tpu.memory_space<vmem>>, vector<1x1x1xf32>
      tpu.vector_store %arg4[%c0_21, %c0_22, %c0_23], %44 {strides = array<i32>} : memref<1x1x1xf32, #tpu.memory_space<vmem>>, vector<1x1x1xf32>,
    } else {
    }
    return
  }
  func.func @transform_0(%arg0: i32, %arg1: i32) -> (i32, i32, i32, i32) {
    %c0_i32 = arith.constant 0 : i32
    %c0_i32_0 = arith.constant 0 : i32
    %c0_i32_1 = arith.constant 0 : i32
    return %arg0, %c0_i32, %c0_i32_0, %arg1 : i32, i32, i32, i32
  }
  func.func @transform_1(%arg0: i32, %arg1: i32) -> (i32, i32, i32, i32) {
    %c0_i32 = arith.constant 0 : i32
    %c0_i32_0 = arith.constant 0 : i32
    %c0_i32_1 = arith.constant 0 : i32
    return %arg0, %c0_i32, %c0_i32_0, %arg1 : i32, i32, i32, i32
  }
  func.func @transform_2(%arg0: i32, %arg1: i32) -> (i32, i32, i32) {
    %c0_i32 = arith.constant 0 : i32
    %c0_i32_0 = arith.constant 0 : i32
    %c0_i32_1 = arith.constant 0 : i32
    return %arg0, %c0_i32, %c0_i32_0 : i32, i32, i32
  }
}

</mosaic_0001>

<llo_original>
// kernel: _lambda_.12
$region0: #{_lambda_.12}
  #allocation0 [shape = 'u32[]', space=smem, size = 0x4, offset = 0x4, fixed_abs, tag = 'smem constant byte address 0x4 - core index']
  #allocation1 [shape = 'u32[72,128]{1,0:T(1,128)}', space=vmem, size = 0x9000, scoped, tag = 'internal scratch']
  #allocation2 [shape = 'f32[1,128]{1,0:T(1,128)}', space=vmem, size = 0x200, scoped, tag = 'scratch operand']
  %s0 = inlined_call_operand.vmem [shape: f32[1,128], index: 0, kind: input, shape index: {}]
  %s1 = inlined_call_operand.vmem [shape: f32[1,128], index: 1, kind: input, shape index: {}]
  %s2 = inlined_call_operand.hbm [shape: f32[1,1], index: 2, kind: output, shape index: {}]
  %s3 = sld [smem:[#allocation0]]
  $region26: #{_lambda_.12} parent=0
    _
  %s5 = ssub.s32 1, %s3
  %s6 = scalar_select 0, %s5, %s3
  $region1: #{_lambda_.12} parent=0
    #allocation3 [shape = 'u8[512]{0}', space=vmem, size = 0x400, scoped, tag = 'output window, operand 0, single buffered']
    #allocation4 [shape = 's32[1]{0}', space=sflag, size = 0x4, scoped, tag = 'scoped memory for _lambda_.12']
    %7 = vsyncpa [#allocation4], 0
    // Predicated region
    $region2: #{_lambda_.12} parent=1 // pred_check
      _
    $region3: #{_lambda_.12} parent=1 // pred_check_branch
      %9 = sbr.rel (0) target = $region5
    $region4: #{_lambda_.12} parent=1 // pred_region
      _
    $region5: #{_lambda_.12} parent=1 // pred_fallthru
      _
    // Predicated region
    $region6: #{_lambda_.12} parent=1 // pred_check
      _
    $region7: #{_lambda_.12} parent=1 // pred_check_branch
      %11 = sbr.rel (0) target = $region9
    $region8: #{_lambda_.12} parent=1 // pred_region
      _
    $region9: #{_lambda_.12} parent=1 // pred_fallthru
      _
    %p12 = scmp.eq.s32.totalorder 0, 0
    // Predicated region
    $region10: #{_lambda_.12} parent=1 // pred_check
      %p13 = pneg %p12
    $region11: #{_lambda_.12} parent=1 // pred_check_branch
      %15 = sbr.rel (%p13) target = $region13
    $region12: #{_lambda_.12} parent=1 // pred_region
      %16 = vst [vmem:[#allocation2] sm:$0x1] 0.0
    $region13: #{_lambda_.12} parent=1 // pred_fallthru
      _
    %v17 = vld [vmem:[%s0] sm:$0x1]
    %v18 = vld [vmem:[%s1] sm:$0x1]
    %v19 = vadd.f32 %v18, 1.0
    %v20 = vmul.f32 %v17, %v17
    %v21 = vsub.f32 %v19, %v20
    %v22 = vmul.f32 %v18, 1.442695
    %v23 = vpow.pop %v22
    %v24 = vsub.f32 %v21, %v23
    %v25 = vld [vmem:[#allocation2] sm:$0x1]
    %v26 = vadd.f32 %v25, %v24
    %27 = vst [vmem:[#allocation2] sm:$0x1] %v26
    // Predicated region
    $region14: #{_lambda_.12} parent=1 // pred_check
      %p28 = pneg %p12
    $region15: #{_lambda_.12} parent=1 // pred_check_branch
      %30 = sbr.rel (%p28) target = $region17
    $region16: #{_lambda_.12} parent=1 // pred_region
      %v31 = vld [vmem:[#allocation2] sm:$0x1]
      %vm32 = vcmask 1040384
      %v33 = vsel %vm32, %v31, 0.0
      %34 = vadd.xlane.f32.xlu0 %v33
      %v35 = vpop.xlane.xlu0 %34
      %v36 = vrot.slane %v35, 4
      %v37 = vadd.f32 %v35, %v36
      %v38 = vrot.slane %v37, 2
      %v39 = vadd.f32 %v37, %v38
      %v40 = vrot.slane %v39, 1
      %v41 = vadd.f32 %v39, %v40
      %s42 = vtos %v41
      %s43 = smul.f32 %s42, -0.5
      %v44 = vstv %s43
      %vm45 = vcmask 0
      %46 = vst.msk [vmem:[#allocation3] sm:$0x1] %vm45, %v44
    $region17: #{_lambda_.12} parent=1 // pred_fallthru
      _
    // Predicated region
    $region18: #{_lambda_.12} parent=1 // pred_check
      _
    $region19: #{_lambda_.12} parent=1 // pred_check_branch
      %48 = sbr.rel (0) target = $region21
    $region20: #{_lambda_.12} parent=1 // pred_region
      %50 = vsyncadd [#allocation4], 0
      %s52 = sshll.u32 [#allocation3], 4
      %s53 = int_to_ptr.vmem [resolvable:$true] %s52
      %s54 = sshll.u32 %s2, 4
      %s55 = int_to_ptr.hbm [resolvable:$true] %s54
      %57 = dma.vmem_to_hbm [thread:$0]  %s53, 16, %s55, [#allocation4]
    $region21: #{_lambda_.12} parent=1 // pred_fallthru
      _
    // Predicated region
    $region22: #{_lambda_.12} parent=1 // pred_check
      _
    $region23: #{_lambda_.12} parent=1 // pred_check_branch
      %59 = sbr.rel (0) target = $region25
    $region24: #{_lambda_.12} parent=1 // pred_region
      %61 = dma.done [#allocation4], 16
    $region25: #{_lambda_.12} parent=1 // pred_fallthru
      _
    %62 = vsyncpa [#allocation4], 1

// kernel: _lambda_.9
$region0: #{_lambda_.9}
  #allocation0 [shape = 'u32[]', space=smem, size = 0x4, offset = 0x4, fixed_abs, tag = 'smem constant byte address 0x4 - core index']
  #allocation1 [shape = 'u32[72,128]{1,0:T(1,128)}', space=vmem, size = 0x9000, scoped, tag = 'internal scratch']
  #allocation2 [shape = 'f32[8,8]{1,0:T(8,128)}', space=vmem, size = 0x1000, scoped, tag = 'scratch operand']
  #allocation3 [shape = 'f32[8,8]{1,0:T(8,128)}', space=vmem, size = 0x1000, scoped, tag = 'scratch operand']
  %s0 = inlined_call_operand.hbm [shape: f32[2,6,8,8], index: 0, kind: input, shape index: {}]
  %s1 = inlined_call_operand.vmem [shape: s32[2,8,8], index: 1, kind: input, shape index: {}]
  %s2 = inlined_call_operand.vmem [shape: f32[2,1,1], index: 2, kind: output, shape index: {0}]
  %s3 = inlined_call_operand.vmem [shape: f32[2,1,1], index: 3, kind: output, shape index: {1}]
  %4 = xla_tuple %s2, %s3
  %s5 = sld [smem:[#allocation0]]
  $region61: #{_lambda_.9} parent=0
    _
  %s7 = ssub.s32 1, %s5
  %s8 = scalar_select 0, %s7, %s5
  $region1: #{_lambda_.9} parent=0
    #allocation4 [shape = 'u8[49152]{0}', space=vmem, size = 0xc000, scoped, tag = 'input window, operand 0']
    #allocation5 [shape = 's32[2]{0}', space=sflag, size = 0x8, scoped, tag = 'scoped memory for _lambda_.9']
    %9 = vsyncpa [#allocation5], 0
    %s10 = scalar_lea.sflag [#allocation5], 1
    %11 = vsyncpa %s10, 0
    loop: start=0, step=1, limit=4
    $region2: #{_lambda_.9} parent=1 // loop_pre_header
      _
    $region3: #{_lambda_.9} parent=1 // loop_header
      %s13 = sphi 0, %s17
      %p14 = scmp.ge.s32.totalorder %s13, 4
      %s20 = sphi 0, %s32
      %s21 = sphi 0, %s28
      %s22 = sphi 0, %s20
      %s23 = sphi 0, %s21
      %s24 = sphi 0, %s22
      %s25 = sphi 0, %s23
      %s37 = sphi 0, %s39
      %s40 = sphi 0, %s37
      %s41 = sphi 0, %s40
      %s57 = sphi 0, %s41
      %s65 = sphi 0, %s67
      %s68 = sphi 0, %s65
      %s69 = sphi 0, %s68
      %s85 = sphi 0, %s69
      %s91 = sphi 0, %s93
      %s94 = sphi 0, %s91
      %s95 = sphi 0, %s94
      %s111 = sphi 0, %s95
      %s117 = sphi 0, %s119
      %s120 = sphi 0, %s117
      %s121 = sphi 0, %s120
      %s137 = sphi 0, %s121
    $region4: #{_lambda_.9} parent=1 // loop_header_branch
      %16 = sbr.rel (%p14) target = $region8
    $region5: #{_lambda_.9} parent=1 // loop_body
      %s18 = ssub.s32 %s13, 1
      %s19 = ssub.s32 %s13, 2
      %s26 = sadd.s32 1, %s21
      %p27 = scmp.ge.s32.totalorder %s26, 1
      %s28 = scalar_select %p27, 0, %s26
      %s29 = sadd.s32 1, %s20
      %s30 = scalar_select %p27, %s29, %s20
      %p31 = scmp.ge.s32.totalorder %s30, 2
      %s32 = scalar_select %p31, 0, %s30
      %s33 = ssub.s32 %s20, %s32
      %s34 = ssub.s32 %s21, %s28
      %s35 = sor.u32 %s33, %s34
      %p36 = scmp.eq.s32.totalorder %s35, 0
      %s38 = sadd.s32 %s37, 1
      %s39 = scalar_select %p36, %s37, %s38
      %p42 = pneg %p36
      %p43 = scmp.eq.s32.totalorder %s13, 1
      %p44 = por %p42, %p43
      %p45 = scmp.ne.s32.totalorder %s37, %s40
      %p46 = scmp.eq.s32.totalorder %s13, 0
      %p47 = por %p45, %p46
      %p48 = scmp.ne.s32.totalorder %s37, %s40
      %p49 = scmp.eq.s32.totalorder %s18, 1
      %p50 = por %p48, %p49
      %p51 = scmp.ne.s32.totalorder %s40, %s41
      %p52 = scmp.eq.s32.totalorder %s18, 0
      %p53 = por %p51, %p52
      %p54 = scmp.ne.s32.totalorder %s40, %s41
      %p55 = scmp.eq.s32.totalorder %s19, 1
      %p56 = por %p54, %p55
      %p58 = scmp.ne.s32.totalorder %s41, %s57
      %p59 = scmp.eq.s32.totalorder %s19, 0
      %p60 = por %p58, %p59
      %s61 = ssub.s32 %s20, %s32
      %s62 = ssub.s32 %s21, %s28
      %s63 = sor.u32 %s61, %s62
      %p64 = scmp.eq.s32.totalorder %s63, 0
      %s66 = sadd.s32 %s65, 1
      %s67 = scalar_select %p64, %s65, %s66
      %p70 = pneg %p64
      %p71 = scmp.eq.s32.totalorder %s13, 1
      %p72 = por %p70, %p71
      %p73 = scmp.ne.s32.totalorder %s65, %s68
      %p74 = scmp.eq.s32.totalorder %s13, 0
      %p75 = por %p73, %p74
      %p76 = scmp.ne.s32.totalorder %s65, %s68
      %p77 = scmp.eq.s32.totalorder %s18, 1
      %p78 = por %p76, %p77
      %p79 = scmp.ne.s32.totalorder %s68, %s69
      %p80 = scmp.eq.s32.totalorder %s18, 0
      %p81 = por %p79, %p80
      %p82 = scmp.ne.s32.totalorder %s68, %s69
      %p83 = scmp.eq.s32.totalorder %s19, 1
      %p84 = por %p82, %p83
      %p86 = scmp.ne.s32.totalorder %s69, %s85
      %p87 = scmp.eq.s32.totalorder %s19, 0
      %p88 = por %p86, %p87
      %s89 = ssub.s32 %s20, %s32
      %p90 = scmp.eq.s32.totalorder %s89, 0
      %s92 = sadd.s32 %s91, 1
      %s93 = scalar_select %p90, %s91, %s92
      %p96 = pneg %p90
      %p97 = scmp.eq.s32.totalorder %s13, 1
      %p98 = por %p96, %p97
      %p99 = scmp.ne.s32.totalorder %s91, %s94
      %p100 = scmp.eq.s32.totalorder %s13, 0
      %p101 = por %p99, %p100
      %p102 = scmp.ne.s32.totalorder %s91, %s94
      %p103 = scmp.eq.s32.totalorder %s18, 1
      %p104 = por %p102, %p103
      %p105 = scmp.ne.s32.totalorder %s94, %s95
      %p106 = scmp.eq.s32.totalorder %s18, 0
      %p107 = por %p105, %p106
      %p108 = scmp.ne.s32.totalorder %s94, %s95
      %p109 = scmp.eq.s32.totalorder %s19, 1
      %p110 = por %p108, %p109
      %p112 = scmp.ne.s32.totalorder %s95, %s111
      %p113 = scmp.eq.s32.totalorder %s19, 0
      %p114 = por %p112, %p113
      %s115 = ssub.s32 %s20, %s32
      %p116 = scmp.eq.s32.totalorder %s115, 0
      %s118 = sadd.s32 %s117, 1
      %s119 = scalar_select %p116, %s117, %s118
      %p122 = pneg %p116
      %p123 = scmp.eq.s32.totalorder %s13, 1
      %p124 = por %p122, %p123
      %p125 = scmp.ne.s32.totalorder %s117, %s120
      %p126 = scmp.eq.s32.totalorder %s13, 0
      %p127 = por %p125, %p126
      %p128 = scmp.ne.s32.totalorder %s117, %s120
      %p129 = scmp.eq.s32.totalorder %s18, 1
      %p130 = por %p128, %p129
      %p131 = scmp.ne.s32.totalorder %s120, %s121
      %p132 = scmp.eq.s32.totalorder %s18, 0
      %p133 = por %p131, %p132
      %p134 = scmp.ne.s32.totalorder %s120, %s121
      %p135 = scmp.eq.s32.totalorder %s19, 1
      %p136 = por %p134, %p135
      %p138 = scmp.ne.s32.totalorder %s121, %s137
      %p139 = scmp.eq.s32.totalorder %s19, 0
      %p140 = por %p138, %p139
      %p141 = scmp.le.s32.totalorder 1, %s13
      %p142 = scmp.lt.s32.totalorder %s13, 3
      %p143 = pnand %p141, %p142
      %p144 = pneg %p143
      // Predicated region
      $region9: #{_lambda_.9} parent=5 // pred_check
        _
      $region10: #{_lambda_.9} parent=5 // pred_check_branch
        %146 = sbr.rel (%p143) target = $region12
      $region11: #{_lambda_.9} parent=5 // pred_region
        %s147 = ssub.s32 %s13, 1
      $region12: #{_lambda_.9} parent=5 // pred_fallthru
        _
      %p148 = scmp.lt.s32.totalorder %s13, 2
      // Predicated region
      $region13: #{_lambda_.9} parent=5 // pred_check
        %p149 = pneg %p148
      $region14: #{_lambda_.9} parent=5 // pred_check_branch
        %151 = sbr.rel (%p149) target = $region16
      $region15: #{_lambda_.9} parent=5 // pred_region
        // Predicated region
        $region17: #{_lambda_.9} parent=15 // pred_check
          %p152 = pneg %p47
        $region18: #{_lambda_.9} parent=15 // pred_check_branch
          %154 = sbr.rel (%p152) target = $region20
        $region19: #{_lambda_.9} parent=15 // pred_region
          %s155 = sand.u32 %s37, 1
          %s156 = scalar_lea.sflag [#allocation5], %s155
          %s157 = sand.u32 %s37, 1
          %s158 = smul.addr %s157, 48
          %s159 = scalar_lea.vmem [#allocation4], %s158
          %161 = vsyncadd %s156, 0
          %s162 = smul.addr %s20, 6
          %s163 = sadd.s32 %s21, %s162
          %s164 = smul.addr %s163, 8
          %s165 = scalar_lea.hbm %s0, %s164
          %s166 = sshll.u32 %s165, 4
          %s167 = int_to_ptr.hbm [resolvable:$true] %s166
          %s168 = sshll.u32 %s159, 4
          %s169 = int_to_ptr.vmem [resolvable:$true] %s168
          %174 = dma.hbm_to_vmem [thread:$0]  %s167, 768, %s169, %s156, 128, 128, 8
        $region20: #{_lambda_.9} parent=15 // pred_fallthru
          _
        // Predicated region
        $region21: #{_lambda_.9} parent=15 // pred_check
          %p175 = pneg %p75
        $region22: #{_lambda_.9} parent=15 // pred_check_branch
          %177 = sbr.rel (%p175) target = $region24
        $region23: #{_lambda_.9} parent=15 // pred_region
          %p178 = scmp.lt.s32.totalorder %s20, 1
          %s179 = scalar_select %p178, %s20, 1
          %p180 = scmp.lt.s32.totalorder %s21, 0
          %s181 = scalar_select %p180, %s21, 0
          %s182 = sadd.s32 %s181, %s179
          %s183 = smul.addr %s182, 8
          %s184 = scalar_lea.vmem %s1, %s183
        $region24: #{_lambda_.9} parent=15 // pred_fallthru
          _
      $region16: #{_lambda_.9} parent=5 // pred_fallthru
        _
      %p185 = scmp.le.s32.totalorder 1, %s13
      %p186 = scmp.lt.s32.totalorder %s13, 3
      %p187 = pnand %p185, %p186
      %p188 = pneg %p187
      // Predicated region
      $region25: #{_lambda_.9} parent=5 // pred_check
        _
      $region26: #{_lambda_.9} parent=5 // pred_check_branch
        %190 = sbr.rel (%p187) target = $region28
      $region27: #{_lambda_.9} parent=5 // pred_region
        %s191 = ssub.s32 %s13, 1
        %s192 = sand.u32 %s40, 1
        %s193 = scalar_lea.sflag [#allocation5], %s192
        %s194 = sand.u32 %s40, 1
        %s195 = smul.addr %s194, 48
        %s196 = scalar_lea.vmem [#allocation4], %s195
        // Predicated region
        $region29: #{_lambda_.9} parent=27 // pred_check
          %p197 = pneg %p53
        $region30: #{_lambda_.9} parent=27 // pred_check_branch
          %199 = sbr.rel (%p197) target = $region32
        $region31: #{_lambda_.9} parent=27 // pred_region
          %201 = dma.done %s193, 768
        $region32: #{_lambda_.9} parent=27 // pred_fallthru
          _
        %s202 = sand.u32 %s40, 1
        %s203 = scalar_lea.sflag [#allocation5], %s202
        %s204 = sand.u32 %s40, 1
        %s205 = smul.addr %s204, 48
        %s206 = scalar_lea.vmem [#allocation4], %s205
        %p207 = pneg %p53
        %p208 = pneg %p50
        %p209 = scmp.lt.s32.totalorder %s22, 1
        %s210 = scalar_select %p209, %s22, 1
        %p211 = scmp.lt.s32.totalorder %s23, 0
        %s212 = scalar_select %p211, %s23, 0
        %s213 = sadd.s32 %s212, %s210
        %s214 = smul.addr %s213, 8
        %s215 = scalar_lea.vmem %s1, %s214
        %p216 = pneg %p81
        %p217 = pneg %p78
        %p218 = pneg %p107
        %p219 = pneg %p104
        %p220 = scmp.lt.s32.totalorder %s22, 1
        %s221 = scalar_select %p220, %s22, 1
        %s222 = scalar_lea.vmem %s2, %s221
        %p223 = pneg %p133
        %p224 = pneg %p130
        %p225 = scmp.lt.s32.totalorder %s22, 1
        %s226 = scalar_select %p225, %s22, 1
        %s227 = scalar_lea.vmem %s3, %s226
        %p228 = scmp.lt.s32.totalorder %s22, 1
        %s229 = scalar_select %p228, %s22, 1
        %p230 = scmp.lt.s32.totalorder %s23, 0
        %s231 = scalar_select %p230, %s23, 0
        %s232 = sadd.s32 %s231, %s229
        %s233 = smul.addr %s232, 8
        %s234 = scalar_lea.vmem %s1, %s233
        %p235 = scmp.lt.s32.totalorder %s22, 1
        %s236 = scalar_select %p235, %s22, 1
        %s237 = scalar_lea.vmem %s2, %s236
        %p238 = scmp.lt.s32.totalorder %s22, 1
        %s239 = scalar_select %p238, %s22, 1
        %s240 = scalar_lea.vmem %s3, %s239
        %p241 = scmp.eq.s32.totalorder %s23, 0
        // Predicated region
        $region33: #{_lambda_.9} parent=27 // pred_check
          %p242 = pneg %p241
        $region34: #{_lambda_.9} parent=27 // pred_check_branch
          %244 = sbr.rel (%p242) target = $region36
        $region35: #{_lambda_.9} parent=27 // pred_region
          %vm245 = vcmask 64512
          %246 = vst.msk [vmem:[#allocation2] sm:$0xff] %vm245, 0.0
          %247 = vst.msk [vmem:[#allocation3] sm:$0xff] %vm245, 0.0
        $region36: #{_lambda_.9} parent=27 // pred_fallthru
          _
        %v248 = vld [vmem:[%s196] sm:$0xff]
        %v249 = vld [vmem:[%s196 + $0x8] sm:$0xff]
        %v250 = vld [vmem:[%s196 + $0x10] sm:$0xff]
        %v251 = vld [vmem:[%s196 + $0x18] sm:$0xff]
        %v252 = vld [vmem:[%s196 + $0x20] sm:$0xff]
        %v253 = vld [vmem:[%s196 + $0x28] sm:$0xff]
        %v254 = vld [vmem:[%s234] sm:$0xff]
        %vm255 = vcmask 64512
        %v256 = vsel %vm255, %v248, -inf
        %v257 = vsel %vm255, %v249, -inf
        %v258 = vsel %vm255, %v250, -inf
        %v259 = vsel %vm255, %v251, -inf
        %v260 = vsel %vm255, %v252, -inf
        %v261 = vmax.f32 %v256, %v260
        %v262 = vsel %vm255, %v253, -inf
        %v263 = vmax.f32 %v257, %v262
        %v264 = vmax.f32 %v261, %v263
        %v265 = vmax.f32 %v258, %v259
        %v266 = vmax.f32 %v264, %v265
        %v267 = vsub.f32 %v248, %v266
        %v268 = vsub.f32 %v249, %v266
        %v269 = vsub.f32 %v250, %v266
        %v270 = vsub.f32 %v251, %v266
        %v271 = vsub.f32 %v252, %v266
        %v272 = vsub.f32 %v253, %v266
        %v273 = vmul.f32 %v267, 1.442695
        %v274 = vpow.pop %v273
        %v275 = vmul.f32 %v268, 1.442695
        %v276 = vpow.pop %v275
        %v277 = vmul.f32 %v269, 1.442695
        %v278 = vpow.pop %v277
        %v279 = vmul.f32 %v270, 1.442695
        %v280 = vpow.pop %v279
        %v281 = vmul.f32 %v271, 1.442695
        %v282 = vpow.pop %v281
        %v283 = vmul.f32 %v272, 1.442695
        %v284 = vpow.pop %v283
        %v285 = vsel %vm255, %v274, 0.0
        %v286 = vsel %vm255, %v276, 0.0
        %v287 = vadd.f32 %v285, %v286
        %v288 = vsel %vm255, %v278, 0.0
        %v289 = vadd.f32 %v287, %v288
        %v290 = vsel %vm255, %v280, 0.0
        %v291 = vadd.f32 %v289, %v290
        %v292 = vsel %vm255, %v282, 0.0
        %v293 = vadd.f32 %v291, %v292
        %v294 = vsel %vm255, %v284, 0.0
        %v295 = vadd.f32 %v293, %v294
        %v296 = vlog2.pop %v295
        %v297 = vmul.f32 %v296, 0.6931472
        %v298 = vadd.f32 %v266, %v297
        %vm299 = vcmp.eq.s32.totalorder %v254, 0
        %vm300 = vcmp.eq.s32.totalorder %v254, 1
        %vm301 = vcmp.eq.s32.totalorder %v254, 2
        %vm302 = vcmp.eq.s32.totalorder %v254, 3
        %vm303 = vcmp.eq.s32.totalorder %v254, 4
        %vm304 = vcmp.eq.s32.totalorder %v254, 5
        %v305 = vsel %vm299, %v248, 0.0
        %v306 = vsel %vm300, %v249, 0.0
        %v307 = vsel %vm301, %v250, 0.0
        %v308 = vsel %vm302, %v251, 0.0
        %v309 = vsel %vm303, %v252, 0.0
        %v310 = vsel %vm304, %v253, 0.0
        %v311 = vsel %vm255, %v305, 0.0
        %v312 = vsel %vm255, %v306, 0.0
        %v313 = vadd.f32 %v311, %v312
        %v314 = vsel %vm255, %v307, 0.0
        %v315 = vadd.f32 %v313, %v314
        %v316 = vsel %vm255, %v308, 0.0
        %v317 = vadd.f32 %v315, %v316
        %v318 = vsel %vm255, %v309, 0.0
        %v319 = vadd.f32 %v317, %v318
        %v320 = vsel %vm255, %v310, 0.0
        %v321 = vadd.f32 %v319, %v320
        %vm322 = vcmp.ne.s32.totalorder %v254, 6
        %v323 = vld [vmem:[#allocation2] sm:$0xff]
        %v324 = vsub.f32 %v298, %v321
        %v325 = vsel %vm322, %v324, 0.0
        %v326 = vadd.f32 %v323, %v325
        %327 = vst.msk [vmem:[#allocation2] sm:$0xff] %vm255, %v326
        %v328 = vld [vmem:[#allocation3] sm:$0xff]
        %v329 = vsel %vm322, 1, 0
        %v330 = vcvt.s32.f32 %v329
        %v331 = vadd.f32 %v328, %v330
        %332 = vst.msk [vmem:[#allocation3] sm:$0xff] %vm255, %v331
        // Predicated region
        $region37: #{_lambda_.9} parent=27 // pred_check
          %p333 = pneg %p241
        $region38: #{_lambda_.9} parent=27 // pred_check_branch
          %335 = sbr.rel (%p333) target = $region40
        $region39: #{_lambda_.9} parent=27 // pred_region
          %v336 = vld [vmem:[#allocation2] sm:$0xff]
          %v337 = vsel %vm255, %v336, 0.0
          %338 = vadd.xlane.f32.xlu0 %v337
          %v339 = vpop.xlane.xlu0 %338
          %v340 = vrot.slane %v339, 4
          %v341 = vadd.f32 %v339, %v340
          %v342 = vrot.slane %v341, 2
          %v343 = vadd.f32 %v341, %v342
          %v344 = vrot.slane %v343, 1
          %v345 = vadd.f32 %v343, %v344
          %s346 = vtos %v345
          %v347 = vstv %s346
          %vm348 = vcmask 0
          %349 = vst.msk [vmem:[%s237] sm:$0x1] %vm348, %v347
          %v350 = vld [vmem:[#allocation3] sm:$0xff]
          %v351 = vsel %vm255, %v350, 0.0
          %352 = vadd.xlane.f32.xlu0 %v351
          %v353 = vpop.xlane.xlu0 %352
          %v354 = vrot.slane %v353, 4
          %v355 = vadd.f32 %v353, %v354
          %v356 = vrot.slane %v355, 2
          %v357 = vadd.f32 %v355, %v356
          %v358 = vrot.slane %v357, 1
          %v359 = vadd.f32 %v357, %v358
          %s360 = vtos %v359
          %v361 = vstv %s360
          %362 = vst.msk [vmem:[%s240] sm:$0x1] %vm348, %v361
        $region40: #{_lambda_.9} parent=27 // pred_fallthru
          _
        %p363 = scmp.lt.s32.totalorder %s22, 1
        %s364 = scalar_select %p363, %s22, 1
        %s365 = scalar_lea.vmem %s2, %s364
        %p366 = scmp.lt.s32.totalorder %s22, 1
        %s367 = scalar_select %p366, %s22, 1
        %s368 = scalar_lea.vmem %s3, %s367
        // Predicated region
        $region41: #{_lambda_.9} parent=27 // pred_check
          %p369 = pneg %p104
        $region42: #{_lambda_.9} parent=27 // pred_check_branch
          %371 = sbr.rel (%p369) target = $region44
        $region43: #{_lambda_.9} parent=27 // pred_region
          _
        $region44: #{_lambda_.9} parent=27 // pred_fallthru
          _
        // Predicated region
        $region45: #{_lambda_.9} parent=27 // pred_check
          %p372 = pneg %p130
        $region46: #{_lambda_.9} parent=27 // pred_check_branch
          %374 = sbr.rel (%p372) target = $region48
        $region47: #{_lambda_.9} parent=27 // pred_region
          _
        $region48: #{_lambda_.9} parent=27 // pred_fallthru
          _
      $region28: #{_lambda_.9} parent=5 // pred_fallthru
        _
      %p375 = scmp.le.s32.totalorder 2, %s13
      // Predicated region
      $region49: #{_lambda_.9} parent=5 // pred_check
        %p376 = pneg %p375
      $region50: #{_lambda_.9} parent=5 // pred_check_branch
        %378 = sbr.rel (%p376) target = $region52
      $region51: #{_lambda_.9} parent=5 // pred_region
        %s379 = ssub.s32 %s13, 2
        // Predicated region
        $region53: #{_lambda_.9} parent=51 // pred_check
          %p380 = pneg %p110
        $region54: #{_lambda_.9} parent=51 // pred_check_branch
          %382 = sbr.rel (%p380) target = $region56
        $region55: #{_lambda_.9} parent=51 // pred_region
          %p383 = scmp.lt.s32.totalorder %s24, 1
          %s384 = scalar_select %p383, %s24, 1
          %s385 = scalar_lea.vmem %s2, %s384
        $region56: #{_lambda_.9} parent=51 // pred_fallthru
          _
        // Predicated region
        $region57: #{_lambda_.9} parent=51 // pred_check
          %p386 = pneg %p136
        $region58: #{_lambda_.9} parent=51 // pred_check_branch
          %388 = sbr.rel (%p386) target = $region60
        $region59: #{_lambda_.9} parent=51 // pred_region
          %p389 = scmp.lt.s32.totalorder %s24, 1
          %s390 = scalar_select %p389, %s24, 1
          %s391 = scalar_lea.vmem %s3, %s390
        $region60: #{_lambda_.9} parent=51 // pred_fallthru
          _
      $region52: #{_lambda_.9} parent=5 // pred_fallthru
        _
    $region6: #{_lambda_.9} parent=1 // loop_footer
      %s17 = sadd.s32 1, %s13
    $region7: #{_lambda_.9} parent=1 // loop_footer_branch
      %12 = sbr.rel target = $region3
    $region8: #{_lambda_.9} parent=1 // loop_exit
      _
    %392 = vsyncpa [#allocation5], 1
    %s393 = scalar_lea.sflag [#allocation5], 1
    %394 = vsyncpa %s393, 1

// kernel: _lambda_.8
$region0: #{_lambda_.8}
  #allocation0 [shape = 'u32[]', space=smem, size = 0x4, offset = 0x4, fixed_abs, tag = 'smem constant byte address 0x4 - core index']
  #allocation1 [shape = 'u32[72,128]{1,0:T(1,128)}', space=vmem, size = 0x9000, scoped, tag = 'internal scratch']
  #allocation2 [shape = 'f32[8,32]{1,0:T(8,128)}', space=vmem, size = 0x1000, scoped, tag = 'scratch operand']
  #allocation3 [shape = 'f32[8,32]{1,0:T(8,128)}', space=vmem, size = 0x1000, scoped, tag = 'scratch operand']
  %s0 = inlined_call_operand.vmem [shape: f32[2,6,8,32], index: 0, kind: input, shape index: {}]
  %s1 = inlined_call_operand.vmem [shape: s32[2,8,32], index: 1, kind: input, shape index: {}]
  %s2 = inlined_call_operand.vmem [shape: f32[2,1,1], index: 2, kind: output, shape index: {0}]
  %s3 = inlined_call_operand.vmem [shape: f32[2,1,1], index: 3, kind: output, shape index: {1}]
  %4 = xla_tuple %s2, %s3
  %s5 = sld [smem:[#allocation0]]
  $region57: #{_lambda_.8} parent=0
    _
  %s7 = ssub.s32 1, %s5
  %s8 = scalar_select 0, %s7, %s5
  loop: start=0, step=1, limit=4
  $region2: #{_lambda_.8} parent=0 // loop_pre_header
    _
  $region3: #{_lambda_.8} parent=0 // loop_header
    %s10 = sphi 0, %s14
    %p11 = scmp.ge.s32.totalorder %s10, 4
    %s17 = sphi 0, %s29
    %s18 = sphi 0, %s25
    %s19 = sphi 0, %s17
    %s20 = sphi 0, %s18
    %s21 = sphi 0, %s19
    %s22 = sphi 0, %s20
    %s34 = sphi 0, %s36
    %s37 = sphi 0, %s34
    %s38 = sphi 0, %s37
    %s54 = sphi 0, %s38
    %s62 = sphi 0, %s64
    %s65 = sphi 0, %s62
    %s66 = sphi 0, %s65
    %s82 = sphi 0, %s66
    %s88 = sphi 0, %s90
    %s91 = sphi 0, %s88
    %s92 = sphi 0, %s91
    %s108 = sphi 0, %s92
    %s114 = sphi 0, %s116
    %s117 = sphi 0, %s114
    %s118 = sphi 0, %s117
    %s134 = sphi 0, %s118
  $region4: #{_lambda_.8} parent=0 // loop_header_branch
    %13 = sbr.rel (%p11) target = $region8
  $region5: #{_lambda_.8} parent=0 // loop_body
    %s15 = ssub.s32 %s10, 1
    %s16 = ssub.s32 %s10, 2
    %s23 = sadd.s32 1, %s18
    %p24 = scmp.ge.s32.totalorder %s23, 1
    %s25 = scalar_select %p24, 0, %s23
    %s26 = sadd.s32 1, %s17
    %s27 = scalar_select %p24, %s26, %s17
    %p28 = scmp.ge.s32.totalorder %s27, 2
    %s29 = scalar_select %p28, 0, %s27
    %s30 = ssub.s32 %s17, %s29
    %s31 = ssub.s32 %s18, %s25
    %s32 = sor.u32 %s30, %s31
    %p33 = scmp.eq.s32.totalorder %s32, 0
    %s35 = sadd.s32 %s34, 1
    %s36 = scalar_select %p33, %s34, %s35
    %p39 = pneg %p33
    %p40 = scmp.eq.s32.totalorder %s10, 1
    %p41 = por %p39, %p40
    %p42 = scmp.ne.s32.totalorder %s34, %s37
    %p43 = scmp.eq.s32.totalorder %s10, 0
    %p44 = por %p42, %p43
    %p45 = scmp.ne.s32.totalorder %s34, %s37
    %p46 = scmp.eq.s32.totalorder %s15, 1
    %p47 = por %p45, %p46
    %p48 = scmp.ne.s32.totalorder %s37, %s38
    %p49 = scmp.eq.s32.totalorder %s15, 0
    %p50 = por %p48, %p49
    %p51 = scmp.ne.s32.totalorder %s37, %s38
    %p52 = scmp.eq.s32.totalorder %s16, 1
    %p53 = por %p51, %p52
    %p55 = scmp.ne.s32.totalorder %s38, %s54
    %p56 = scmp.eq.s32.totalorder %s16, 0
    %p57 = por %p55, %p56
    %s58 = ssub.s32 %s17, %s29
    %s59 = ssub.s32 %s18, %s25
    %s60 = sor.u32 %s58, %s59
    %p61 = scmp.eq.s32.totalorder %s60, 0
    %s63 = sadd.s32 %s62, 1
    %s64 = scalar_select %p61, %s62, %s63
    %p67 = pneg %p61
    %p68 = scmp.eq.s32.totalorder %s10, 1
    %p69 = por %p67, %p68
    %p70 = scmp.ne.s32.totalorder %s62, %s65
    %p71 = scmp.eq.s32.totalorder %s10, 0
    %p72 = por %p70, %p71
    %p73 = scmp.ne.s32.totalorder %s62, %s65
    %p74 = scmp.eq.s32.totalorder %s15, 1
    %p75 = por %p73, %p74
    %p76 = scmp.ne.s32.totalorder %s65, %s66
    %p77 = scmp.eq.s32.totalorder %s15, 0
    %p78 = por %p76, %p77
    %p79 = scmp.ne.s32.totalorder %s65, %s66
    %p80 = scmp.eq.s32.totalorder %s16, 1
    %p81 = por %p79, %p80
    %p83 = scmp.ne.s32.totalorder %s66, %s82
    %p84 = scmp.eq.s32.totalorder %s16, 0
    %p85 = por %p83, %p84
    %s86 = ssub.s32 %s17, %s29
    %p87 = scmp.eq.s32.totalorder %s86, 0
    %s89 = sadd.s32 %s88, 1
    %s90 = scalar_select %p87, %s88, %s89
    %p93 = pneg %p87
    %p94 = scmp.eq.s32.totalorder %s10, 1
    %p95 = por %p93, %p94
    %p96 = scmp.ne.s32.totalorder %s88, %s91
    %p97 = scmp.eq.s32.totalorder %s10, 0
    %p98 = por %p96, %p97
    %p99 = scmp.ne.s32.totalorder %s88, %s91
    %p100 = scmp.eq.s32.totalorder %s15, 1
    %p101 = por %p99, %p100
    %p102 = scmp.ne.s32.totalorder %s91, %s92
    %p103 = scmp.eq.s32.totalorder %s15, 0
    %p104 = por %p102, %p103
    %p105 = scmp.ne.s32.totalorder %s91, %s92
    %p106 = scmp.eq.s32.totalorder %s16, 1
    %p107 = por %p105, %p106
    %p109 = scmp.ne.s32.totalorder %s92, %s108
    %p110 = scmp.eq.s32.totalorder %s16, 0
    %p111 = por %p109, %p110
    %s112 = ssub.s32 %s17, %s29
    %p113 = scmp.eq.s32.totalorder %s112, 0
    %s115 = sadd.s32 %s114, 1
    %s116 = scalar_select %p113, %s114, %s115
    %p119 = pneg %p113
    %p120 = scmp.eq.s32.totalorder %s10, 1
    %p121 = por %p119, %p120
    %p122 = scmp.ne.s32.totalorder %s114, %s117
    %p123 = scmp.eq.s32.totalorder %s10, 0
    %p124 = por %p122, %p123
    %p125 = scmp.ne.s32.totalorder %s114, %s117
    %p126 = scmp.eq.s32.totalorder %s15, 1
    %p127 = por %p125, %p126
    %p128 = scmp.ne.s32.totalorder %s117, %s118
    %p129 = scmp.eq.s32.totalorder %s15, 0
    %p130 = por %p128, %p129
    %p131 = scmp.ne.s32.totalorder %s117, %s118
    %p132 = scmp.eq.s32.totalorder %s16, 1
    %p133 = por %p131, %p132
    %p135 = scmp.ne.s32.totalorder %s118, %s134
    %p136 = scmp.eq.s32.totalorder %s16, 0
    %p137 = por %p135, %p136
    %p138 = scmp.le.s32.totalorder 1, %s10
    %p139 = scmp.lt.s32.totalorder %s10, 3
    %p140 = pnand %p138, %p139
    %p141 = pneg %p140
    // Predicated region
    $region9: #{_lambda_.8} parent=5 // pred_check
      _
    $region10: #{_lambda_.8} parent=5 // pred_check_branch
      %143 = sbr.rel (%p140) target = $region12
    $region11: #{_lambda_.8} parent=5 // pred_region
      %s144 = ssub.s32 %s10, 1
    $region12: #{_lambda_.8} parent=5 // pred_fallthru
      _
    %p145 = scmp.lt.s32.totalorder %s10, 2
    // Predicated region
    $region13: #{_lambda_.8} parent=5 // pred_check
      %p146 = pneg %p145
    $region14: #{_lambda_.8} parent=5 // pred_check_branch
      %148 = sbr.rel (%p146) target = $region16
    $region15: #{_lambda_.8} parent=5 // pred_region
      // Predicated region
      $region17: #{_lambda_.8} parent=15 // pred_check
        %p149 = pneg %p44
      $region18: #{_lambda_.8} parent=15 // pred_check_branch
        %151 = sbr.rel (%p149) target = $region20
      $region19: #{_lambda_.8} parent=15 // pred_region
        %p152 = scmp.lt.s32.totalorder %s17, 1
        %s153 = scalar_select %p152, %s17, 1
        %p154 = scmp.lt.s32.totalorder %s18, 0
        %s155 = scalar_select %p154, %s18, 0
        %s156 = smul.addr %s153, 6
        %s157 = sadd.s32 %s155, %s156
        %s158 = smul.addr %s157, 8
        %s159 = scalar_lea.vmem %s0, %s158
      $region20: #{_lambda_.8} parent=15 // pred_fallthru
        _
      // Predicated region
      $region21: #{_lambda_.8} parent=15 // pred_check
        %p160 = pneg %p72
      $region22: #{_lambda_.8} parent=15 // pred_check_branch
        %162 = sbr.rel (%p160) target = $region24
      $region23: #{_lambda_.8} parent=15 // pred_region
        %p163 = scmp.lt.s32.totalorder %s17, 1
        %s164 = scalar_select %p163, %s17, 1
        %p165 = scmp.lt.s32.totalorder %s18, 0
        %s166 = scalar_select %p165, %s18, 0
        %s167 = sadd.s32 %s166, %s164
        %s168 = smul.addr %s167, 8
        %s169 = scalar_lea.vmem %s1, %s168
      $region24: #{_lambda_.8} parent=15 // pred_fallthru
        _
    $region16: #{_lambda_.8} parent=5 // pred_fallthru
      _
    %p170 = scmp.le.s32.totalorder 1, %s10
    %p171 = scmp.lt.s32.totalorder %s10, 3
    %p172 = pnand %p170, %p171
    %p173 = pneg %p172
    // Predicated region
    $region25: #{_lambda_.8} parent=5 // pred_check
      _
    $region26: #{_lambda_.8} parent=5 // pred_check_branch
      %175 = sbr.rel (%p172) target = $region28
    $region27: #{_lambda_.8} parent=5 // pred_region
      %s176 = ssub.s32 %s10, 1
      %p177 = scmp.lt.s32.totalorder %s19, 1
      %s178 = scalar_select %p177, %s19, 1
      %p179 = scmp.lt.s32.totalorder %s20, 0
      %s180 = scalar_select %p179, %s20, 0
      %s181 = smul.addr %s178, 6
      %s182 = sadd.s32 %s180, %s181
      %s183 = smul.addr %s182, 8
      %s184 = scalar_lea.vmem %s0, %s183
      %p185 = pneg %p50
      %p186 = pneg %p47
      %p187 = scmp.lt.s32.totalorder %s19, 1
      %s188 = scalar_select %p187, %s19, 1
      %p189 = scmp.lt.s32.totalorder %s20, 0
      %s190 = scalar_select %p189, %s20, 0
      %s191 = sadd.s32 %s190, %s188
      %s192 = smul.addr %s191, 8
      %s193 = scalar_lea.vmem %s1, %s192
      %p194 = pneg %p78
      %p195 = pneg %p75
      %p196 = pneg %p104
      %p197 = pneg %p101
      %p198 = scmp.lt.s32.totalorder %s19, 1
      %s199 = scalar_select %p198, %s19, 1
      %s200 = scalar_lea.vmem %s2, %s199
      %p201 = pneg %p130
      %p202 = pneg %p127
      %p203 = scmp.lt.s32.totalorder %s19, 1
      %s204 = scalar_select %p203, %s19, 1
      %s205 = scalar_lea.vmem %s3, %s204
      %p206 = scmp.lt.s32.totalorder %s19, 1
      %s207 = scalar_select %p206, %s19, 1
      %p208 = scmp.lt.s32.totalorder %s20, 0
      %s209 = scalar_select %p208, %s20, 0
      %s210 = smul.addr %s207, 6
      %s211 = sadd.s32 %s209, %s210
      %s212 = smul.addr %s211, 8
      %s213 = scalar_lea.vmem %s0, %s212
      %p214 = scmp.lt.s32.totalorder %s19, 1
      %s215 = scalar_select %p214, %s19, 1
      %p216 = scmp.lt.s32.totalorder %s20, 0
      %s217 = scalar_select %p216, %s20, 0
      %s218 = sadd.s32 %s217, %s215
      %s219 = smul.addr %s218, 8
      %s220 = scalar_lea.vmem %s1, %s219
      %p221 = scmp.lt.s32.totalorder %s19, 1
      %s222 = scalar_select %p221, %s19, 1
      %s223 = scalar_lea.vmem %s2, %s222
      %p224 = scmp.lt.s32.totalorder %s19, 1
      %s225 = scalar_select %p224, %s19, 1
      %s226 = scalar_lea.vmem %s3, %s225
      %p227 = scmp.eq.s32.totalorder %s20, 0
      // Predicated region
      $region29: #{_lambda_.8} parent=27 // pred_check
        %p228 = pneg %p227
      $region30: #{_lambda_.8} parent=27 // pred_check_branch
        %230 = sbr.rel (%p228) target = $region32
      $region31: #{_lambda_.8} parent=27 // pred_region
        %vm231 = vcmask 261120
        %232 = vst.msk [vmem:[#allocation2] sm:$0xff] %vm231, 0.0
        %233 = vst.msk [vmem:[#allocation3] sm:$0xff] %vm231, 0.0
      $region32: #{_lambda_.8} parent=27 // pred_fallthru
        _
      %v234 = vld [vmem:[%s213] sm:$0xff]
      %v235 = vld [vmem:[%s213 + $0x8] sm:$0xff]
      %v236 = vld [vmem:[%s213 + $0x10] sm:$0xff]
      %v237 = vld [vmem:[%s213 + $0x18] sm:$0xff]
      %v238 = vld [vmem:[%s213 + $0x20] sm:$0xff]
      %v239 = vld [vmem:[%s213 + $0x28] sm:$0xff]
      %v240 = vld [vmem:[%s220] sm:$0xff]
      %vm241 = vcmask 261120
      %v242 = vsel %vm241, %v234, -inf
      %v243 = vsel %vm241, %v235, -inf
      %v244 = vsel %vm241, %v236, -inf
      %v245 = vsel %vm241, %v237, -inf
      %v246 = vsel %vm241, %v238, -inf
      %v247 = vmax.f32 %v242, %v246
      %v248 = vsel %vm241, %v239, -inf
      %v249 = vmax.f32 %v243, %v248
      %v250 = vmax.f32 %v247, %v249
      %v251 = vmax.f32 %v244, %v245
      %v252 = vmax.f32 %v250, %v251
      %v253 = vsub.f32 %v234, %v252
      %v254 = vsub.f32 %v235, %v252
      %v255 = vsub.f32 %v236, %v252
      %v256 = vsub.f32 %v237, %v252
      %v257 = vsub.f32 %v238, %v252
      %v258 = vsub.f32 %v239, %v252
      %v259 = vmul.f32 %v253, 1.442695
      %v260 = vpow.pop %v259
      %v261 = vmul.f32 %v254, 1.442695
      %v262 = vpow.pop %v261
      %v263 = vmul.f32 %v255, 1.442695
      %v264 = vpow.pop %v263
      %v265 = vmul.f32 %v256, 1.442695
      %v266 = vpow.pop %v265
      %v267 = vmul.f32 %v257, 1.442695
      %v268 = vpow.pop %v267
      %v269 = vmul.f32 %v258, 1.442695
      %v270 = vpow.pop %v269
      %v271 = vsel %vm241, %v260, 0.0
      %v272 = vsel %vm241, %v262, 0.0
      %v273 = vadd.f32 %v271, %v272
      %v274 = vsel %vm241, %v264, 0.0
      %v275 = vadd.f32 %v273, %v274
      %v276 = vsel %vm241, %v266, 0.0
      %v277 = vadd.f32 %v275, %v276
      %v278 = vsel %vm241, %v268, 0.0
      %v279 = vadd.f32 %v277, %v278
      %v280 = vsel %vm241, %v270, 0.0
      %v281 = vadd.f32 %v279, %v280
      %v282 = vlog2.pop %v281
      %v283 = vmul.f32 %v282, 0.6931472
      %v284 = vadd.f32 %v252, %v283
      %vm285 = vcmp.eq.s32.totalorder %v240, 0
      %vm286 = vcmp.eq.s32.totalorder %v240, 1
      %vm287 = vcmp.eq.s32.totalorder %v240, 2
      %vm288 = vcmp.eq.s32.totalorder %v240, 3
      %vm289 = vcmp.eq.s32.totalorder %v240, 4
      %vm290 = vcmp.eq.s32.totalorder %v240, 5
      %v291 = vsel %vm285, %v234, 0.0
      %v292 = vsel %vm286, %v235, 0.0
      %v293 = vsel %vm287, %v236, 0.0
      %v294 = vsel %vm288, %v237, 0.0
      %v295 = vsel %vm289, %v238, 0.0
      %v296 = vsel %vm290, %v239, 0.0
      %v297 = vsel %vm241, %v291, 0.0
      %v298 = vsel %vm241, %v292, 0.0
      %v299 = vadd.f32 %v297, %v298
      %v300 = vsel %vm241, %v293, 0.0
      %v301 = vadd.f32 %v299, %v300
      %v302 = vsel %vm241, %v294, 0.0
      %v303 = vadd.f32 %v301, %v302
      %v304 = vsel %vm241, %v295, 0.0
      %v305 = vadd.f32 %v303, %v304
      %v306 = vsel %vm241, %v296, 0.0
      %v307 = vadd.f32 %v305, %v306
      %vm308 = vcmp.ne.s32.totalorder %v240, 6
      %v309 = vld [vmem:[#allocation2] sm:$0xff]
      %v310 = vsub.f32 %v284, %v307
      %v311 = vsel %vm308, %v310, 0.0
      %v312 = vadd.f32 %v309, %v311
      %313 = vst.msk [vmem:[#allocation2] sm:$0xff] %vm241, %v312
      %v314 = vld [vmem:[#allocation3] sm:$0xff]
      %v315 = vsel %vm308, 1, 0
      %v316 = vcvt.s32.f32 %v315
      %v317 = vadd.f32 %v314, %v316
      %318 = vst.msk [vmem:[#allocation3] sm:$0xff] %vm241, %v317
      // Predicated region
      $region33: #{_lambda_.8} parent=27 // pred_check
        %p319 = pneg %p227
      $region34: #{_lambda_.8} parent=27 // pred_check_branch
        %321 = sbr.rel (%p319) target = $region36
      $region35: #{_lambda_.8} parent=27 // pred_region
        %v322 = vld [vmem:[#allocation2] sm:$0xff]
        %v323 = vsel %vm241, %v322, 0.0
        %324 = vadd.xlane.f32.xlu0 %v323
        %v325 = vpop.xlane.xlu0 %324
        %v326 = vrot.slane %v325, 4
        %v327 = vadd.f32 %v325, %v326
        %v328 = vrot.slane %v327, 2
        %v329 = vadd.f32 %v327, %v328
        %v330 = vrot.slane %v329, 1
        %v331 = vadd.f32 %v329, %v330
        %s332 = vtos %v331
        %v333 = vstv %s332
        %vm334 = vcmask 0
        %335 = vst.msk [vmem:[%s223] sm:$0x1] %vm334, %v333
        %v336 = vld [vmem:[#allocation3] sm:$0xff]
        %v337 = vsel %vm241, %v336, 0.0
        %338 = vadd.xlane.f32.xlu0 %v337
        %v339 = vpop.xlane.xlu0 %338
        %v340 = vrot.slane %v339, 4
        %v341 = vadd.f32 %v339, %v340
        %v342 = vrot.slane %v341, 2
        %v343 = vadd.f32 %v341, %v342
        %v344 = vrot.slane %v343, 1
        %v345 = vadd.f32 %v343, %v344
        %s346 = vtos %v345
        %v347 = vstv %s346
        %348 = vst.msk [vmem:[%s226] sm:$0x1] %vm334, %v347
      $region36: #{_lambda_.8} parent=27 // pred_fallthru
        _
      %p349 = scmp.lt.s32.totalorder %s19, 1
      %s350 = scalar_select %p349, %s19, 1
      %s351 = scalar_lea.vmem %s2, %s350
      %p352 = scmp.lt.s32.totalorder %s19, 1
      %s353 = scalar_select %p352, %s19, 1
      %s354 = scalar_lea.vmem %s3, %s353
      // Predicated region
      $region37: #{_lambda_.8} parent=27 // pred_check
        %p355 = pneg %p101
      $region38: #{_lambda_.8} parent=27 // pred_check_branch
        %357 = sbr.rel (%p355) target = $region40
      $region39: #{_lambda_.8} parent=27 // pred_region
        _
      $region40: #{_lambda_.8} parent=27 // pred_fallthru
        _
      // Predicated region
      $region41: #{_lambda_.8} parent=27 // pred_check
        %p358 = pneg %p127
      $region42: #{_lambda_.8} parent=27 // pred_check_branch
        %360 = sbr.rel (%p358) target = $region44
      $region43: #{_lambda_.8} parent=27 // pred_region
        _
      $region44: #{_lambda_.8} parent=27 // pred_fallthru
        _
    $region28: #{_lambda_.8} parent=5 // pred_fallthru
      _
    %p361 = scmp.le.s32.totalorder 2, %s10
    // Predicated region
    $region45: #{_lambda_.8} parent=5 // pred_check
      %p362 = pneg %p361
    $region46: #{_lambda_.8} parent=5 // pred_check_branch
      %364 = sbr.rel (%p362) target = $region48
    $region47: #{_lambda_.8} parent=5 // pred_region
      %s365 = ssub.s32 %s10, 2
      // Predicated region
      $region49: #{_lambda_.8} parent=47 // pred_check
        %p366 = pneg %p107
      $region50: #{_lambda_.8} parent=47 // pred_check_branch
        %368 = sbr.rel (%p366) target = $region52
      $region51: #{_lambda_.8} parent=47 // pred_region
        %p369 = scmp.lt.s32.totalorder %s21, 1
        %s370 = scalar_select %p369, %s21, 1
        %s371 = scalar_lea.vmem %s2, %s370
      $region52: #{_lambda_.8} parent=47 // pred_fallthru
        _
      // Predicated region
      $region53: #{_lambda_.8} parent=47 // pred_check
        %p372 = pneg %p133
      $region54: #{_lambda_.8} parent=47 // pred_check_branch
        %374 = sbr.rel (%p372) target = $region56
      $region55: #{_lambda_.8} parent=47 // pred_region
        %p375 = scmp.lt.s32.totalorder %s21, 1
        %s376 = scalar_select %p375, %s21, 1
        %s377 = scalar_lea.vmem %s3, %s376
      $region56: #{_lambda_.8} parent=47 // pred_fallthru
        _
    $region48: #{_lambda_.8} parent=5 // pred_fallthru
      _
  $region6: #{_lambda_.8} parent=0 // loop_footer
    %s14 = sadd.s32 1, %s10
  $region7: #{_lambda_.8} parent=0 // loop_footer_branch
    %9 = sbr.rel target = $region3
  $region8: #{_lambda_.8} parent=0 // loop_exit
    _

// kernel: eq.45
$region0: #{eq.45}
  %s0 = inlined_call_operand.vmem [shape: s32[2,16,16], index: 0, kind: input, shape index: {}]
  %s1 = inlined_call_operand.vmem [shape: s32[2,256], index: 1, kind: output, shape index: {}]
  $region1: #{eq.45} parent=0
    #allocation0 [shape = 'u8[8192]{0}', space=vmem, size = 0x2000, scoped, tag = 'scoped mem for output reshape']
    %v2 = vld [vmem:[%s0] ss:$8 sm:$0xf]
    %vm3 = vcmask 130048
    %4 = vst.msk [vmem:[#allocation0] ss:$8 sm:$0x3] %vm3, %v2
    %s5 = scalar_lea.vmem [#allocation0], 4294967281
    %6 = vst.msk [vmem:[%s5] ss:$8 sm:$0xc] %vm3, %v2
    %s7 = scalar_lea.vmem %s0, 7
    %s8 = smov 3
    %v9 = vld [vmem:[%s7] ss:$16 sm:%s8]
    %s10 = scalar_lea.vmem %s0, 4294967279
    %s11 = smov 12
    %v12 = vld [vmem:[%s10] ss:$16 sm:%s11]
    %vm13 = vcmask 1043458
    %v14 = vsel %vm13, %v12, %v9
    %15 = vrot.lane.b32.xlu0 %v14, 112
    %v16 = vpop.permute.xlu0 %15
    %vm17 = vcmask 1048448
    %18 = vst.msk [vmem:[#allocation0] sm:$0x3] %vm17, %v16
    %s19 = scalar_lea.vmem [#allocation0], 6
    %20 = vst.msk [vmem:[%s19] sm:$0xc] %vm17, %v16
    %s21 = scalar_lea.vmem %s0, 6
    %s22 = smov 3
    %v23 = vld [vmem:[%s21] ss:$16 sm:%s22]
    %s24 = scalar_lea.vmem %s0, 4294967278
    %s25 = smov 12
    %v26 = vld [vmem:[%s24] ss:$16 sm:%s25]
    %vm27 = vcmask 1043458
    %v28 = vsel %vm27, %v26, %v23
    %29 = vrot.lane.b32.xlu0 %v28, 96
    %v30 = vpop.permute.xlu0 %29
    %vm31 = vcmask 917248
    %32 = vst.msk [vmem:[#allocation0] sm:$0x3] %vm31, %v30
    %s33 = scalar_lea.vmem [#allocation0], 6
    %34 = vst.msk [vmem:[%s33] sm:$0xc] %vm31, %v30
    %s35 = scalar_lea.vmem %s0, 5
    %s36 = smov 3
    %v37 = vld [vmem:[%s35] ss:$16 sm:%s36]
    %s38 = scalar_lea.vmem %s0, 4294967277
    %s39 = smov 12
    %v40 = vld [vmem:[%s38] ss:$16 sm:%s39]
    %vm41 = vcmask 1043458
    %v42 = vsel %vm41, %v40, %v37
    %43 = vrot.lane.b32.xlu0 %v42, 80
    %v44 = vpop.permute.xlu0 %43
    %vm45 = vcmask 786048
    %46 = vst.msk [vmem:[#allocation0] sm:$0x3] %vm45, %v44
    %s47 = scalar_lea.vmem [#allocation0], 6
    %48 = vst.msk [vmem:[%s47] sm:$0xc] %vm45, %v44
    %s49 = scalar_lea.vmem %s0, 4
    %s50 = smov 3
    %v51 = vld [vmem:[%s49] ss:$16 sm:%s50]
    %s52 = scalar_lea.vmem %s0, 4294967276
    %s53 = smov 12
    %v54 = vld [vmem:[%s52] ss:$16 sm:%s53]
    %vm55 = vcmask 1043458
    %v56 = vsel %vm55, %v54, %v51
    %57 = vrot.lane.b32.xlu0 %v56, 64
    %v58 = vpop.permute.xlu0 %57
    %vm59 = vcmask 654848
    %60 = vst.msk [vmem:[#allocation0] sm:$0x3] %vm59, %v58
    %s61 = scalar_lea.vmem [#allocation0], 6
    %62 = vst.msk [vmem:[%s61] sm:$0xc] %vm59, %v58
    %s63 = scalar_lea.vmem %s0, 3
    %s64 = smov 3
    %v65 = vld [vmem:[%s63] ss:$16 sm:%s64]
    %s66 = scalar_lea.vmem %s0, 4294967275
    %s67 = smov 12
    %v68 = vld [vmem:[%s66] ss:$16 sm:%s67]
    %vm69 = vcmask 1043458
    %v70 = vsel %vm69, %v68, %v65
    %71 = vrot.lane.b32.xlu0 %v70, 48
    %v72 = vpop.permute.xlu0 %71
    %vm73 = vcmask 523648
    %74 = vst.msk [vmem:[#allocation0] sm:$0x3] %vm73, %v72
    %s75 = scalar_lea.vmem [#allocation0], 6
    %76 = vst.msk [vmem:[%s75] sm:$0xc] %vm73, %v72
    %s77 = scalar_lea.vmem %s0, 2
    %s78 = smov 3
    %v79 = vld [vmem:[%s77] ss:$16 sm:%s78]
    %s80 = scalar_lea.vmem %s0, 4294967274
    %s81 = smov 12
    %v82 = vld [vmem:[%s80] ss:$16 sm:%s81]
    %vm83 = vcmask 1043458
    %v84 = vsel %vm83, %v82, %v79
    %85 = vrot.lane.b32.xlu0 %v84, 32
    %v86 = vpop.permute.xlu0 %85
    %vm87 = vcmask 392448
    %88 = vst.msk [vmem:[#allocation0] sm:$0x3] %vm87, %v86
    %s89 = scalar_lea.vmem [#allocation0], 6
    %90 = vst.msk [vmem:[%s89] sm:$0xc] %vm87, %v86
    %s91 = scalar_lea.vmem %s0, 1
    %s92 = smov 3
    %v93 = vld [vmem:[%s91] ss:$16 sm:%s92]
    %s94 = scalar_lea.vmem %s0, 4294967273
    %s95 = smov 12
    %v96 = vld [vmem:[%s94] ss:$16 sm:%s95]
    %vm97 = vcmask 1043458
    %v98 = vsel %vm97, %v96, %v93
    %99 = vrot.lane.b32.xlu0 %v98, 16
    %v100 = vpop.permute.xlu0 %99
    %vm101 = vcmask 261248
    %102 = vst.msk [vmem:[#allocation0] sm:$0x3] %vm101, %v100
    %s103 = scalar_lea.vmem [#allocation0], 6
    %104 = vst.msk [vmem:[%s103] sm:$0xc] %vm101, %v100
    %s106 = ssub.s32 4, 1
    %v107 = vld [vmem:[#allocation0] sm:%s106]
    %s109 = ssub.s32 4, 1
    %110 = vst [vmem:[%s1] sm:%s109] %v107
    %s111 = scalar_lea.vmem [#allocation0], 8
    %v112 = vld [vmem:[%s111] sm:%s106]
    %s114 = ssub.s32 4, 1
    %s115 = scalar_lea.vmem %s1, 2
    %116 = vst [vmem:[%s115] sm:%s114] %v112

// kernel: _lambda_.11
$region0: #{_lambda_.11}
  #allocation0 [shape = 'u32[]', space=smem, size = 0x4, offset = 0x4, fixed_abs, tag = 'smem constant byte address 0x4 - core index']
  #allocation1 [shape = 'u32[72,128]{1,0:T(1,128)}', space=vmem, size = 0x9000, scoped, tag = 'internal scratch']
  #allocation2 [shape = 'f32[12,128]{1,0:T(8,128)}', space=vmem, size = 0x2000, scoped, tag = 'scratch operand']
  %s0 = inlined_call_operand.vmem [shape: f32[12,128], index: 0, kind: input, shape index: {}]
  %s1 = inlined_call_operand.vmem [shape: f32[12,128], index: 1, kind: input, shape index: {}]
  %s2 = inlined_call_operand.hbm [shape: f32[1,1], index: 2, kind: output, shape index: {}]
  %s3 = sld [smem:[#allocation0]]
  $region26: #{_lambda_.11} parent=0
    _
  %s5 = ssub.s32 1, %s3
  %s6 = scalar_select 0, %s5, %s3
  $region1: #{_lambda_.11} parent=0
    #allocation3 [shape = 'u8[512]{0}', space=vmem, size = 0x400, scoped, tag = 'output window, operand 0, single buffered']
    #allocation4 [shape = 's32[1]{0}', space=sflag, size = 0x4, scoped, tag = 'scoped memory for _lambda_.11']
    %7 = vsyncpa [#allocation4], 0
    // Predicated region
    $region2: #{_lambda_.11} parent=1 // pred_check
      _
    $region3: #{_lambda_.11} parent=1 // pred_check_branch
      %9 = sbr.rel (0) target = $region5
    $region4: #{_lambda_.11} parent=1 // pred_region
      _
    $region5: #{_lambda_.11} parent=1 // pred_fallthru
      _
    // Predicated region
    $region6: #{_lambda_.11} parent=1 // pred_check
      _
    $region7: #{_lambda_.11} parent=1 // pred_check_branch
      %11 = sbr.rel (0) target = $region9
    $region8: #{_lambda_.11} parent=1 // pred_region
      _
    $region9: #{_lambda_.11} parent=1 // pred_fallthru
      _
    %p12 = scmp.eq.s32.totalorder 0, 0
    // Predicated region
    $region10: #{_lambda_.11} parent=1 // pred_check
      %p13 = pneg %p12
    $region11: #{_lambda_.11} parent=1 // pred_check_branch
      %15 = sbr.rel (%p13) target = $region13
    $region12: #{_lambda_.11} parent=1 // pred_region
      %16 = vst [vmem:[#allocation2] sm:$0xff] 0.0
      %17 = vst [vmem:[#allocation2 + $0x8] sm:$0xf] 0.0
    $region13: #{_lambda_.11} parent=1 // pred_fallthru
      _
    %v18 = vld [vmem:[%s0] sm:$0xff]
    %v19 = vld [vmem:[%s0 + $0x8] sm:$0xf]
    %v20 = vld [vmem:[%s1] sm:$0xff]
    %v21 = vld [vmem:[%s1 + $0x8] sm:$0xf]
    %v22 = vsub.f32 %v18, %v20
    %v23 = vsub.f32 %v19, %v21
    %v24 = vmul.f32 %v22, %v22
    %v25 = vmul.f32 %v23, %v23
    %v26 = vld [vmem:[#allocation2] sm:$0xff]
    %v27 = vld [vmem:[#allocation2 + $0x8] sm:$0xf]
    %v28 = vadd.f32 %v26, %v24
    %v29 = vadd.f32 %v27, %v25
    %30 = vst [vmem:[#allocation2] sm:$0xff] %v28
    %31 = vst [vmem:[#allocation2 + $0x8] sm:$0xf] %v29
    // Predicated region
    $region14: #{_lambda_.11} parent=1 // pred_check
      %p32 = pneg %p12
    $region15: #{_lambda_.11} parent=1 // pred_check_branch
      %34 = sbr.rel (%p32) target = $region17
    $region16: #{_lambda_.11} parent=1 // pred_region
      %v35 = vld [vmem:[#allocation2] sm:$0xff]
      %v36 = vld [vmem:[#allocation2 + $0x8] sm:$0xf]
      %vm37 = vcmask 1043456
      %v38 = vsel %vm37, %v36, 0.0
      %v39 = vadd.f32 %v35, %v38
      %40 = vadd.xlane.f32.xlu0 %v39
      %v41 = vpop.xlane.xlu0 %40
      %v42 = vrot.slane %v41, 4
      %v43 = vadd.f32 %v41, %v42
      %v44 = vrot.slane %v43, 2
      %v45 = vadd.f32 %v43, %v44
      %v46 = vrot.slane %v45, 1
      %v47 = vadd.f32 %v45, %v46
      %s48 = vtos %v47
      %v49 = vstv %s48
      %vm50 = vcmask 0
      %51 = vst.msk [vmem:[#allocation3] sm:$0x1] %vm50, %v49
    $region17: #{_lambda_.11} parent=1 // pred_fallthru
      _
    // Predicated region
    $region18: #{_lambda_.11} parent=1 // pred_check
      _
    $region19: #{_lambda_.11} parent=1 // pred_check_branch
      %53 = sbr.rel (0) target = $region21
    $region20: #{_lambda_.11} parent=1 // pred_region
      %55 = vsyncadd [#allocation4], 0
      %s57 = sshll.u32 [#allocation3], 4
      %s58 = int_to_ptr.vmem [resolvable:$true] %s57
      %s59 = sshll.u32 %s2, 4
      %s60 = int_to_ptr.hbm [resolvable:$true] %s59
      %62 = dma.vmem_to_hbm [thread:$0]  %s58, 16, %s60, [#allocation4]
    $region21: #{_lambda_.11} parent=1 // pred_fallthru
      _
    // Predicated region
    $region22: #{_lambda_.11} parent=1 // pred_check
      _
    $region23: #{_lambda_.11} parent=1 // pred_check_branch
      %64 = sbr.rel (0) target = $region25
    $region24: #{_lambda_.11} parent=1 // pred_region
      %66 = dma.done [#allocation4], 16
    $region25: #{_lambda_.11} parent=1 // pred_fallthru
      _
    %67 = vsyncpa [#allocation4], 1

// kernel: _lambda_.13
$region0: #{_lambda_.13}
  #allocation0 [shape = 'u32[]', space=smem, size = 0x4, offset = 0x4, fixed_abs, tag = 'smem constant byte address 0x4 - core index']
  #allocation1 [shape = 'u32[72,128]{1,0:T(1,128)}', space=vmem, size = 0x9000, scoped, tag = 'internal scratch']
  %s0 = inlined_call_operand.vmem [shape: f32[2,32], index: 0, kind: input, shape index: {}]
  %s1 = inlined_call_operand.vmem [shape: f32[2,2], index: 1, kind: input, shape index: {}]
  %s2 = inlined_call_operand.hbm [shape: f32[1,1], index: 2, kind: output, shape index: {}]
  %s3 = sld [smem:[#allocation0]]
  $region18: #{_lambda_.13} parent=0
    _
  %s5 = ssub.s32 1, %s3
  %s6 = scalar_select 0, %s5, %s3
  $region1: #{_lambda_.13} parent=0
    #allocation2 [shape = 'u8[512]{0}', space=vmem, size = 0x400, scoped, tag = 'output window, operand 0, single buffered']
    #allocation3 [shape = 's32[1]{0}', space=sflag, size = 0x4, scoped, tag = 'scoped memory for _lambda_.13']
    %7 = vsyncpa [#allocation3], 0
    // Predicated region
    $region2: #{_lambda_.13} parent=1 // pred_check
      _
    $region3: #{_lambda_.13} parent=1 // pred_check_branch
      %9 = sbr.rel (0) target = $region5
    $region4: #{_lambda_.13} parent=1 // pred_region
      _
    $region5: #{_lambda_.13} parent=1 // pred_fallthru
      _
    // Predicated region
    $region6: #{_lambda_.13} parent=1 // pred_check
      _
    $region7: #{_lambda_.13} parent=1 // pred_check_branch
      %11 = sbr.rel (0) target = $region9
    $region8: #{_lambda_.13} parent=1 // pred_region
      _
    $region9: #{_lambda_.13} parent=1 // pred_fallthru
      _
    %v12 = vld [vmem:[%s0] sm:$0x3]
    %v13 = vmul.f32 %v12, %v12
    %vm14 = vcmask 254976
    %v15 = vsel %vm14, %v13, 0.0
    %16 = vadd.xlane.f32.xlu0 %v15
    %v17 = vpop.xlane.xlu0 %16
    %v18 = vmax.f32 %v17, 1e-24
    %v19 = vrsqrt.pop %v18
    %v20 = vmul.f32 %v19, %v18
    %v21 = vmul.f32 %v20, %v19
    %v22 = vmul.f32 0.5, %v21
    %v23 = vsub.f32 1.5, %v22
    %v24 = vmul.f32 %v19, %v23
    %vm25 = vweird.f32 %v18
    %vm26 = vweird.f32 %v19
    %vm27 = vmor %vm25, %vm26
    %v28 = vsel %vm27, %v19, %v24
    %v29 = vmul.f32 %v12, %v28
    %vm30 = vcmask 261120
    %v32 = vsel %vm30, %v29, 0
    %34 = vmatpush.xpose.msra.mxu0 0.0
    %35 = vmatpush.xpose.msra.mxu0 0.0
    %36 = vmatpush.xpose.msra.mxu0 0.0
    %37 = vmatpush.xpose.msra.mxu0 0.0
    %38 = vmatpush.xpose.msra.mxu0 0.0
    %39 = vmatpush.xpose.msra.mxu0 0.0
    %40 = vmatpush.xpose.msra.mxu0 0.0
    %41 = vmatpush.xpose.msra.mxu0 0.0
    %42 = vmatpush.xpose.msra.mxu0 0.0
    %43 = vmatpush.xpose.msra.mxu0 0.0
    %44 = vmatpush.xpose.msra.mxu0 0.0
    %45 = vmatpush.xpose.msra.mxu0 0.0
    %46 = vmatpush.xpose.msra.mxu0 0.0
    %47 = vmatpush.xpose.msra.mxu0 0.0
    %48 = vmatpush.xpose.msra.mxu0 0.0
    %49 = vmatpush.xpose.msra.mxu0 %v32
    %50 = vmatmul.f32.gmra.mxu0 %v32
    %v51 = vpop.f32.mrf.mxu0
    %v52 = vadd.f32 0.0, %v51
    %53 = vdwg.mxu0
    %v54 = vrcp.pop 0.5
    %v55 = vmul.f32 0.5, %v54
    %v56 = vsub.f32 1.0, %v55
    %v57 = vmul.f32 %v54, %v56
    %v58 = vadd.f32 %v54, %v57
    %vm59 = vweird.f32 %v54
    %v60 = vsel %vm59, %v54, %v58
    %v61 = vmul.f32 %v52, %v60
    %v62 = vlaneseq
    %v63 = vshrl.u32 %v62, 7
    %v64 = vlaneseq
    %v65 = vand.u32 %v64, 127
    %vm66 = vcmp.eq.s32.totalorder %v63, %v65
    %v67 = vsel %vm66, 1, 0
    %v68 = vcvt.s32.f32 %v67
    %v69 = vld [vmem:[%s1] sm:$0x3]
    %v70 = vsub.f32 %v69, %v68
    %v71 = vmax.f32 %v70, 0.0
    %vm72 = vcmask 9216
    %v73 = vsel %vm72, %v71, 0.0
    %74 = vadd.xlane.f32.xlu0 %v73
    %v75 = vpop.xlane.xlu0 %74
    %v76 = vsel %vm72, %v61, -inf
    %77 = vmax.xlane.f32.xlu0 %v76
    %v78 = vpop.xlane.xlu0 %77
    %v79 = vsub.f32 %v61, %v78
    %v80 = vmul.f32 %v79, 1.442695
    %v81 = vpow.pop %v80
    %v82 = vsel %vm72, %v81, 0.0
    %83 = vadd.xlane.f32.xlu0 %v82
    %v84 = vpop.xlane.xlu0 %83
    %v85 = vmul.f32 %v81, %v68
    %v86 = vsub.f32 %v84, %v85
    %v87 = vmax.f32 %v86, 1e-30
    %v88 = vlog2.pop %v87
    %v89 = vmul.f32 %v88, 0.6931472
    %v90 = vsub.f32 %v61, %v89
    %v91 = vmul.f32 %v71, %v90
    %v92 = vsel %vm72, %v91, 0.0
    %93 = vadd.xlane.f32.xlu0 %v92
    %v94 = vpop.xlane.xlu0 %93
    %v95 = vmax.f32 %v75, 1.0
    %v96 = vrcp.pop %v95
    %v97 = vmul.f32 %v95, %v96
    %v98 = vsub.f32 1.0, %v97
    %v99 = vmul.f32 %v96, %v98
    %v100 = vadd.f32 %v96, %v99
    %vm101 = vweird.f32 %v95
    %vm102 = vweird.f32 %v96
    %vm103 = vmor %vm101, %vm102
    %v104 = vsel %vm103, %v96, %v100
    %v105 = vand.u32 2147483647, %v95
    %vm106 = vcmp.eq.f32.partialorder %v105, 8.507059e+37
    %v107 = vand.u32 %v95, 2147483648
    %v108 = vor.u32 1.1754944e-38, %v107
    %v109 = vsel %vm106, %v108, %v104
    %v110 = vmul.f32 %v94, %v109
    %vm111 = vcmp.gt.f32.partialorder %v75, 0.0
    %v112 = vsel %vm111, 1, 0
    %v113 = vcvt.s32.f32 %v112
    %vm114 = vcmask 1024
    %v115 = vsel %vm114, %v113, 0.0
    %116 = vadd.xlane.f32.xlu0 %v115
    %v117 = vpop.xlane.xlu0 %116
    %v118 = vrot.slane %v117, 4
    %v119 = vadd.f32 %v117, %v118
    %v120 = vrot.slane %v119, 2
    %v121 = vadd.f32 %v119, %v120
    %v122 = vrot.slane %v121, 1
    %v123 = vadd.f32 %v121, %v122
    %s124 = vtos %v123
    %v125 = vsub.f32 0.0, %v110
    %v126 = vmul.f32 %v125, %v113
    %v127 = vsel %vm114, %v126, 0.0
    %128 = vadd.xlane.f32.xlu0 %v127
    %v129 = vpop.xlane.xlu0 %128
    %v130 = vrot.slane %v129, 4
    %v131 = vadd.f32 %v129, %v130
    %v132 = vrot.slane %v131, 2
    %v133 = vadd.f32 %v131, %v132
    %v134 = vrot.slane %v133, 1
    %v135 = vadd.f32 %v133, %v134
    %s136 = vtos %v135
    %s137 = smax.f32 %s124, 1.0
    %v138 = vstv %s137
    %v139 = vrcp.pop %v138
    %v140 = vmul.f32 %v138, %v139
    %v141 = vsub.f32 1.0, %v140
    %v142 = vmul.f32 %v139, %v141
    %v143 = vadd.f32 %v139, %v142
    %vm144 = vweird.f32 %v138
    %vm145 = vweird.f32 %v139
    %vm146 = vmor %vm144, %vm145
    %v147 = vsel %vm146, %v139, %v143
    %v148 = vand.u32 2147483647, %v138
    %vm149 = vcmp.eq.f32.partialorder %v148, 8.507059e+37
    %v150 = vand.u32 %v138, 2147483648
    %v151 = vor.u32 1.1754944e-38, %v150
    %v152 = vsel %vm149, %v151, %v147
    %s153 = vtos %v152
    %s154 = smul.f32 %s136, %s153
    %v155 = vstv %s154
    %vm156 = vcmask 0
    %157 = vst.msk [vmem:[#allocation2] sm:$0x1] %vm156, %v155
    // Predicated region
    $region10: #{_lambda_.13} parent=1 // pred_check
      _
    $region11: #{_lambda_.13} parent=1 // pred_check_branch
      %159 = sbr.rel (0) target = $region13
    $region12: #{_lambda_.13} parent=1 // pred_region
      %161 = vsyncadd [#allocation3], 0
      %s163 = sshll.u32 [#allocation2], 4
      %s164 = int_to_ptr.vmem [resolvable:$true] %s163
      %s165 = sshll.u32 %s2, 4
      %s166 = int_to_ptr.hbm [resolvable:$true] %s165
      %168 = dma.vmem_to_hbm [thread:$0]  %s164, 16, %s166, [#allocation3]
    $region13: #{_lambda_.13} parent=1 // pred_fallthru
      _
    // Predicated region
    $region14: #{_lambda_.13} parent=1 // pred_check
      _
    $region15: #{_lambda_.13} parent=1 // pred_check_branch
      %170 = sbr.rel (0) target = $region17
    $region16: #{_lambda_.13} parent=1 // pred_region
      %172 = dma.done [#allocation3], 16
    $region17: #{_lambda_.13} parent=1 // pred_fallthru
      _
    %173 = vsyncpa [#allocation3], 1

// kernel: _lambda_.14
$region0: #{_lambda_.14}
  #allocation0 [shape = 'u32[]', space=smem, size = 0x4, offset = 0x4, fixed_abs, tag = 'smem constant byte address 0x4 - core index']
  #allocation1 [shape = 'u32[72,128]{1,0:T(1,128)}', space=vmem, size = 0x9000, scoped, tag = 'internal scratch']
  #allocation2 [shape = 'f32[8,32]{1,0:T(8,128)}', space=vmem, size = 0x1000, scoped, tag = 'scratch operand']
  %s0 = inlined_call_operand.vmem [shape: f32[2,6,8,32], index: 0, kind: input, shape index: {}]
  %s1 = inlined_call_operand.vmem [shape: f32[2,6,8,32], index: 1, kind: input, shape index: {}]
  %s2 = inlined_call_operand.vmem [shape: f32[2,1,1], index: 2, kind: output, shape index: {}]
  %s3 = sld [smem:[#allocation0]]
  $region49: #{_lambda_.14} parent=0
    _
  %s5 = ssub.s32 1, %s3
  %s6 = scalar_select 0, %s5, %s3
  loop: start=0, step=1, limit=4
  $region2: #{_lambda_.14} parent=0 // loop_pre_header
    _
  $region3: #{_lambda_.14} parent=0 // loop_header
    %s8 = sphi 0, %s12
    %p9 = scmp.ge.s32.totalorder %s8, 4
    %s15 = sphi 0, %s27
    %s16 = sphi 0, %s23
    %s17 = sphi 0, %s15
    %s18 = sphi 0, %s16
    %s19 = sphi 0, %s17
    %s20 = sphi 0, %s18
    %s32 = sphi 0, %s34
    %s35 = sphi 0, %s32
    %s36 = sphi 0, %s35
    %s52 = sphi 0, %s36
    %s60 = sphi 0, %s62
    %s63 = sphi 0, %s60
    %s64 = sphi 0, %s63
    %s80 = sphi 0, %s64
    %s86 = sphi 0, %s88
    %s89 = sphi 0, %s86
    %s90 = sphi 0, %s89
    %s106 = sphi 0, %s90
  $region4: #{_lambda_.14} parent=0 // loop_header_branch
    %11 = sbr.rel (%p9) target = $region8
  $region5: #{_lambda_.14} parent=0 // loop_body
    %s13 = ssub.s32 %s8, 1
    %s14 = ssub.s32 %s8, 2
    %s21 = sadd.s32 1, %s16
    %p22 = scmp.ge.s32.totalorder %s21, 1
    %s23 = scalar_select %p22, 0, %s21
    %s24 = sadd.s32 1, %s15
    %s25 = scalar_select %p22, %s24, %s15
    %p26 = scmp.ge.s32.totalorder %s25, 2
    %s27 = scalar_select %p26, 0, %s25
    %s28 = ssub.s32 %s15, %s27
    %s29 = ssub.s32 %s16, %s23
    %s30 = sor.u32 %s28, %s29
    %p31 = scmp.eq.s32.totalorder %s30, 0
    %s33 = sadd.s32 %s32, 1
    %s34 = scalar_select %p31, %s32, %s33
    %p37 = pneg %p31
    %p38 = scmp.eq.s32.totalorder %s8, 1
    %p39 = por %p37, %p38
    %p40 = scmp.ne.s32.totalorder %s32, %s35
    %p41 = scmp.eq.s32.totalorder %s8, 0
    %p42 = por %p40, %p41
    %p43 = scmp.ne.s32.totalorder %s32, %s35
    %p44 = scmp.eq.s32.totalorder %s13, 1
    %p45 = por %p43, %p44
    %p46 = scmp.ne.s32.totalorder %s35, %s36
    %p47 = scmp.eq.s32.totalorder %s13, 0
    %p48 = por %p46, %p47
    %p49 = scmp.ne.s32.totalorder %s35, %s36
    %p50 = scmp.eq.s32.totalorder %s14, 1
    %p51 = por %p49, %p50
    %p53 = scmp.ne.s32.totalorder %s36, %s52
    %p54 = scmp.eq.s32.totalorder %s14, 0
    %p55 = por %p53, %p54
    %s56 = ssub.s32 %s15, %s27
    %s57 = ssub.s32 %s16, %s23
    %s58 = sor.u32 %s56, %s57
    %p59 = scmp.eq.s32.totalorder %s58, 0
    %s61 = sadd.s32 %s60, 1
    %s62 = scalar_select %p59, %s60, %s61
    %p65 = pneg %p59
    %p66 = scmp.eq.s32.totalorder %s8, 1
    %p67 = por %p65, %p66
    %p68 = scmp.ne.s32.totalorder %s60, %s63
    %p69 = scmp.eq.s32.totalorder %s8, 0
    %p70 = por %p68, %p69
    %p71 = scmp.ne.s32.totalorder %s60, %s63
    %p72 = scmp.eq.s32.totalorder %s13, 1
    %p73 = por %p71, %p72
    %p74 = scmp.ne.s32.totalorder %s63, %s64
    %p75 = scmp.eq.s32.totalorder %s13, 0
    %p76 = por %p74, %p75
    %p77 = scmp.ne.s32.totalorder %s63, %s64
    %p78 = scmp.eq.s32.totalorder %s14, 1
    %p79 = por %p77, %p78
    %p81 = scmp.ne.s32.totalorder %s64, %s80
    %p82 = scmp.eq.s32.totalorder %s14, 0
    %p83 = por %p81, %p82
    %s84 = ssub.s32 %s15, %s27
    %p85 = scmp.eq.s32.totalorder %s84, 0
    %s87 = sadd.s32 %s86, 1
    %s88 = scalar_select %p85, %s86, %s87
    %p91 = pneg %p85
    %p92 = scmp.eq.s32.totalorder %s8, 1
    %p93 = por %p91, %p92
    %p94 = scmp.ne.s32.totalorder %s86, %s89
    %p95 = scmp.eq.s32.totalorder %s8, 0
    %p96 = por %p94, %p95
    %p97 = scmp.ne.s32.totalorder %s86, %s89
    %p98 = scmp.eq.s32.totalorder %s13, 1
    %p99 = por %p97, %p98
    %p100 = scmp.ne.s32.totalorder %s89, %s90
    %p101 = scmp.eq.s32.totalorder %s13, 0
    %p102 = por %p100, %p101
    %p103 = scmp.ne.s32.totalorder %s89, %s90
    %p104 = scmp.eq.s32.totalorder %s14, 1
    %p105 = por %p103, %p104
    %p107 = scmp.ne.s32.totalorder %s90, %s106
    %p108 = scmp.eq.s32.totalorder %s14, 0
    %p109 = por %p107, %p108
    %p110 = scmp.le.s32.totalorder 1, %s8
    %p111 = scmp.lt.s32.totalorder %s8, 3
    %p112 = pnand %p110, %p111
    %p113 = pneg %p112
    // Predicated region
    $region9: #{_lambda_.14} parent=5 // pred_check
      _
    $region10: #{_lambda_.14} parent=5 // pred_check_branch
      %115 = sbr.rel (%p112) target = $region12
    $region11: #{_lambda_.14} parent=5 // pred_region
      %s116 = ssub.s32 %s8, 1
    $region12: #{_lambda_.14} parent=5 // pred_fallthru
      _
    %p117 = scmp.lt.s32.totalorder %s8, 2
    // Predicated region
    $region13: #{_lambda_.14} parent=5 // pred_check
      %p118 = pneg %p117
    $region14: #{_lambda_.14} parent=5 // pred_check_branch
      %120 = sbr.rel (%p118) target = $region16
    $region15: #{_lambda_.14} parent=5 // pred_region
      // Predicated region
      $region17: #{_lambda_.14} parent=15 // pred_check
        %p121 = pneg %p42
      $region18: #{_lambda_.14} parent=15 // pred_check_branch
        %123 = sbr.rel (%p121) target = $region20
      $region19: #{_lambda_.14} parent=15 // pred_region
        %p124 = scmp.lt.s32.totalorder %s15, 1
        %s125 = scalar_select %p124, %s15, 1
        %p126 = scmp.lt.s32.totalorder %s16, 0
        %s127 = scalar_select %p126, %s16, 0
        %s128 = smul.addr %s125, 6
        %s129 = sadd.s32 %s127, %s128
        %s130 = smul.addr %s129, 8
        %s131 = scalar_lea.vmem %s0, %s130
      $region20: #{_lambda_.14} parent=15 // pred_fallthru
        _
      // Predicated region
      $region21: #{_lambda_.14} parent=15 // pred_check
        %p132 = pneg %p70
      $region22: #{_lambda_.14} parent=15 // pred_check_branch
        %134 = sbr.rel (%p132) target = $region24
      $region23: #{_lambda_.14} parent=15 // pred_region
        %p135 = scmp.lt.s32.totalorder %s15, 1
        %s136 = scalar_select %p135, %s15, 1
        %p137 = scmp.lt.s32.totalorder %s16, 0
        %s138 = scalar_select %p137, %s16, 0
        %s139 = smul.addr %s136, 6
        %s140 = sadd.s32 %s138, %s139
        %s141 = smul.addr %s140, 8
        %s142 = scalar_lea.vmem %s1, %s141
      $region24: #{_lambda_.14} parent=15 // pred_fallthru
        _
    $region16: #{_lambda_.14} parent=5 // pred_fallthru
      _
    %p143 = scmp.le.s32.totalorder 1, %s8
    %p144 = scmp.lt.s32.totalorder %s8, 3
    %p145 = pnand %p143, %p144
    %p146 = pneg %p145
    // Predicated region
    $region25: #{_lambda_.14} parent=5 // pred_check
      _
    $region26: #{_lambda_.14} parent=5 // pred_check_branch
      %148 = sbr.rel (%p145) target = $region28
    $region27: #{_lambda_.14} parent=5 // pred_region
      %s149 = ssub.s32 %s8, 1
      %p150 = scmp.lt.s32.totalorder %s17, 1
      %s151 = scalar_select %p150, %s17, 1
      %p152 = scmp.lt.s32.totalorder %s18, 0
      %s153 = scalar_select %p152, %s18, 0
      %s154 = smul.addr %s151, 6
      %s155 = sadd.s32 %s153, %s154
      %s156 = smul.addr %s155, 8
      %s157 = scalar_lea.vmem %s0, %s156
      %p158 = pneg %p48
      %p159 = pneg %p45
      %p160 = scmp.lt.s32.totalorder %s17, 1
      %s161 = scalar_select %p160, %s17, 1
      %p162 = scmp.lt.s32.totalorder %s18, 0
      %s163 = scalar_select %p162, %s18, 0
      %s164 = smul.addr %s161, 6
      %s165 = sadd.s32 %s163, %s164
      %s166 = smul.addr %s165, 8
      %s167 = scalar_lea.vmem %s1, %s166
      %p168 = pneg %p76
      %p169 = pneg %p73
      %p170 = pneg %p102
      %p171 = pneg %p99
      %p172 = scmp.lt.s32.totalorder %s17, 1
      %s173 = scalar_select %p172, %s17, 1
      %s174 = scalar_lea.vmem %s2, %s173
      %p175 = scmp.lt.s32.totalorder %s17, 1
      %s176 = scalar_select %p175, %s17, 1
      %p177 = scmp.lt.s32.totalorder %s18, 0
      %s178 = scalar_select %p177, %s18, 0
      %s179 = smul.addr %s176, 6
      %s180 = sadd.s32 %s178, %s179
      %s181 = smul.addr %s180, 8
      %s182 = scalar_lea.vmem %s0, %s181
      %p183 = scmp.lt.s32.totalorder %s17, 1
      %s184 = scalar_select %p183, %s17, 1
      %p185 = scmp.lt.s32.totalorder %s18, 0
      %s186 = scalar_select %p185, %s18, 0
      %s187 = smul.addr %s184, 6
      %s188 = sadd.s32 %s186, %s187
      %s189 = smul.addr %s188, 8
      %s190 = scalar_lea.vmem %s1, %s189
      %p191 = scmp.lt.s32.totalorder %s17, 1
      %s192 = scalar_select %p191, %s17, 1
      %s193 = scalar_lea.vmem %s2, %s192
      %p194 = scmp.eq.s32.totalorder %s18, 0
      // Predicated region
      $region29: #{_lambda_.14} parent=27 // pred_check
        %p195 = pneg %p194
      $region30: #{_lambda_.14} parent=27 // pred_check_branch
        %197 = sbr.rel (%p195) target = $region32
      $region31: #{_lambda_.14} parent=27 // pred_region
        %vm198 = vcmask 261120
        %199 = vst.msk [vmem:[#allocation2] sm:$0xff] %vm198, 0.0
      $region32: #{_lambda_.14} parent=27 // pred_fallthru
        _
      %v200 = vld [vmem:[%s182] sm:$0xff]
      %v201 = vld [vmem:[%s182 + $0x8] sm:$0xff]
      %v202 = vld [vmem:[%s182 + $0x10] sm:$0xff]
      %v203 = vld [vmem:[%s182 + $0x18] sm:$0xff]
      %v204 = vld [vmem:[%s182 + $0x20] sm:$0xff]
      %v205 = vld [vmem:[%s182 + $0x28] sm:$0xff]
      %v206 = vld [vmem:[%s190] sm:$0xff]
      %v207 = vld [vmem:[%s190 + $0x8] sm:$0xff]
      %v208 = vld [vmem:[%s190 + $0x10] sm:$0xff]
      %v209 = vld [vmem:[%s190 + $0x18] sm:$0xff]
      %v210 = vld [vmem:[%s190 + $0x20] sm:$0xff]
      %v211 = vld [vmem:[%s190 + $0x28] sm:$0xff]
      %vm212 = vcmask 261120
      %v213 = vsel %vm212, %v200, -inf
      %v214 = vsel %vm212, %v201, -inf
      %v215 = vsel %vm212, %v202, -inf
      %v216 = vsel %vm212, %v203, -inf
      %v217 = vsel %vm212, %v204, -inf
      %v218 = vmax.f32 %v213, %v217
      %v219 = vsel %vm212, %v205, -inf
      %v220 = vmax.f32 %v214, %v219
      %v221 = vmax.f32 %v218, %v220
      %v222 = vmax.f32 %v215, %v216
      %v223 = vmax.f32 %v221, %v222
      %v224 = vsub.f32 %v200, %v223
      %v225 = vsub.f32 %v201, %v223
      %v226 = vsub.f32 %v202, %v223
      %v227 = vsub.f32 %v203, %v223
      %v228 = vsub.f32 %v204, %v223
      %v229 = vsub.f32 %v205, %v223
      %v230 = vmul.f32 %v224, 1.442695
      %v231 = vpow.pop %v230
      %v232 = vmul.f32 %v225, 1.442695
      %v233 = vpow.pop %v232
      %v234 = vmul.f32 %v226, 1.442695
      %v235 = vpow.pop %v234
      %v236 = vmul.f32 %v227, 1.442695
      %v237 = vpow.pop %v236
      %v238 = vmul.f32 %v228, 1.442695
      %v239 = vpow.pop %v238
      %v240 = vmul.f32 %v229, 1.442695
      %v241 = vpow.pop %v240
      %v242 = vsel %vm212, %v231, 0.0
      %v243 = vsel %vm212, %v233, 0.0
      %v244 = vadd.f32 %v242, %v243
      %v245 = vsel %vm212, %v235, 0.0
      %v246 = vadd.f32 %v244, %v245
      %v247 = vsel %vm212, %v237, 0.0
      %v248 = vadd.f32 %v246, %v247
      %v249 = vsel %vm212, %v239, 0.0
      %v250 = vadd.f32 %v248, %v249
      %v251 = vsel %vm212, %v241, 0.0
      %v252 = vadd.f32 %v250, %v251
      %v253 = vlog2.pop %v252
      %v254 = vmul.f32 %v253, 0.6931472
      %v255 = vsel %vm212, %v206, -inf
      %v256 = vsel %vm212, %v207, -inf
      %v257 = vsel %vm212, %v208, -inf
      %v258 = vsel %vm212, %v209, -inf
      %v259 = vsel %vm212, %v210, -inf
      %v260 = vmax.f32 %v255, %v259
      %v261 = vsel %vm212, %v211, -inf
      %v262 = vmax.f32 %v256, %v261
      %v263 = vmax.f32 %v260, %v262
      %v264 = vmax.f32 %v257, %v258
      %v265 = vmax.f32 %v263, %v264
      %v266 = vsub.f32 %v206, %v265
      %v267 = vsub.f32 %v207, %v265
      %v268 = vsub.f32 %v208, %v265
      %v269 = vsub.f32 %v209, %v265
      %v270 = vsub.f32 %v210, %v265
      %v271 = vsub.f32 %v211, %v265
      %v272 = vmul.f32 %v266, 1.442695
      %v273 = vpow.pop %v272
      %v274 = vmul.f32 %v267, 1.442695
      %v275 = vpow.pop %v274
      %v276 = vmul.f32 %v268, 1.442695
      %v277 = vpow.pop %v276
      %v278 = vmul.f32 %v269, 1.442695
      %v279 = vpow.pop %v278
      %v280 = vmul.f32 %v270, 1.442695
      %v281 = vpow.pop %v280
      %v282 = vmul.f32 %v271, 1.442695
      %v283 = vpow.pop %v282
      %v284 = vsel %vm212, %v273, 0.0
      %v285 = vsel %vm212, %v275, 0.0
      %v286 = vadd.f32 %v284, %v285
      %v287 = vsel %vm212, %v277, 0.0
      %v288 = vadd.f32 %v286, %v287
      %v289 = vsel %vm212, %v279, 0.0
      %v290 = vadd.f32 %v288, %v289
      %v291 = vsel %vm212, %v281, 0.0
      %v292 = vadd.f32 %v290, %v291
      %v293 = vsel %vm212, %v283, 0.0
      %v294 = vadd.f32 %v292, %v293
      %v295 = vsub.f32 %v266, %v224
      %v296 = vsub.f32 %v267, %v225
      %v297 = vsub.f32 %v268, %v226
      %v298 = vsub.f32 %v269, %v227
      %v299 = vsub.f32 %v270, %v228
      %v300 = vsub.f32 %v271, %v229
      %v301 = vmul.f32 %v273, %v295
      %v302 = vmul.f32 %v275, %v296
      %v303 = vmul.f32 %v277, %v297
      %v304 = vmul.f32 %v279, %v298
      %v305 = vmul.f32 %v281, %v299
      %v306 = vmul.f32 %v283, %v300
      %v307 = vsel %vm212, %v301, 0.0
      %v308 = vsel %vm212, %v302, 0.0
      %v309 = vadd.f32 %v307, %v308
      %v310 = vsel %vm212, %v303, 0.0
      %v311 = vadd.f32 %v309, %v310
      %v312 = vsel %vm212, %v304, 0.0
      %v313 = vadd.f32 %v311, %v312
      %v314 = vsel %vm212, %v305, 0.0
      %v315 = vadd.f32 %v313, %v314
      %v316 = vsel %vm212, %v306, 0.0
      %v317 = vadd.f32 %v315, %v316
      %v318 = vrcp.pop %v294
      %v319 = vmul.f32 %v294, %v318
      %v320 = vsub.f32 1.0, %v319
      %v321 = vmul.f32 %v318, %v320
      %v322 = vadd.f32 %v318, %v321
      %vm323 = vweird.f32 %v294
      %vm324 = vweird.f32 %v318
      %vm325 = vmor %vm323, %vm324
      %v326 = vsel %vm325, %v318, %v322
      %v327 = vand.u32 2147483647, %v294
      %vm328 = vcmp.eq.f32.partialorder %v327, 8.507059e+37
      %v329 = vand.u32 %v294, 2147483648
      %v330 = vor.u32 1.1754944e-38, %v329
      %v331 = vsel %vm328, %v330, %v326
      %v332 = vmul.f32 %v317, %v331
      %v333 = vlog2.pop %v294
      %v334 = vmul.f32 %v333, 0.6931472
      %v335 = vsub.f32 %v254, %v334
      %v336 = vadd.f32 %v332, %v335
      %v337 = vld [vmem:[#allocation2] sm:$0xff]
      %v338 = vadd.f32 %v337, %v336
      %339 = vst.msk [vmem:[#allocation2] sm:$0xff] %vm212, %v338
      // Predicated region
      $region33: #{_lambda_.14} parent=27 // pred_check
        %p340 = pneg %p194
      $region34: #{_lambda_.14} parent=27 // pred_check_branch
        %342 = sbr.rel (%p340) target = $region36
      $region35: #{_lambda_.14} parent=27 // pred_region
        %v343 = vld [vmem:[#allocation2] sm:$0xff]
        %v344 = vsel %vm212, %v343, 0.0
        %345 = vadd.xlane.f32.xlu0 %v344
        %v346 = vpop.xlane.xlu0 %345
        %v347 = vrot.slane %v346, 4
        %v348 = vadd.f32 %v346, %v347
        %v349 = vrot.slane %v348, 2
        %v350 = vadd.f32 %v348, %v349
        %v351 = vrot.slane %v350, 1
        %v352 = vadd.f32 %v350, %v351
        %s353 = vtos %v352
        %v354 = vstv %s353
        %vm355 = vcmask 0
        %356 = vst.msk [vmem:[%s193] sm:$0x1] %vm355, %v354
      $region36: #{_lambda_.14} parent=27 // pred_fallthru
        _
      %p357 = scmp.lt.s32.totalorder %s17, 1
      %s358 = scalar_select %p357, %s17, 1
      %s359 = scalar_lea.vmem %s2, %s358
      // Predicated region
      $region37: #{_lambda_.14} parent=27 // pred_check
        %p360 = pneg %p99
      $region38: #{_lambda_.14} parent=27 // pred_check_branch
        %362 = sbr.rel (%p360) target = $region40
      $region39: #{_lambda_.14} parent=27 // pred_region
        _
      $region40: #{_lambda_.14} parent=27 // pred_fallthru
        _
    $region28: #{_lambda_.14} parent=5 // pred_fallthru
      _
    %p363 = scmp.le.s32.totalorder 2, %s8
    // Predicated region
    $region41: #{_lambda_.14} parent=5 // pred_check
      %p364 = pneg %p363
    $region42: #{_lambda_.14} parent=5 // pred_check_branch
      %366 = sbr.rel (%p364) target = $region44
    $region43: #{_lambda_.14} parent=5 // pred_region
      %s367 = ssub.s32 %s8, 2
      // Predicated region
      $region45: #{_lambda_.14} parent=43 // pred_check
        %p368 = pneg %p105
      $region46: #{_lambda_.14} parent=43 // pred_check_branch
        %370 = sbr.rel (%p368) target = $region48
      $region47: #{_lambda_.14} parent=43 // pred_region
        %p371 = scmp.lt.s32.totalorder %s19, 1
        %s372 = scalar_select %p371, %s19, 1
        %s373 = scalar_lea.vmem %s2, %s372
      $region48: #{_lambda_.14} parent=43 // pred_fallthru
        _
    $region44: #{_lambda_.14} parent=5 // pred_fallthru
      _
  $region6: #{_lambda_.14} parent=0 // loop_footer
    %s12 = sadd.s32 1, %s8
  $region7: #{_lambda_.14} parent=0 // loop_footer_branch
    %7 = sbr.rel target = $region3
  $region8: #{_lambda_.14} parent=0 // loop_exit
    _

// kernel: _lambda_.15
$region0: #{_lambda_.15}
  #allocation0 [shape = 'u32[]', space=smem, size = 0x4, offset = 0x4, fixed_abs, tag = 'smem constant byte address 0x4 - core index']
  #allocation1 [shape = 'u32[72,128]{1,0:T(1,128)}', space=vmem, size = 0x9000, scoped, tag = 'internal scratch']
  #allocation2 [shape = 'f32[8,8]{1,0:T(8,128)}', space=vmem, size = 0x1000, scoped, tag = 'scratch operand']
  %s0 = inlined_call_operand.vmem [shape: f32[2,6,8,8], index: 0, kind: input, shape index: {}]
  %s1 = inlined_call_operand.vmem [shape: f32[2,6,8,8], index: 1, kind: input, shape index: {}]
  %s2 = inlined_call_operand.vmem [shape: f32[2,1,1], index: 2, kind: output, shape index: {}]
  %s3 = sld [smem:[#allocation0]]
  $region49: #{_lambda_.15} parent=0
    _
  %s5 = ssub.s32 1, %s3
  %s6 = scalar_select 0, %s5, %s3
  loop: start=0, step=1, limit=4
  $region2: #{_lambda_.15} parent=0 // loop_pre_header
    _
  $region3: #{_lambda_.15} parent=0 // loop_header
    %s8 = sphi 0, %s12
    %p9 = scmp.ge.s32.totalorder %s8, 4
    %s15 = sphi 0, %s27
    %s16 = sphi 0, %s23
    %s17 = sphi 0, %s15
    %s18 = sphi 0, %s16
    %s19 = sphi 0, %s17
    %s20 = sphi 0, %s18
    %s32 = sphi 0, %s34
    %s35 = sphi 0, %s32
    %s36 = sphi 0, %s35
    %s52 = sphi 0, %s36
    %s60 = sphi 0, %s62
    %s63 = sphi 0, %s60
    %s64 = sphi 0, %s63
    %s80 = sphi 0, %s64
    %s86 = sphi 0, %s88
    %s89 = sphi 0, %s86
    %s90 = sphi 0, %s89
    %s106 = sphi 0, %s90
  $region4: #{_lambda_.15} parent=0 // loop_header_branch
    %11 = sbr.rel (%p9) target = $region8
  $region5: #{_lambda_.15} parent=0 // loop_body
    %s13 = ssub.s32 %s8, 1
    %s14 = ssub.s32 %s8, 2
    %s21 = sadd.s32 1, %s16
    %p22 = scmp.ge.s32.totalorder %s21, 1
    %s23 = scalar_select %p22, 0, %s21
    %s24 = sadd.s32 1, %s15
    %s25 = scalar_select %p22, %s24, %s15
    %p26 = scmp.ge.s32.totalorder %s25, 2
    %s27 = scalar_select %p26, 0, %s25
    %s28 = ssub.s32 %s15, %s27
    %s29 = ssub.s32 %s16, %s23
    %s30 = sor.u32 %s28, %s29
    %p31 = scmp.eq.s32.totalorder %s30, 0
    %s33 = sadd.s32 %s32, 1
    %s34 = scalar_select %p31, %s32, %s33
    %p37 = pneg %p31
    %p38 = scmp.eq.s32.totalorder %s8, 1
    %p39 = por %p37, %p38
    %p40 = scmp.ne.s32.totalorder %s32, %s35
    %p41 = scmp.eq.s32.totalorder %s8, 0
    %p42 = por %p40, %p41
    %p43 = scmp.ne.s32.totalorder %s32, %s35
    %p44 = scmp.eq.s32.totalorder %s13, 1
    %p45 = por %p43, %p44
    %p46 = scmp.ne.s32.totalorder %s35, %s36
    %p47 = scmp.eq.s32.totalorder %s13, 0
    %p48 = por %p46, %p47
    %p49 = scmp.ne.s32.totalorder %s35, %s36
    %p50 = scmp.eq.s32.totalorder %s14, 1
    %p51 = por %p49, %p50
    %p53 = scmp.ne.s32.totalorder %s36, %s52
    %p54 = scmp.eq.s32.totalorder %s14, 0
    %p55 = por %p53, %p54
    %s56 = ssub.s32 %s15, %s27
    %s57 = ssub.s32 %s16, %s23
    %s58 = sor.u32 %s56, %s57
    %p59 = scmp.eq.s32.totalorder %s58, 0
    %s61 = sadd.s32 %s60, 1
    %s62 = scalar_select %p59, %s60, %s61
    %p65 = pneg %p59
    %p66 = scmp.eq.s32.totalorder %s8, 1
    %p67 = por %p65, %p66
    %p68 = scmp.ne.s32.totalorder %s60, %s63
    %p69 = scmp.eq.s32.totalorder %s8, 0
    %p70 = por %p68, %p69
    %p71 = scmp.ne.s32.totalorder %s60, %s63
    %p72 = scmp.eq.s32.totalorder %s13, 1
    %p73 = por %p71, %p72
    %p74 = scmp.ne.s32.totalorder %s63, %s64
    %p75 = scmp.eq.s32.totalorder %s13, 0
    %p76 = por %p74, %p75
    %p77 = scmp.ne.s32.totalorder %s63, %s64
    %p78 = scmp.eq.s32.totalorder %s14, 1
    %p79 = por %p77, %p78
    %p81 = scmp.ne.s32.totalorder %s64, %s80
    %p82 = scmp.eq.s32.totalorder %s14, 0
    %p83 = por %p81, %p82
    %s84 = ssub.s32 %s15, %s27
    %p85 = scmp.eq.s32.totalorder %s84, 0
    %s87 = sadd.s32 %s86, 1
    %s88 = scalar_select %p85, %s86, %s87
    %p91 = pneg %p85
    %p92 = scmp.eq.s32.totalorder %s8, 1
    %p93 = por %p91, %p92
    %p94 = scmp.ne.s32.totalorder %s86, %s89
    %p95 = scmp.eq.s32.totalorder %s8, 0
    %p96 = por %p94, %p95
    %p97 = scmp.ne.s32.totalorder %s86, %s89
    %p98 = scmp.eq.s32.totalorder %s13, 1
    %p99 = por %p97, %p98
    %p100 = scmp.ne.s32.totalorder %s89, %s90
    %p101 = scmp.eq.s32.totalorder %s13, 0
    %p102 = por %p100, %p101
    %p103 = scmp.ne.s32.totalorder %s89, %s90
    %p104 = scmp.eq.s32.totalorder %s14, 1
    %p105 = por %p103, %p104
    %p107 = scmp.ne.s32.totalorder %s90, %s106
    %p108 = scmp.eq.s32.totalorder %s14, 0
    %p109 = por %p107, %p108
    %p110 = scmp.le.s32.totalorder 1, %s8
    %p111 = scmp.lt.s32.totalorder %s8, 3
    %p112 = pnand %p110, %p111
    %p113 = pneg %p112
    // Predicated region
    $region9: #{_lambda_.15} parent=5 // pred_check
      _
    $region10: #{_lambda_.15} parent=5 // pred_check_branch
      %115 = sbr.rel (%p112) target = $region12
    $region11: #{_lambda_.15} parent=5 // pred_region
      %s116 = ssub.s32 %s8, 1
    $region12: #{_lambda_.15} parent=5 // pred_fallthru
      _
    %p117 = scmp.lt.s32.totalorder %s8, 2
    // Predicated region
    $region13: #{_lambda_.15} parent=5 // pred_check
      %p118 = pneg %p117
    $region14: #{_lambda_.15} parent=5 // pred_check_branch
      %120 = sbr.rel (%p118) target = $region16
    $region15: #{_lambda_.15} parent=5 // pred_region
      // Predicated region
      $region17: #{_lambda_.15} parent=15 // pred_check
        %p121 = pneg %p42
      $region18: #{_lambda_.15} parent=15 // pred_check_branch
        %123 = sbr.rel (%p121) target = $region20
      $region19: #{_lambda_.15} parent=15 // pred_region
        %p124 = scmp.lt.s32.totalorder %s15, 1
        %s125 = scalar_select %p124, %s15, 1
        %p126 = scmp.lt.s32.totalorder %s16, 0
        %s127 = scalar_select %p126, %s16, 0
        %s128 = smul.addr %s125, 6
        %s129 = sadd.s32 %s127, %s128
        %s130 = smul.addr %s129, 8
        %s131 = scalar_lea.vmem %s0, %s130
      $region20: #{_lambda_.15} parent=15 // pred_fallthru
        _
      // Predicated region
      $region21: #{_lambda_.15} parent=15 // pred_check
        %p132 = pneg %p70
      $region22: #{_lambda_.15} parent=15 // pred_check_branch
        %134 = sbr.rel (%p132) target = $region24
      $region23: #{_lambda_.15} parent=15 // pred_region
        %p135 = scmp.lt.s32.totalorder %s15, 1
        %s136 = scalar_select %p135, %s15, 1
        %p137 = scmp.lt.s32.totalorder %s16, 0
        %s138 = scalar_select %p137, %s16, 0
        %s139 = smul.addr %s136, 6
        %s140 = sadd.s32 %s138, %s139
        %s141 = smul.addr %s140, 8
        %s142 = scalar_lea.vmem %s1, %s141
      $region24: #{_lambda_.15} parent=15 // pred_fallthru
        _
    $region16: #{_lambda_.15} parent=5 // pred_fallthru
      _
    %p143 = scmp.le.s32.totalorder 1, %s8
    %p144 = scmp.lt.s32.totalorder %s8, 3
    %p145 = pnand %p143, %p144
    %p146 = pneg %p145
    // Predicated region
    $region25: #{_lambda_.15} parent=5 // pred_check
      _
    $region26: #{_lambda_.15} parent=5 // pred_check_branch
      %148 = sbr.rel (%p145) target = $region28
    $region27: #{_lambda_.15} parent=5 // pred_region
      %s149 = ssub.s32 %s8, 1
      %p150 = scmp.lt.s32.totalorder %s17, 1
      %s151 = scalar_select %p150, %s17, 1
      %p152 = scmp.lt.s32.totalorder %s18, 0
      %s153 = scalar_select %p152, %s18, 0
      %s154 = smul.addr %s151, 6
      %s155 = sadd.s32 %s153, %s154
      %s156 = smul.addr %s155, 8
      %s157 = scalar_lea.vmem %s0, %s156
      %p158 = pneg %p48
      %p159 = pneg %p45
      %p160 = scmp.lt.s32.totalorder %s17, 1
      %s161 = scalar_select %p160, %s17, 1
      %p162 = scmp.lt.s32.totalorder %s18, 0
      %s163 = scalar_select %p162, %s18, 0
      %s164 = smul.addr %s161, 6
      %s165 = sadd.s32 %s163, %s164
      %s166 = smul.addr %s165, 8
      %s167 = scalar_lea.vmem %s1, %s166
      %p168 = pneg %p76
      %p169 = pneg %p73
      %p170 = pneg %p102
      %p171 = pneg %p99
      %p172 = scmp.lt.s32.totalorder %s17, 1
      %s173 = scalar_select %p172, %s17, 1
      %s174 = scalar_lea.vmem %s2, %s173
      %p175 = scmp.lt.s32.totalorder %s17, 1
      %s176 = scalar_select %p175, %s17, 1
      %p177 = scmp.lt.s32.totalorder %s18, 0
      %s178 = scalar_select %p177, %s18, 0
      %s179 = smul.addr %s176, 6
      %s180 = sadd.s32 %s178, %s179
      %s181 = smul.addr %s180, 8
      %s182 = scalar_lea.vmem %s0, %s181
      %p183 = scmp.lt.s32.totalorder %s17, 1
      %s184 = scalar_select %p183, %s17, 1
      %p185 = scmp.lt.s32.totalorder %s18, 0
      %s186 = scalar_select %p185, %s18, 0
      %s187 = smul.addr %s184, 6
      %s188 = sadd.s32 %s186, %s187
      %s189 = smul.addr %s188, 8
      %s190 = scalar_lea.vmem %s1, %s189
      %p191 = scmp.lt.s32.totalorder %s17, 1
      %s192 = scalar_select %p191, %s17, 1
      %s193 = scalar_lea.vmem %s2, %s192
      %p194 = scmp.eq.s32.totalorder %s18, 0
      // Predicated region
      $region29: #{_lambda_.15} parent=27 // pred_check
        %p195 = pneg %p194
      $region30: #{_lambda_.15} parent=27 // pred_check_branch
        %197 = sbr.rel (%p195) target = $region32
      $region31: #{_lambda_.15} parent=27 // pred_region
        %vm198 = vcmask 64512
        %199 = vst.msk [vmem:[#allocation2] sm:$0xff] %vm198, 0.0
      $region32: #{_lambda_.15} parent=27 // pred_fallthru
        _
      %v200 = vld [vmem:[%s182] sm:$0xff]
      %v201 = vld [vmem:[%s182 + $0x8] sm:$0xff]
      %v202 = vld [vmem:[%s182 + $0x10] sm:$0xff]
      %v203 = vld [vmem:[%s182 + $0x18] sm:$0xff]
      %v204 = vld [vmem:[%s182 + $0x20] sm:$0xff]
      %v205 = vld [vmem:[%s182 + $0x28] sm:$0xff]
      %v206 = vld [vmem:[%s190] sm:$0xff]
      %v207 = vld [vmem:[%s190 + $0x8] sm:$0xff]
      %v208 = vld [vmem:[%s190 + $0x10] sm:$0xff]
      %v209 = vld [vmem:[%s190 + $0x18] sm:$0xff]
      %v210 = vld [vmem:[%s190 + $0x20] sm:$0xff]
      %v211 = vld [vmem:[%s190 + $0x28] sm:$0xff]
      %vm212 = vcmask 64512
      %v213 = vsel %vm212, %v200, -inf
      %v214 = vsel %vm212, %v201, -inf
      %v215 = vsel %vm212, %v202, -inf
      %v216 = vsel %vm212, %v203, -inf
      %v217 = vsel %vm212, %v204, -inf
      %v218 = vmax.f32 %v213, %v217
      %v219 = vsel %vm212, %v205, -inf
      %v220 = vmax.f32 %v214, %v219
      %v221 = vmax.f32 %v218, %v220
      %v222 = vmax.f32 %v215, %v216
      %v223 = vmax.f32 %v221, %v222
      %v224 = vsub.f32 %v200, %v223
      %v225 = vsub.f32 %v201, %v223
      %v226 = vsub.f32 %v202, %v223
      %v227 = vsub.f32 %v203, %v223
      %v228 = vsub.f32 %v204, %v223
      %v229 = vsub.f32 %v205, %v223
      %v230 = vmul.f32 %v224, 1.442695
      %v231 = vpow.pop %v230
      %v232 = vmul.f32 %v225, 1.442695
      %v233 = vpow.pop %v232
      %v234 = vmul.f32 %v226, 1.442695
      %v235 = vpow.pop %v234
      %v236 = vmul.f32 %v227, 1.442695
      %v237 = vpow.pop %v236
      %v238 = vmul.f32 %v228, 1.442695
      %v239 = vpow.pop %v238
      %v240 = vmul.f32 %v229, 1.442695
      %v241 = vpow.pop %v240
      %v242 = vsel %vm212, %v231, 0.0
      %v243 = vsel %vm212, %v233, 0.0
      %v244 = vadd.f32 %v242, %v243
      %v245 = vsel %vm212, %v235, 0.0
      %v246 = vadd.f32 %v244, %v245
      %v247 = vsel %vm212, %v237, 0.0
      %v248 = vadd.f32 %v246, %v247
      %v249 = vsel %vm212, %v239, 0.0
      %v250 = vadd.f32 %v248, %v249
      %v251 = vsel %vm212, %v241, 0.0
      %v252 = vadd.f32 %v250, %v251
      %v253 = vlog2.pop %v252
      %v254 = vmul.f32 %v253, 0.6931472
      %v255 = vsel %vm212, %v206, -inf
      %v256 = vsel %vm212, %v207, -inf
      %v257 = vsel %vm212, %v208, -inf
      %v258 = vsel %vm212, %v209, -inf
      %v259 = vsel %vm212, %v210, -inf
      %v260 = vmax.f32 %v255, %v259
      %v261 = vsel %vm212, %v211, -inf
      %v262 = vmax.f32 %v256, %v261
      %v263 = vmax.f32 %v260, %v262
      %v264 = vmax.f32 %v257, %v258
      %v265 = vmax.f32 %v263, %v264
      %v266 = vsub.f32 %v206, %v265
      %v267 = vsub.f32 %v207, %v265
      %v268 = vsub.f32 %v208, %v265
      %v269 = vsub.f32 %v209, %v265
      %v270 = vsub.f32 %v210, %v265
      %v271 = vsub.f32 %v211, %v265
      %v272 = vmul.f32 %v266, 1.442695
      %v273 = vpow.pop %v272
      %v274 = vmul.f32 %v267, 1.442695
      %v275 = vpow.pop %v274
      %v276 = vmul.f32 %v268, 1.442695
      %v277 = vpow.pop %v276
      %v278 = vmul.f32 %v269, 1.442695
      %v279 = vpow.pop %v278
      %v280 = vmul.f32 %v270, 1.442695
      %v281 = vpow.pop %v280
      %v282 = vmul.f32 %v271, 1.442695
      %v283 = vpow.pop %v282
      %v284 = vsel %vm212, %v273, 0.0
      %v285 = vsel %vm212, %v275, 0.0
      %v286 = vadd.f32 %v284, %v285
      %v287 = vsel %vm212, %v277, 0.0
      %v288 = vadd.f32 %v286, %v287
      %v289 = vsel %vm212, %v279, 0.0
      %v290 = vadd.f32 %v288, %v289
      %v291 = vsel %vm212, %v281, 0.0
      %v292 = vadd.f32 %v290, %v291
      %v293 = vsel %vm212, %v283, 0.0
      %v294 = vadd.f32 %v292, %v293
      %v295 = vsub.f32 %v266, %v224
      %v296 = vsub.f32 %v267, %v225
      %v297 = vsub.f32 %v268, %v226
      %v298 = vsub.f32 %v269, %v227
      %v299 = vsub.f32 %v270, %v228
      %v300 = vsub.f32 %v271, %v229
      %v301 = vmul.f32 %v273, %v295
      %v302 = vmul.f32 %v275, %v296
      %v303 = vmul.f32 %v277, %v297
      %v304 = vmul.f32 %v279, %v298
      %v305 = vmul.f32 %v281, %v299
      %v306 = vmul.f32 %v283, %v300
      %v307 = vsel %vm212, %v301, 0.0
      %v308 = vsel %vm212, %v302, 0.0
      %v309 = vadd.f32 %v307, %v308
      %v310 = vsel %vm212, %v303, 0.0
      %v311 = vadd.f32 %v309, %v310
      %v312 = vsel %vm212, %v304, 0.0
      %v313 = vadd.f32 %v311, %v312
      %v314 = vsel %vm212, %v305, 0.0
      %v315 = vadd.f32 %v313, %v314
      %v316 = vsel %vm212, %v306, 0.0
      %v317 = vadd.f32 %v315, %v316
      %v318 = vrcp.pop %v294
      %v319 = vmul.f32 %v294, %v318
      %v320 = vsub.f32 1.0, %v319
      %v321 = vmul.f32 %v318, %v320
      %v322 = vadd.f32 %v318, %v321
      %vm323 = vweird.f32 %v294
      %vm324 = vweird.f32 %v318
      %vm325 = vmor %vm323, %vm324
      %v326 = vsel %vm325, %v318, %v322
      %v327 = vand.u32 2147483647, %v294
      %vm328 = vcmp.eq.f32.partialorder %v327, 8.507059e+37
      %v329 = vand.u32 %v294, 2147483648
      %v330 = vor.u32 1.1754944e-38, %v329
      %v331 = vsel %vm328, %v330, %v326
      %v332 = vmul.f32 %v317, %v331
      %v333 = vlog2.pop %v294
      %v334 = vmul.f32 %v333, 0.6931472
      %v335 = vsub.f32 %v254, %v334
      %v336 = vadd.f32 %v332, %v335
      %v337 = vld [vmem:[#allocation2] sm:$0xff]
      %v338 = vadd.f32 %v337, %v336
      %339 = vst.msk [vmem:[#allocation2] sm:$0xff] %vm212, %v338
      // Predicated region
      $region33: #{_lambda_.15} parent=27 // pred_check
        %p340 = pneg %p194
      $region34: #{_lambda_.15} parent=27 // pred_check_branch
        %342 = sbr.rel (%p340) target = $region36
      $region35: #{_lambda_.15} parent=27 // pred_region
        %v343 = vld [vmem:[#allocation2] sm:$0xff]
        %v344 = vsel %vm212, %v343, 0.0
        %345 = vadd.xlane.f32.xlu0 %v344
        %v346 = vpop.xlane.xlu0 %345
        %v347 = vrot.slane %v346, 4
        %v348 = vadd.f32 %v346, %v347
        %v349 = vrot.slane %v348, 2
        %v350 = vadd.f32 %v348, %v349
        %v351 = vrot.slane %v350, 1
        %v352 = vadd.f32 %v350, %v351
        %s353 = vtos %v352
        %v354 = vstv %s353
        %vm355 = vcmask 0
        %356 = vst.msk [vmem:[%s193] sm:$0x1] %vm355, %v354
      $region36: #{_lambda_.15} parent=27 // pred_fallthru
        _
      %p357 = scmp.lt.s32.totalorder %s17, 1
      %s358 = scalar_select %p357, %s17, 1
      %s359 = scalar_lea.vmem %s2, %s358
      // Predicated region
      $region37: #{_lambda_.15} parent=27 // pred_check
        %p360 = pneg %p99
      $region38: #{_lambda_.15} parent=27 // pred_check_branch
        %362 = sbr.rel (%p360) target = $region40
      $region39: #{_lambda_.15} parent=27 // pred_region
        _
      $region40: #{_lambda_.15} parent=27 // pred_fallthru
        _
    $region28: #{_lambda_.15} parent=5 // pred_fallthru
      _
    %p363 = scmp.le.s32.totalorder 2, %s8
    // Predicated region
    $region41: #{_lambda_.15} parent=5 // pred_check
      %p364 = pneg %p363
    $region42: #{_lambda_.15} parent=5 // pred_check_branch
      %366 = sbr.rel (%p364) target = $region44
    $region43: #{_lambda_.15} parent=5 // pred_region
      %s367 = ssub.s32 %s8, 2
      // Predicated region
      $region45: #{_lambda_.15} parent=43 // pred_check
        %p368 = pneg %p105
      $region46: #{_lambda_.15} parent=43 // pred_check_branch
        %370 = sbr.rel (%p368) target = $region48
      $region47: #{_lambda_.15} parent=43 // pred_region
        %p371 = scmp.lt.s32.totalorder %s19, 1
        %s372 = scalar_select %p371, %s19, 1
        %s373 = scalar_lea.vmem %s2, %s372
      $region48: #{_lambda_.15} parent=43 // pred_fallthru
        _
    $region44: #{_lambda_.15} parent=5 // pred_fallthru
      _
  $region6: #{_lambda_.15} parent=0 // loop_footer
    %s12 = sadd.s32 1, %s8
  $region7: #{_lambda_.15} parent=0 // loop_footer_branch
    %7 = sbr.rel target = $region3
  $region8: #{_lambda_.15} parent=0 // loop_exit
    _

</llo_original>
